<compile_context>
chip_gen: v7x
topology: tpu7x:2x2x1
jax: 0.10.0
libtpu: 0.0.40
codegen_flags: <defaults>
</compile_context>

<pallas_src>
import functools

import jax
import jax.numpy as jnp
from jax.experimental import pallas as pl
from jax.experimental.pallas import tpu as pltpu


# ----------------------------- in-kernel helpers -----------------------------

def _erf(x):
    # Abramowitz & Stegun 7.1.26 rational approximation (float32, ~1.5e-7 base err).
    a1, a2, a3, a4, a5 = 0.254829592, -0.284496736, 1.421413741, -1.453152027, 1.061405429
    p = 0.3275911
    ax = jnp.abs(x)
    t = pl.reciprocal(1.0 + p * ax, approx=True)      # EUP reciprocal, not a VPU divide
    poly = ((((a5 * t + a4) * t + a3) * t + a2) * t + a1) * t
    e = 1.0 - poly * jnp.exp(-ax * ax)
    return jnp.where(x >= 0, e, -e)


def _gelu_exact(x):
    # nn.GELU() default (approximate='none'):  0.5 * x * (1 + erf(x / sqrt(2)))
    return 0.5 * x * (1.0 + _erf(x * 0.7071067811865476))


def _layernorm(x, gamma, beta, eps=1e-5):
    # Two independent cross-lane reduces (mean, E[x^2]); biased variance like nn.LayerNorm.
    m = jnp.mean(x, axis=-1, keepdims=True)
    ms = jnp.mean(x * x, axis=-1, keepdims=True)
    var = ms - m * m
    inv = jax.lax.rsqrt(var + eps)
    return (x - m) * inv * gamma + beta


# --------------------------------- kernel ------------------------------------

def transformer_layer_kernel(
    x_ref,          # (1, S, D)        full-sequence x for this batch element
    wq_ref,         # (D, inner)       softmax scale folded in
    wk_ref,         # (D, inner)
    wv_ref,         # (D, inner)
    wo_ref,         # (heads, dh, D)   per-head output projection
    bo_ref,         # (1, D)
    g1_ref, b1_ref,  # (1, D)  norm1 weight / bias
    g2_ref, b2_ref,  # (1, D)  norm2 weight / bias
    wff1_ref,       # (D, 4D)
    bff1_ref,       # (1, 4D)
    wff2_ref,       # (4D, D)
    bff2_ref,       # (1, D)
    o_ref,          # (1, tq, D)
    q_scr,          # (heads, S, dh)   VMEM scratch (compute dtype)
    k_scr,          # (heads, S, dh)
    v_scr,          # (heads, S, dh)
    *,
    heads: int,
    dim_head: int,
    q_tile: int,
    kv_chunk: int,
):
    cdt = wq_ref.dtype                  # matmul compute dtype (bf16 or f32)
    f32 = jnp.float32
    S = x_ref.shape[1]
    tq = q_tile

    # ---- once per batch element: LN1 + head-major Q/K/V for the whole sequence ----
    @pl.when(pl.program_id(1) == 0)
    def _():
        xf = x_ref[0]                                               # (S, D) f32
        xnf = _layernorm(xf, g1_ref[...], b1_ref[...]).astype(cdt)
        q = jnp.dot(xnf, wq_ref[...], preferred_element_type=f32)   # (S, inner)
        k = jnp.dot(xnf, wk_ref[...], preferred_element_type=f32)
        v = jnp.dot(xnf, wv_ref[...], preferred_element_type=f32)
        # TODO(synk): pltpu.einshape('s(hd)->hsd') would avoid the reshape+transpose copies.
        q_scr[...] = jnp.transpose(q.reshape(S, heads, dim_head), (1, 0, 2)).astype(cdt)
        k_scr[...] = jnp.transpose(k.reshape(S, heads, dim_head), (1, 0, 2)).astype(cdt)
        v_scr[...] = jnp.transpose(v.reshape(S, heads, dim_head), (1, 0, 2)).astype(cdt)

    # ---- attention for this q-row tile (everything reads VMEM-resident data) ----
    start = pl.program_id(1) * tq
    if tq % 8 == 0:
        start = pl.multiple_of(start, 8)
    x = x_ref[0, pl.ds(start, tq), :]                               # (tq, D) f32 residual
    q3 = q_scr[:, pl.ds(start, tq), :]                              # (heads, tq, dh)

    nchunks = S // kv_chunk

    def kv_step(c, carry):
        m_p, l_p, acc_p = carry
        off = c * kv_chunk
        if not isinstance(off, int) and kv_chunk % 8 == 0:
            off = pl.multiple_of(off, 8)
        kt = k_scr[:, pl.ds(off, kv_chunk), :]                      # (heads, kc, dh)
        vt = v_scr[:, pl.ds(off, kv_chunk), :]
        s = jnp.einsum('hqd,hkd->hqk', q3, kt,
                       preferred_element_type=f32)                  # (heads, tq, kc)
        m_n = jnp.maximum(m_p, jnp.max(s, axis=-1, keepdims=True))
        alpha = jnp.exp(m_p - m_n)
        p = jnp.exp(s - m_n)
        l_n = alpha * l_p + jnp.sum(p, axis=-1, keepdims=True)
        acc_n = alpha * acc_p + jnp.einsum('hqk,hkd->hqd', p.astype(cdt), vt,
                                           preferred_element_type=f32)
        return m_n, l_n, acc_n

    carry0 = (jnp.full((heads, tq, 1), -jnp.inf, f32),
              jnp.zeros((heads, tq, 1), f32),
              jnp.zeros((heads, tq, dim_head), f32))
    if nchunks == 1:                      # small-S fast path (single chunk, no loop)
        m_i, l_i, acc = kv_step(0, carry0)
    else:                                 # flash-style kv chunking for long sequences
        m_i, l_i, acc = jax.lax.fori_loop(0, nchunks, kv_step, carry0)

    # dropout on attention probs: identity (eval mode)
    ctx = acc * pl.reciprocal(l_i, approx=True)                     # (heads, tq, dh) f32

    # per-head output projection folded in; sum over heads is cheap VPU adds
    proj = jnp.einsum('hqd,hdD->hqD', ctx.astype(cdt), wo_ref[...],
                      preferred_element_type=f32)                   # (heads, tq, D)
    out = jnp.sum(proj, axis=0) + bo_ref[...]
    x1 = x + out                                                    # dropout: identity

    # ---- feed-forward branch -----------------------------------------------------
    xn2 = _layernorm(x1, g2_ref[...], b2_ref[...])
    h1 = jnp.dot(xn2.astype(cdt), wff1_ref[...],
                 preferred_element_type=f32) + bff1_ref[...]
    h1 = _gelu_exact(h1)                                            # f32 elementwise
    h2 = jnp.dot(h1.astype(cdt), wff2_ref[...],
                 preferred_element_type=f32) + bff2_ref[...]
    o_ref[0] = (x1 + h2).astype(o_ref.dtype)                        # dropout: identity


# --------------------------------- wrapper -----------------------------------

def _pick_tile(S, target):
    """Largest multiple of 8 <= target that divides S; falls back to S."""
    if S <= target:
        return S
    c = (target // 8) * 8
    while c >= 8:
        if S % c == 0:
            return c
        c -= 8
    # TODO(synk): pad S instead of falling back to a full-sequence tile for awkward S.
    return S


def _vmem_capacity_bytes():
    try:
        info = pltpu.get_tpu_info()
        cap = getattr(info, "vmem_capacity_bytes", None)
        if cap:
            return int(cap)
    except Exception:
        pass
    return 128 * 2**20


def simple_transformer_layer(x, params, *, heads, dim_head,
                             compute_dtype=jnp.bfloat16,
                             q_tile=None, kv_chunk=512,
                             single_buffer_invariants=True):
    """x: (B, S, D) float32. params: dict of weights in PyTorch shapes."""
    B, S, D = x.shape
    inner = heads * dim_head
    scale = float(dim_head) ** (-0.5)
    f32 = jnp.float32
    cdt = compute_dtype

    vmem_cap = _vmem_capacity_bytes()
    # v7x has 64 MiB VMEM per TensorCore -> smaller default q tile; v5e/v6e have 128 MiB.
    if q_tile is None:
        q_tile = 128 if vmem_cap <= 64 * 2**20 else 256
    tq = _pick_tile(S, q_tile)
    tkv = _pick_tile(S, kv_chunk)
    T = S // tq

    # Weight prep (host side, free): split qkv, transpose to (in, out), fold the softmax
    # scale into W_q, per-head W_out, cast matmul weights to the compute dtype.
    w_qkv = params["to_qkv_w"].astype(f32)                         # (3*inner, D)
    w_q = (w_qkv[0 * inner:1 * inner].T * scale).astype(cdt)       # (D, inner)
    w_k = w_qkv[1 * inner:2 * inner].T.astype(cdt)
    w_v = w_qkv[2 * inner:3 * inner].T.astype(cdt)
    w_o3 = params["to_out_w"].T.reshape(heads, dim_head, D).astype(cdt)  # (h, dh, D)
    b_out = params["to_out_b"].reshape(1, D).astype(f32)
    g1 = params["norm1_w"].reshape(1, D).astype(f32)
    bt1 = params["norm1_b"].reshape(1, D).astype(f32)
    g2 = params["norm2_w"].reshape(1, D).astype(f32)
    bt2 = params["norm2_b"].reshape(1, D).astype(f32)
    w_ff1 = params["ff1_w"].T.astype(cdt)                          # (D, 4D)
    b_ff1 = params["ff1_b"].reshape(1, 4 * D).astype(f32)
    w_ff2 = params["ff2_w"].T.astype(cdt)                          # (4D, D)
    b_ff2 = params["ff2_b"].reshape(1, D).astype(f32)

    kernel = functools.partial(transformer_layer_kernel, heads=heads,
                               dim_head=dim_head, q_tile=tq, kv_chunk=tkv)

    args = (x, w_q, w_k, w_v, w_o3, b_out, g1, bt1, g2, bt2,
            w_ff1, b_ff1, w_ff2, b_ff2)

    def build(single_buf):
        csz = jnp.dtype(cdt).itemsize
        wmult = 1 if single_buf else 2
        w_bytes = (3 * D * inner + inner * D + 8 * D * D) * csz + 16 * D * 4
        xf_bytes = S * D * 4 * (1 if single_buf else 2)
        scr_bytes = 3 * heads * S * dim_head * csz                  # Q/K/V scratch
        build_bytes = 3 * S * inner * 4 + S * D * csz               # t==0 f32 q/k/v + xnf
        tile_bytes = (2 * heads * tq * tkv * 4 + heads * tq * D * 4
                      + 2 * tq * 4 * D * 4 + 6 * tq * D * 4)
        est = (wmult * w_bytes + xf_bytes + scr_bytes + build_bytes
               + tile_bytes + 2 * tq * D * 4 + (4 << 20))
        vmem_limit = int(min(max(est, 16 * 2**20), int(vmem_cap * 0.82)))

        buf_kw = {"pipeline_mode": pl.Buffered(1)} if single_buf else {}

        def invariant(shape):
            return pl.BlockSpec(shape, lambda b, t: (0,) * len(shape), **buf_kw)

        in_specs = [
            pl.BlockSpec((1, S, D), lambda b, t: (b, 0, 0), **buf_kw),  # x (full seq)
            invariant((D, inner)),                                      # w_q (scaled)
            invariant((D, inner)),                                      # w_k
            invariant((D, inner)),                                      # w_v
            invariant((heads, dim_head, D)),                            # w_out per head
            invariant((1, D)),                                          # b_out
            invariant((1, D)), invariant((1, D)),                       # norm1 w / b
            invariant((1, D)), invariant((1, D)),                       # norm2 w / b
            invariant((D, 4 * D)),                                      # ff1 w
            invariant((1, 4 * D)),                                      # ff1 b
            invariant((4 * D, D)),                                      # ff2 w
            invariant((1, D)),                                          # ff2 b
        ]
        return pl.pallas_call(
            kernel,
            out_shape=jax.ShapeDtypeStruct((B, S, D), jnp.float32),
            grid_spec=pltpu.PrefetchScalarGridSpec(
                num_scalar_prefetch=0,
                grid=(B, T),
                in_specs=in_specs,
                out_specs=pl.BlockSpec((1, tq, D), lambda b, t: (b, t, 0)),
                scratch_shapes=[pltpu.VMEM((heads, S, dim_head), cdt)] * 3,  # Q, K, V
            ),
            compiler_params=pltpu.CompilerParams(
                dimension_semantics=("parallel", "arbitrary"),
                vmem_limit_bytes=vmem_limit),
        )

    if single_buffer_invariants:
        try:
            return jax.block_until_ready(build(True)(*args))
        except Exception:
            # pipeline_mode=pl.Buffered(1) not supported on this jax: default buffering.
            pass
    return build(False)(*args)


# ------------------------- pure-JAX reference (check) -------------------------

def reference(x, params, *, heads, dim_head):
    B, S, D = x.shape
    inner = heads * dim_head
    scale = float(dim_head) ** (-0.5)

    def ln(t, w, b):
        m = jnp.mean(t, axis=-1, keepdims=True)
        v = jnp.mean((t - m) ** 2, axis=-1, keepdims=True)
        return (t - m) * jax.lax.rsqrt(v + 1e-5) * w + b

    residual = x
    xn = ln(x, params["norm1_w"], params["norm1_b"])
    qkv = xn @ params["to_qkv_w"].T
    q, k, v = jnp.split(qkv, 3, axis=-1)

    def heads_view(t):
        return t.reshape(B, S, heads, dim_head).transpose(0, 2, 1, 3)

    q, k, v = map(heads_view, (q, k, v))
    attn = jax.nn.softmax(jnp.einsum("bhqd,bhkd->bhqk", q, k) * scale, axis=-1)
    out = jnp.einsum("bhqk,bhkd->bhqd", attn, v).transpose(0, 2, 1, 3).reshape(B, S, inner)
    out = out @ params["to_out_w"].T + params["to_out_b"]
    x1 = residual + out
    xn2 = ln(x1, params["norm2_w"], params["norm2_b"])
    h = jax.nn.gelu(xn2 @ params["ff1_w"].T + params["ff1_b"], approximate=False)
    h = h @ params["ff2_w"].T + params["ff2_b"]
    return x1 + h


# ----------------------------------- main -------------------------------------

if __name__ == "__main__":
    B, S, D = 2, 8, 32
    heads, dim_head = 4, 8
    inner = heads * dim_head

    key = jax.random.PRNGKey(0)
    ks = jax.random.split(key, 8)
    params = {
        "to_qkv_w": 0.02 * jax.random.normal(ks[0], (3 * inner, D), jnp.float32),
        "to_out_w": 0.02 * jax.random.normal(ks[1], (D, inner), jnp.float32),
        "to_out_b": 0.01 * jax.random.normal(ks[2], (D,), jnp.float32),
        "norm1_w": jnp.ones((D,), jnp.float32),
        "norm1_b": jnp.zeros((D,), jnp.float32),
        "norm2_w": jnp.ones((D,), jnp.float32),
        "norm2_b": jnp.zeros((D,), jnp.float32),
        "ff1_w": 0.02 * jax.random.normal(ks[3], (4 * D, D), jnp.float32),
        "ff1_b": 0.01 * jax.random.normal(ks[4], (4 * D,), jnp.float32),
        "ff2_w": 0.02 * jax.random.normal(ks[5], (D, 4 * D), jnp.float32),
        "ff2_b": 0.01 * jax.random.normal(ks[6], (D,), jnp.float32),
    }
    x = jax.random.normal(ks[7], (B, S, D), jnp.float32)

    y_ref = reference(x, params, heads=heads, dim_head=dim_head)

    # f32 matmul path: strict check against the f32 reference.
    y_f32 = simple_transformer_layer(x, params, heads=heads, dim_head=dim_head,
                                     compute_dtype=jnp.float32)
    y_f32 = jax.block_until_ready(y_f32)
    assert jnp.allclose(y_f32, y_ref, atol=2e-3, rtol=2e-3), "f32 mismatch vs reference"

    # default path: bf16 matmul operands / scratch, f32 accumulation & statistics.
    y_bf16 = simple_transformer_layer(x, params, heads=heads, dim_head=dim_head)
    y_bf16 = jax.block_until_ready(y_bf16)
    assert jnp.allclose(y_bf16, y_ref, atol=2e-2, rtol=2e-2), "bf16 mismatch vs reference"

    print("KERNEL_OK")
</pallas_src>

<mosaic_0001>
module attributes {stable_mosaic.version = 11 : i64} {
  func.func @transformer_layer_kernel(%arg0: i32, %arg1: i32, %arg2: memref<1x8x32xf32, #tpu.memory_space<vmem>>, %arg3: memref<32x32xf32, #tpu.memory_space<vmem>>, %arg4: memref<32x32xf32, #tpu.memory_space<vmem>>, %arg5: memref<32x32xf32, #tpu.memory_space<vmem>>, %arg6: memref<4x8x32xf32, #tpu.memory_space<vmem>>, %arg7: memref<1x32xf32, #tpu.memory_space<vmem>>, %arg8: memref<1x32xf32, #tpu.memory_space<vmem>>, %arg9: memref<1x32xf32, #tpu.memory_space<vmem>>, %arg10: memref<1x32xf32, #tpu.memory_space<vmem>>, %arg11: memref<1x32xf32, #tpu.memory_space<vmem>>, %arg12: memref<32x128xf32, #tpu.memory_space<vmem>>, %arg13: memref<1x128xf32, #tpu.memory_space<vmem>>, %arg14: memref<128x32xf32, #tpu.memory_space<vmem>>, %arg15: memref<1x32xf32, #tpu.memory_space<vmem>>, %arg16: memref<1x8x32xf32, #tpu.memory_space<vmem>>, %arg17: memref<4x8x8xf32, #tpu.memory_space<vmem>>, %arg18: memref<4x8x8xf32, #tpu.memory_space<vmem>>, %arg19: memref<4x8x8xf32, #tpu.memory_space<vmem>>) attributes {dimension_semantics = [#tpu.dimension_semantics<parallel>, #tpu.dimension_semantics<arbitrary>], iteration_bounds = array<i64: 2, 1>, scalar_prefetch = 0 : i64, scratch_operands = 3 : i64, tpu.core_type = #tpu.core_type<tc>, window_params = [{pipeline_mode = #tpu.pipeline_mode<synchronous>, transform_indices = @transform_0, window_bounds = array<i64: 1, 8, 32>}, {pipeline_mode = #tpu.pipeline_mode<synchronous>, transform_indices = @transform_1, window_bounds = array<i64: 32, 32>}, {pipeline_mode = #tpu.pipeline_mode<synchronous>, transform_indices = @transform_2, window_bounds = array<i64: 32, 32>}, {pipeline_mode = #tpu.pipeline_mode<synchronous>, transform_indices = @transform_3, window_bounds = array<i64: 32, 32>}, {pipeline_mode = #tpu.pipeline_mode<synchronous>, transform_indices = @transform_4, window_bounds = array<i64: 4, 8, 32>}, {pipeline_mode = #tpu.pipeline_mode<synchronous>, transform_indices = @transform_5, window_bounds = array<i64: 1, 32>}, {pipeline_mode = #tpu.pipeline_mode<synchronous>, transform_indices = @transform_6, window_bounds = array<i64: 1, 32>}, {pipeline_mode = #tpu.pipeline_mode<synchronous>, transform_indices = @transform_7, window_bounds = array<i64: 1, 32>}, {pipeline_mode = #tpu.pipeline_mode<synchronous>, transform_indices = @transform_8, window_bounds = array<i64: 1, 32>}, {pipeline_mode = #tpu.pipeline_mode<synchronous>, transform_indices = @transform_9, window_bounds = array<i64: 1, 32>}, {pipeline_mode = #tpu.pipeline_mode<synchronous>, transform_indices = @transform_10, window_bounds = array<i64: 32, 128>}, {pipeline_mode = #tpu.pipeline_mode<synchronous>, transform_indices = @transform_11, window_bounds = array<i64: 1, 128>}, {pipeline_mode = #tpu.pipeline_mode<synchronous>, transform_indices = @transform_12, window_bounds = array<i64: 128, 32>}, {pipeline_mode = #tpu.pipeline_mode<synchronous>, transform_indices = @transform_13, window_bounds = array<i64: 1, 32>}, {transform_indices = @transform_14, window_bounds = array<i64: 1, 8, 32>}]} {
    %c0_i32 = arith.constant 0 : i32
    %0 = arith.cmpi eq, %arg1, %c0_i32 : i32
    %1 = arith.extui %0 : i1 to i32
    %c0_i32_0 = arith.constant 0 : i32
    %2 = arith.cmpi ne, %1, %c0_i32_0 : i32
    scf.if %2 {
      %c0_59 = arith.constant 0 : index
      %c0_60 = arith.constant 0 : index
      %c0_61 = arith.constant 0 : index
      %119 = vector.load %arg2[%c0_59, %c0_60, %c0_61] : memref<1x8x32xf32, #tpu.memory_space<vmem>>, vector<1x8x32xf32>
      %120 = vector.shape_cast %119 : vector<1x8x32xf32> to vector<8x32xf32>
      %c0_62 = arith.constant 0 : index
      %c0_63 = arith.constant 0 : index
      %121 = vector.load %arg8[%c0_62, %c0_63] : memref<1x32xf32, #tpu.memory_space<vmem>>, vector<1x32xf32>
      %c0_64 = arith.constant 0 : index
      %c0_65 = arith.constant 0 : index
      %122 = vector.load %arg9[%c0_64, %c0_65] : memref<1x32xf32, #tpu.memory_space<vmem>>, vector<1x32xf32>
      %cst_66 = arith.constant dense<0.000000e+00> : vector<8xf32>
      %123 = vector.multi_reduction <add>, %120, %cst_66 [1] : vector<8x32xf32> to vector<8xf32>
      %124 = vector.shape_cast %123 : vector<8xf32> to vector<8x1xf32>
      %cst_67 = arith.constant 3.200000e+01 : f32
      %125 = vector.broadcast %cst_67 : f32 to vector<8x1xf32>
      %126 = arith.divf %124, %125 : vector<8x1xf32>
      %127 = arith.mulf %120, %120 : vector<8x32xf32>
      %cst_68 = arith.constant dense<0.000000e+00> : vector<8xf32>
      %128 = vector.multi_reduction <add>, %127, %cst_68 [1] : vector<8x32xf32> to vector<8xf32>
      %129 = vector.shape_cast %128 : vector<8xf32> to vector<8x1xf32>
      %cst_69 = arith.constant 3.200000e+01 : f32
      %130 = vector.broadcast %cst_69 : f32 to vector<8x1xf32>
      %131 = arith.divf %129, %130 : vector<8x1xf32>
      %132 = arith.mulf %126, %126 : vector<8x1xf32>
      %133 = arith.subf %131, %132 : vector<8x1xf32>
      %cst_70 = arith.constant 9.99999974E-6 : f32
      %134 = vector.broadcast %cst_70 : f32 to vector<8x1xf32>
      %135 = arith.addf %133, %134 : vector<8x1xf32>
      %136 = math.rsqrt %135 : vector<8x1xf32>
      %137 = vector.broadcast %126 : vector<8x1xf32> to vector<8x32xf32>
      %138 = arith.subf %120, %137 : vector<8x32xf32>
      %139 = vector.broadcast %136 : vector<8x1xf32> to vector<8x32xf32>
      %140 = arith.mulf %138, %139 : vector<8x32xf32>
      %141 = vector.broadcast %121 : vector<1x32xf32> to vector<8x32xf32>
      %142 = arith.mulf %140, %141 : vector<8x32xf32>
      %143 = vector.broadcast %122 : vector<1x32xf32> to vector<8x32xf32>
      %144 = arith.addf %142, %143 : vector<8x32xf32>
      %c0_71 = arith.constant 0 : index
      %c0_72 = arith.constant 0 : index
      %145 = vector.load %arg3[%c0_71, %c0_72] : memref<32x32xf32, #tpu.memory_space<vmem>>, vector<32x32xf32>
      %cst_73 = arith.constant dense<0.000000e+00> : vector<8x32xf32>
      %146 = tpu.matmul %144, %145, %cst_73 {dimension_numbers = #tpu.dot_dimension_numbers<[1], [0], [0], [1], [0, 0, 1, 1], [], []>} : vector<8x32xf32>, vector<32x32xf32>, vector<8x32xf32> -> vector<8x32xf32>
      %c0_74 = arith.constant 0 : index
      %c0_75 = arith.constant 0 : index
      %147 = vector.load %arg4[%c0_74, %c0_75] : memref<32x32xf32, #tpu.memory_space<vmem>>, vector<32x32xf32>
      %cst_76 = arith.constant dense<0.000000e+00> : vector<8x32xf32>
      %148 = tpu.matmul %144, %147, %cst_76 {dimension_numbers = #tpu.dot_dimension_numbers<[1], [0], [0], [1], [0, 0, 1, 1], [], []>} : vector<8x32xf32>, vector<32x32xf32>, vector<8x32xf32> -> vector<8x32xf32>
      %c0_77 = arith.constant 0 : index
      %c0_78 = arith.constant 0 : index
      %149 = vector.load %arg5[%c0_77, %c0_78] : memref<32x32xf32, #tpu.memory_space<vmem>>, vector<32x32xf32>
      %cst_79 = arith.constant dense<0.000000e+00> : vector<8x32xf32>
      %150 = tpu.matmul %144, %149, %cst_79 {dimension_numbers = #tpu.dot_dimension_numbers<[1], [0], [0], [1], [0, 0, 1, 1], [], []>} : vector<8x32xf32>, vector<32x32xf32>, vector<8x32xf32> -> vector<8x32xf32>
      %151 = vector.shape_cast %146 : vector<8x32xf32> to vector<8x4x8xf32>
      %152 = tpu.transpose %151, [1, 0, 2] : vector<8x4x8xf32> -> vector<4x8x8xf32>
      %c0_80 = arith.constant 0 : index
      %c0_81 = arith.constant 0 : index
      %c0_82 = arith.constant 0 : index
      %153 = vector.load %arg17[%c0_80, %c0_81, %c0_82] : memref<4x8x8xf32, #tpu.memory_space<vmem>>, vector<4x8x8xf32>
      tpu.vector_store %arg17[%c0_80, %c0_81, %c0_82], %152 {strides = array<i32>} : memref<4x8x8xf32, #tpu.memory_space<vmem>>, vector<4x8x8xf32>,
      %154 = vector.shape_cast %148 : vector<8x32xf32> to vector<8x4x8xf32>
      %155 = tpu.transpose %154, [1, 0, 2] : vector<8x4x8xf32> -> vector<4x8x8xf32>
      %c0_83 = arith.constant 0 : index
      %c0_84 = arith.constant 0 : index
      %c0_85 = arith.constant 0 : index
      %156 = vector.load %arg18[%c0_83, %c0_84, %c0_85] : memref<4x8x8xf32, #tpu.memory_space<vmem>>, vector<4x8x8xf32>
      tpu.vector_store %arg18[%c0_83, %c0_84, %c0_85], %155 {strides = array<i32>} : memref<4x8x8xf32, #tpu.memory_space<vmem>>, vector<4x8x8xf32>,
      %157 = vector.shape_cast %150 : vector<8x32xf32> to vector<8x4x8xf32>
      %158 = tpu.transpose %157, [1, 0, 2] : vector<8x4x8xf32> -> vector<4x8x8xf32>
      %c0_86 = arith.constant 0 : index
      %c0_87 = arith.constant 0 : index
      %c0_88 = arith.constant 0 : index
      %159 = vector.load %arg19[%c0_86, %c0_87, %c0_88] : memref<4x8x8xf32, #tpu.memory_space<vmem>>, vector<4x8x8xf32>
      tpu.vector_store %arg19[%c0_86, %c0_87, %c0_88], %158 {strides = array<i32>} : memref<4x8x8xf32, #tpu.memory_space<vmem>>, vector<4x8x8xf32>,
    } else {
    }
    %c8_i32 = arith.constant 8 : i32
    %3 = arith.muli %arg1, %c8_i32 : i32
    %4 = tpu.assume_multiple %3, 8 : i32
    %c0 = arith.constant 0 : index
    %5 = arith.index_cast %4 : i32 to index
    %c0_1 = arith.constant 0 : index
    %6 = vector.load %arg2[%c0, %5, %c0_1] : memref<1x8x32xf32, #tpu.memory_space<vmem>>, vector<1x8x32xf32>
    %7 = vector.shape_cast %6 : vector<1x8x32xf32> to vector<8x32xf32>
    %c0_2 = arith.constant 0 : index
    %8 = arith.index_cast %4 : i32 to index
    %c0_3 = arith.constant 0 : index
    %9 = vector.load %arg17[%c0_2, %8, %c0_3] : memref<4x8x8xf32, #tpu.memory_space<vmem>>, vector<4x8x8xf32>
    %cst = arith.constant 0xFF800000 : f32
    %10 = vector.broadcast %cst : f32 to vector<4x8x1xf32>
    %cst_4 = arith.constant 0.000000e+00 : f32
    %11 = vector.broadcast %cst_4 : f32 to vector<4x8x1xf32>
    %cst_5 = arith.constant 0.000000e+00 : f32
    %12 = vector.broadcast %cst_5 : f32 to vector<4x8x8xf32>
    %c0_6 = arith.constant 0 : index
    %c0_7 = arith.constant 0 : index
    %c0_8 = arith.constant 0 : index
    %13 = vector.load %arg18[%c0_6, %c0_7, %c0_8] : memref<4x8x8xf32, #tpu.memory_space<vmem>>, vector<4x8x8xf32>
    %c0_9 = arith.constant 0 : index
    %c0_10 = arith.constant 0 : index
    %c0_11 = arith.constant 0 : index
    %14 = vector.load %arg19[%c0_9, %c0_10, %c0_11] : memref<4x8x8xf32, #tpu.memory_space<vmem>>, vector<4x8x8xf32>
    "tpu.trace_start"() <{level = 10 : i32, message = "hqd,hkd->hqk"}> : () -> ()
    %cst_12 = arith.constant dense<0.000000e+00> : vector<4x8x8xf32>
    %15 = tpu.matmul %9, %13, %cst_12 {dimension_numbers = #tpu.dot_dimension_numbers<[2], [2], [1], [1], [0, 0, 0, 1, 1, 1], [0], [0]>} : vector<4x8x8xf32>, vector<4x8x8xf32>, vector<4x8x8xf32> -> vector<4x8x8xf32>
    "tpu.trace_stop"() : () -> ()
    %cst_13 = arith.constant dense<0xFF800000> : vector<4x8xf32>
    %16 = vector.multi_reduction <maximumf>, %15, %cst_13 [2] : vector<4x8x8xf32> to vector<4x8xf32>
    %17 = vector.shape_cast %16 : vector<4x8xf32> to vector<4x8x1xf32>
    %18 = arith.maximumf %10, %17 : vector<4x8x1xf32>
    %19 = arith.subf %10, %18 : vector<4x8x1xf32>
    %20 = math.exp %19 : vector<4x8x1xf32>
    %21 = vector.broadcast %18 : vector<4x8x1xf32> to vector<4x8x8xf32>
    %22 = arith.subf %15, %21 : vector<4x8x8xf32>
    %23 = math.exp %22 : vector<4x8x8xf32>
    %24 = arith.mulf %20, %11 : vector<4x8x1xf32>
    %cst_14 = arith.constant dense<0.000000e+00> : vector<4x8xf32>
    %25 = vector.multi_reduction <add>, %23, %cst_14 [2] : vector<4x8x8xf32> to vector<4x8xf32>
    %26 = vector.shape_cast %25 : vector<4x8xf32> to vector<4x8x1xf32>
    %27 = arith.addf %24, %26 : vector<4x8x1xf32>
    %28 = vector.broadcast %20 : vector<4x8x1xf32> to vector<4x8x8xf32>
    %29 = arith.mulf %28, %12 : vector<4x8x8xf32>
    "tpu.trace_start"() <{level = 10 : i32, message = "hqk,hkd->hqd"}> : () -> ()
    %cst_15 = arith.constant dense<0.000000e+00> : vector<4x8x8xf32>
    %30 = tpu.matmul %23, %14, %cst_15 {dimension_numbers = #tpu.dot_dimension_numbers<[2], [1], [1], [2], [0, 0, 0, 1, 1, 2], [0], [0]>} : vector<4x8x8xf32>, vector<4x8x8xf32>, vector<4x8x8xf32> -> vector<4x8x8xf32>
    "tpu.trace_stop"() : () -> ()
    %31 = arith.addf %29, %30 : vector<4x8x8xf32>
    %32 = tpu.reciprocal %27 {approx = true} : vector<4x8x1xf32> -> vector<4x8x1xf32>
    %33 = vector.broadcast %32 : vector<4x8x1xf32> to vector<4x8x8xf32>
    %34 = arith.mulf %31, %33 : vector<4x8x8xf32>
    %c0_16 = arith.constant 0 : index
    %c0_17 = arith.constant 0 : index
    %c0_18 = arith.constant 0 : index
    %35 = vector.load %arg6[%c0_16, %c0_17, %c0_18] : memref<4x8x32xf32, #tpu.memory_space<vmem>>, vector<4x8x32xf32>
    "tpu.trace_start"() <{level = 10 : i32, message = "hqd,hdD->hqD"}> : () -> ()
    %cst_19 = arith.constant dense<0.000000e+00> : vector<4x8x32xf32>
    %36 = tpu.matmul %34, %35, %cst_19 {dimension_numbers = #tpu.dot_dimension_numbers<[2], [1], [1], [2], [0, 0, 0, 1, 1, 2], [0], [0]>} : vector<4x8x8xf32>, vector<4x8x32xf32>, vector<4x8x32xf32> -> vector<4x8x32xf32>
    "tpu.trace_stop"() : () -> ()
    %cst_20 = arith.constant dense<0.000000e+00> : vector<8x32xf32>
    %37 = vector.multi_reduction <add>, %36, %cst_20 [0] : vector<4x8x32xf32> to vector<8x32xf32>
    %c0_21 = arith.constant 0 : index
    %c0_22 = arith.constant 0 : index
    %38 = vector.load %arg7[%c0_21, %c0_22] : memref<1x32xf32, #tpu.memory_space<vmem>>, vector<1x32xf32>
    %39 = vector.broadcast %38 : vector<1x32xf32> to vector<8x32xf32>
    %40 = arith.addf %37, %39 : vector<8x32xf32>
    %41 = arith.addf %7, %40 : vector<8x32xf32>
    %c0_23 = arith.constant 0 : index
    %c0_24 = arith.constant 0 : index
    %42 = vector.load %arg10[%c0_23, %c0_24] : memref<1x32xf32, #tpu.memory_space<vmem>>, vector<1x32xf32>
    %c0_25 = arith.constant 0 : index
    %c0_26 = arith.constant 0 : index
    %43 = vector.load %arg11[%c0_25, %c0_26] : memref<1x32xf32, #tpu.memory_space<vmem>>, vector<1x32xf32>
    %cst_27 = arith.constant dense<0.000000e+00> : vector<8xf32>
    %44 = vector.multi_reduction <add>, %41, %cst_27 [1] : vector<8x32xf32> to vector<8xf32>
    %45 = vector.shape_cast %44 : vector<8xf32> to vector<8x1xf32>
    %cst_28 = arith.constant 3.200000e+01 : f32
    %46 = vector.broadcast %cst_28 : f32 to vector<8x1xf32>
    %47 = arith.divf %45, %46 : vector<8x1xf32>
    %48 = arith.mulf %41, %41 : vector<8x32xf32>
    %cst_29 = arith.constant dense<0.000000e+00> : vector<8xf32>
    %49 = vector.multi_reduction <add>, %48, %cst_29 [1] : vector<8x32xf32> to vector<8xf32>
    %50 = vector.shape_cast %49 : vector<8xf32> to vector<8x1xf32>
    %cst_30 = arith.constant 3.200000e+01 : f32
    %51 = vector.broadcast %cst_30 : f32 to vector<8x1xf32>
    %52 = arith.divf %50, %51 : vector<8x1xf32>
    %53 = arith.mulf %47, %47 : vector<8x1xf32>
    %54 = arith.subf %52, %53 : vector<8x1xf32>
    %cst_31 = arith.constant 9.99999974E-6 : f32
    %55 = vector.broadcast %cst_31 : f32 to vector<8x1xf32>
    %56 = arith.addf %54, %55 : vector<8x1xf32>
    %57 = math.rsqrt %56 : vector<8x1xf32>
    %58 = vector.broadcast %47 : vector<8x1xf32> to vector<8x32xf32>
    %59 = arith.subf %41, %58 : vector<8x32xf32>
    %60 = vector.broadcast %57 : vector<8x1xf32> to vector<8x32xf32>
    %61 = arith.mulf %59, %60 : vector<8x32xf32>
    %62 = vector.broadcast %42 : vector<1x32xf32> to vector<8x32xf32>
    %63 = arith.mulf %61, %62 : vector<8x32xf32>
    %64 = vector.broadcast %43 : vector<1x32xf32> to vector<8x32xf32>
    %65 = arith.addf %63, %64 : vector<8x32xf32>
    %c0_32 = arith.constant 0 : index
    %c0_33 = arith.constant 0 : index
    %66 = vector.load %arg12[%c0_32, %c0_33] : memref<32x128xf32, #tpu.memory_space<vmem>>, vector<32x128xf32>
    %cst_34 = arith.constant dense<0.000000e+00> : vector<8x128xf32>
    %67 = tpu.matmul %65, %66, %cst_34 {dimension_numbers = #tpu.dot_dimension_numbers<[1], [0], [0], [1], [0, 0, 1, 1], [], []>} : vector<8x32xf32>, vector<32x128xf32>, vector<8x128xf32> -> vector<8x128xf32>
    %c0_35 = arith.constant 0 : index
    %c0_36 = arith.constant 0 : index
    %68 = vector.load %arg13[%c0_35, %c0_36] : memref<1x128xf32, #tpu.memory_space<vmem>>, vector<1x128xf32>
    %69 = vector.broadcast %68 : vector<1x128xf32> to vector<8x128xf32>
    %70 = arith.addf %67, %69 : vector<8x128xf32>
    %cst_37 = arith.constant 5.000000e-01 : f32
    %71 = vector.broadcast %cst_37 : f32 to vector<8x128xf32>
    %72 = arith.mulf %71, %70 : vector<8x128xf32>
    %cst_38 = arith.constant 0.707106769 : f32
    %73 = vector.broadcast %cst_38 : f32 to vector<8x128xf32>
    %74 = arith.mulf %70, %73 : vector<8x128xf32>
    %75 = math.absf %74 : vector<8x128xf32>
    %cst_39 = arith.constant 0.327591091 : f32
    %76 = vector.broadcast %cst_39 : f32 to vector<8x128xf32>
    %77 = arith.mulf %76, %75 : vector<8x128xf32>
    %cst_40 = arith.constant 1.000000e+00 : f32
    %78 = vector.broadcast %cst_40 : f32 to vector<8x128xf32>
    %79 = arith.addf %78, %77 : vector<8x128xf32>
    %80 = tpu.reciprocal %79 {approx = true} : vector<8x128xf32> -> vector<8x128xf32>
    %cst_41 = arith.constant 1.06140542 : f32
    %81 = vector.broadcast %cst_41 : f32 to vector<8x128xf32>
    %82 = arith.mulf %81, %80 : vector<8x128xf32>
    %cst_42 = arith.constant -1.45315206 : f32
    %83 = vector.broadcast %cst_42 : f32 to vector<8x128xf32>
    %84 = arith.addf %82, %83 : vector<8x128xf32>
    %85 = arith.mulf %84, %80 : vector<8x128xf32>
    %cst_43 = arith.constant 1.42141378 : f32
    %86 = vector.broadcast %cst_43 : f32 to vector<8x128xf32>
    %87 = arith.addf %85, %86 : vector<8x128xf32>
    %88 = arith.mulf %87, %80 : vector<8x128xf32>
    %cst_44 = arith.constant -0.284496725 : f32
    %89 = vector.broadcast %cst_44 : f32 to vector<8x128xf32>
    %90 = arith.addf %88, %89 : vector<8x128xf32>
    %91 = arith.mulf %90, %80 : vector<8x128xf32>
    %cst_45 = arith.constant 0.254829586 : f32
    %92 = vector.broadcast %cst_45 : f32 to vector<8x128xf32>
    %93 = arith.addf %91, %92 : vector<8x128xf32>
    %94 = arith.mulf %93, %80 : vector<8x128xf32>
    %cst_46 = arith.constant 0.000000e+00 : f32
    %95 = vector.broadcast %cst_46 : f32 to vector<8x128xf32>
    %96 = arith.subf %95, %75 : vector<8x128xf32>
    %97 = arith.mulf %96, %75 : vector<8x128xf32>
    %98 = math.exp %97 : vector<8x128xf32>
    %99 = arith.mulf %94, %98 : vector<8x128xf32>
    %cst_47 = arith.constant 1.000000e+00 : f32
    %100 = vector.broadcast %cst_47 : f32 to vector<8x128xf32>
    %101 = arith.subf %100, %99 : vector<8x128xf32>
    %cst_48 = arith.constant 0.000000e+00 : f32
    %102 = vector.broadcast %cst_48 : f32 to vector<8x128xf32>
    %103 = arith.cmpf oge, %74, %102 : vector<8x128xf32>
    %cst_49 = arith.constant 0.000000e+00 : f32
    %104 = vector.broadcast %cst_49 : f32 to vector<8x128xf32>
    %105 = arith.subf %104, %101 : vector<8x128xf32>
    %106 = arith.select %103, %101, %105 : vector<8x128xi1>, vector<8x128xf32>
    %cst_50 = arith.constant 1.000000e+00 : f32
    %107 = vector.broadcast %cst_50 : f32 to vector<8x128xf32>
    %108 = arith.addf %107, %106 : vector<8x128xf32>
    %109 = arith.mulf %72, %108 : vector<8x128xf32>
    %c0_51 = arith.constant 0 : index
    %c0_52 = arith.constant 0 : index
    %110 = vector.load %arg14[%c0_51, %c0_52] : memref<128x32xf32, #tpu.memory_space<vmem>>, vector<128x32xf32>
    %cst_53 = arith.constant dense<0.000000e+00> : vector<8x32xf32>
    %111 = tpu.matmul %109, %110, %cst_53 {dimension_numbers = #tpu.dot_dimension_numbers<[1], [0], [0], [1], [0, 0, 1, 1], [], []>} : vector<8x128xf32>, vector<128x32xf32>, vector<8x32xf32> -> vector<8x32xf32>
    %c0_54 = arith.constant 0 : index
    %c0_55 = arith.constant 0 : index
    %112 = vector.load %arg15[%c0_54, %c0_55] : memref<1x32xf32, #tpu.memory_space<vmem>>, vector<1x32xf32>
    %113 = vector.broadcast %112 : vector<1x32xf32> to vector<8x32xf32>
    %114 = arith.addf %111, %113 : vector<8x32xf32>
    %115 = arith.addf %41, %114 : vector<8x32xf32>
    %c0_56 = arith.constant 0 : index
    %c0_57 = arith.constant 0 : index
    %c0_58 = arith.constant 0 : index
    %116 = vector.load %arg16[%c0_56, %c0_57, %c0_58] : memref<1x8x32xf32, #tpu.memory_space<vmem>>, vector<1x8x32xf32>
    %117 = vector.shape_cast %116 : vector<1x8x32xf32> to vector<8x32xf32>
    %118 = vector.shape_cast %115 : vector<8x32xf32> to vector<1x8x32xf32>
    tpu.vector_store %arg16[%c0_56, %c0_57, %c0_58], %118 {strides = array<i32>} : memref<1x8x32xf32, #tpu.memory_space<vmem>>, vector<1x8x32xf32>,
    return
  }
  func.func @transform_0(%arg0: i32, %arg1: i32) -> (i32, i32, i32) {
    %c0_i32 = arith.constant 0 : i32
    %c0_i32_0 = arith.constant 0 : i32
    %c0_i32_1 = arith.constant 0 : i32
    return %arg0, %c0_i32, %c0_i32_0 : i32, i32, i32
  }
  func.func @transform_1(%arg0: i32, %arg1: i32) -> (i32, i32) {
    %c0_i32 = arith.constant 0 : i32
    %c0_i32_0 = arith.constant 0 : i32
    %c0_i32_1 = arith.constant 0 : i32
    return %c0_i32, %c0_i32_0 : i32, i32
  }
  func.func @transform_2(%arg0: i32, %arg1: i32) -> (i32, i32) {
    %c0_i32 = arith.constant 0 : i32
    %c0_i32_0 = arith.constant 0 : i32
    %c0_i32_1 = arith.constant 0 : i32
    return %c0_i32, %c0_i32_0 : i32, i32
  }
  func.func @transform_3(%arg0: i32, %arg1: i32) -> (i32, i32) {
    %c0_i32 = arith.constant 0 : i32
    %c0_i32_0 = arith.constant 0 : i32
    %c0_i32_1 = arith.constant 0 : i32
    return %c0_i32, %c0_i32_0 : i32, i32
  }
  func.func @transform_4(%arg0: i32, %arg1: i32) -> (i32, i32, i32) {
    %c0_i32 = arith.constant 0 : i32
    %c0_i32_0 = arith.constant 0 : i32
    %c0_i32_1 = arith.constant 0 : i32
    %c0_i32_2 = arith.constant 0 : i32
    return %c0_i32, %c0_i32_0, %c0_i32_1 : i32, i32, i32
  }
  func.func @transform_5(%arg0: i32, %arg1: i32) -> (i32, i32) {
    %c0_i32 = arith.constant 0 : i32
    %c0_i32_0 = arith.constant 0 : i32
    %c0_i32_1 = arith.constant 0 : i32
    return %c0_i32, %c0_i32_0 : i32, i32
  }
  func.func @transform_6(%arg0: i32, %arg1: i32) -> (i32, i32) {
    %c0_i32 = arith.constant 0 : i32
    %c0_i32_0 = arith.constant 0 : i32
    %c0_i32_1 = arith.constant 0 : i32
    return %c0_i32, %c0_i32_0 : i32, i32
  }
  func.func @transform_7(%arg0: i32, %arg1: i32) -> (i32, i32) {
    %c0_i32 = arith.constant 0 : i32
    %c0_i32_0 = arith.constant 0 : i32
    %c0_i32_1 = arith.constant 0 : i32
    return %c0_i32, %c0_i32_0 : i32, i32
  }
  func.func @transform_8(%arg0: i32, %arg1: i32) -> (i32, i32) {
    %c0_i32 = arith.constant 0 : i32
    %c0_i32_0 = arith.constant 0 : i32
    %c0_i32_1 = arith.constant 0 : i32
    return %c0_i32, %c0_i32_0 : i32, i32
  }
  func.func @transform_9(%arg0: i32, %arg1: i32) -> (i32, i32) {
    %c0_i32 = arith.constant 0 : i32
    %c0_i32_0 = arith.constant 0 : i32
    %c0_i32_1 = arith.constant 0 : i32
    return %c0_i32, %c0_i32_0 : i32, i32
  }
  func.func @transform_10(%arg0: i32, %arg1: i32) -> (i32, i32) {
    %c0_i32 = arith.constant 0 : i32
    %c0_i32_0 = arith.constant 0 : i32
    %c0_i32_1 = arith.constant 0 : i32
    return %c0_i32, %c0_i32_0 : i32, i32
  }
  func.func @transform_11(%arg0: i32, %arg1: i32) -> (i32, i32) {
    %c0_i32 = arith.constant 0 : i32
    %c0_i32_0 = arith.constant 0 : i32
    %c0_i32_1 = arith.constant 0 : i32
    return %c0_i32, %c0_i32_0 : i32, i32
  }
  func.func @transform_12(%arg0: i32, %arg1: i32) -> (i32, i32) {
    %c0_i32 = arith.constant 0 : i32
    %c0_i32_0 = arith.constant 0 : i32
    %c0_i32_1 = arith.constant 0 : i32
    return %c0_i32, %c0_i32_0 : i32, i32
  }
  func.func @transform_13(%arg0: i32, %arg1: i32) -> (i32, i32) {
    %c0_i32 = arith.constant 0 : i32
    %c0_i32_0 = arith.constant 0 : i32
    %c0_i32_1 = arith.constant 0 : i32
    return %c0_i32, %c0_i32_0 : i32, i32
  }
  func.func @transform_14(%arg0: i32, %arg1: i32) -> (i32, i32, i32) {
    %c0_i32 = arith.constant 0 : i32
    %c0_i32_0 = arith.constant 0 : i32
    return %arg0, %arg1, %c0_i32 : i32, i32, i32
  }
}

module attributes {stable_mosaic.version = 11 : i64} {
  func.func @transformer_layer_kernel(%arg0: i32, %arg1: i32, %arg2: memref<1x8x32xf32, #tpu.memory_space<vmem>>, %arg3: memref<32x32xf32, #tpu.memory_space<vmem>>, %arg4: memref<32x32xf32, #tpu.memory_space<vmem>>, %arg5: memref<32x32xf32, #tpu.memory_space<vmem>>, %arg6: memref<4x8x32xf32, #tpu.memory_space<vmem>>, %arg7: memref<1x32xf32, #tpu.memory_space<vmem>>, %arg8: memref<1x32xf32, #tpu.memory_space<vmem>>, %arg9: memref<1x32xf32, #tpu.memory_space<vmem>>, %arg10: memref<1x32xf32, #tpu.memory_space<vmem>>, %arg11: memref<1x32xf32, #tpu.memory_space<vmem>>, %arg12: memref<32x128xf32, #tpu.memory_space<vmem>>, %arg13: memref<1x128xf32, #tpu.memory_space<vmem>>, %arg14: memref<128x32xf32, #tpu.memory_space<vmem>>, %arg15: memref<1x32xf32, #tpu.memory_space<vmem>>, %arg16: memref<1x8x32xf32, #tpu.memory_space<vmem>>, %arg17: memref<4x8x8xf32, #tpu.memory_space<vmem>>, %arg18: memref<4x8x8xf32, #tpu.memory_space<vmem>>, %arg19: memref<4x8x8xf32, #tpu.memory_space<vmem>>) attributes {dimension_semantics = [#tpu.dimension_semantics<parallel>, #tpu.dimension_semantics<arbitrary>], iteration_bounds = array<i64: 2, 1>, scalar_prefetch = 0 : i64, scratch_operands = 3 : i64, tpu.core_type = #tpu.core_type<tc>, window_params = [{transform_indices = @transform_0, window_bounds = array<i64: 1, 8, 32>}, {pipeline_mode = #tpu.pipeline_mode<synchronous>, transform_indices = @transform_1, window_bounds = array<i64: 32, 32>}, {pipeline_mode = #tpu.pipeline_mode<synchronous>, transform_indices = @transform_2, window_bounds = array<i64: 32, 32>}, {pipeline_mode = #tpu.pipeline_mode<synchronous>, transform_indices = @transform_3, window_bounds = array<i64: 32, 32>}, {pipeline_mode = #tpu.pipeline_mode<synchronous>, transform_indices = @transform_4, window_bounds = array<i64: 4, 8, 32>}, {pipeline_mode = #tpu.pipeline_mode<synchronous>, transform_indices = @transform_5, window_bounds = array<i64: 1, 32>}, {pipeline_mode = #tpu.pipeline_mode<synchronous>, transform_indices = @transform_6, window_bounds = array<i64: 1, 32>}, {pipeline_mode = #tpu.pipeline_mode<synchronous>, transform_indices = @transform_7, window_bounds = array<i64: 1, 32>}, {pipeline_mode = #tpu.pipeline_mode<synchronous>, transform_indices = @transform_8, window_bounds = array<i64: 1, 32>}, {pipeline_mode = #tpu.pipeline_mode<synchronous>, transform_indices = @transform_9, window_bounds = array<i64: 1, 32>}, {pipeline_mode = #tpu.pipeline_mode<synchronous>, transform_indices = @transform_10, window_bounds = array<i64: 32, 128>}, {pipeline_mode = #tpu.pipeline_mode<synchronous>, transform_indices = @transform_11, window_bounds = array<i64: 1, 128>}, {pipeline_mode = #tpu.pipeline_mode<synchronous>, transform_indices = @transform_12, window_bounds = array<i64: 128, 32>}, {pipeline_mode = #tpu.pipeline_mode<synchronous>, transform_indices = @transform_13, window_bounds = array<i64: 1, 32>}, {transform_indices = @transform_14, window_bounds = array<i64: 1, 8, 32>}]} {
    %c0_i32 = arith.constant 0 : i32
    %0 = arith.cmpi eq, %arg1, %c0_i32 : i32
    %1 = arith.extui %0 : i1 to i32
    %c0_i32_0 = arith.constant 0 : i32
    %2 = arith.cmpi ne, %1, %c0_i32_0 : i32
    scf.if %2 {
      %c0_59 = arith.constant 0 : index
      %c0_60 = arith.constant 0 : index
      %c0_61 = arith.constant 0 : index
      %119 = vector.load %arg2[%c0_59, %c0_60, %c0_61] : memref<1x8x32xf32, #tpu.memory_space<vmem>>, vector<1x8x32xf32>
      %120 = vector.shape_cast %119 : vector<1x8x32xf32> to vector<8x32xf32>
      %c0_62 = arith.constant 0 : index
      %c0_63 = arith.constant 0 : index
      %121 = vector.load %arg8[%c0_62, %c0_63] : memref<1x32xf32, #tpu.memory_space<vmem>>, vector<1x32xf32>
      %c0_64 = arith.constant 0 : index
      %c0_65 = arith.constant 0 : index
      %122 = vector.load %arg9[%c0_64, %c0_65] : memref<1x32xf32, #tpu.memory_space<vmem>>, vector<1x32xf32>
      %cst_66 = arith.constant dense<0.000000e+00> : vector<8xf32>
      %123 = vector.multi_reduction <add>, %120, %cst_66 [1] : vector<8x32xf32> to vector<8xf32>
      %124 = vector.shape_cast %123 : vector<8xf32> to vector<8x1xf32>
      %cst_67 = arith.constant 3.200000e+01 : f32
      %125 = vector.broadcast %cst_67 : f32 to vector<8x1xf32>
      %126 = arith.divf %124, %125 : vector<8x1xf32>
      %127 = arith.mulf %120, %120 : vector<8x32xf32>
      %cst_68 = arith.constant dense<0.000000e+00> : vector<8xf32>
      %128 = vector.multi_reduction <add>, %127, %cst_68 [1] : vector<8x32xf32> to vector<8xf32>
      %129 = vector.shape_cast %128 : vector<8xf32> to vector<8x1xf32>
      %cst_69 = arith.constant 3.200000e+01 : f32
      %130 = vector.broadcast %cst_69 : f32 to vector<8x1xf32>
      %131 = arith.divf %129, %130 : vector<8x1xf32>
      %132 = arith.mulf %126, %126 : vector<8x1xf32>
      %133 = arith.subf %131, %132 : vector<8x1xf32>
      %cst_70 = arith.constant 9.99999974E-6 : f32
      %134 = vector.broadcast %cst_70 : f32 to vector<8x1xf32>
      %135 = arith.addf %133, %134 : vector<8x1xf32>
      %136 = math.rsqrt %135 : vector<8x1xf32>
      %137 = vector.broadcast %126 : vector<8x1xf32> to vector<8x32xf32>
      %138 = arith.subf %120, %137 : vector<8x32xf32>
      %139 = vector.broadcast %136 : vector<8x1xf32> to vector<8x32xf32>
      %140 = arith.mulf %138, %139 : vector<8x32xf32>
      %141 = vector.broadcast %121 : vector<1x32xf32> to vector<8x32xf32>
      %142 = arith.mulf %140, %141 : vector<8x32xf32>
      %143 = vector.broadcast %122 : vector<1x32xf32> to vector<8x32xf32>
      %144 = arith.addf %142, %143 : vector<8x32xf32>
      %c0_71 = arith.constant 0 : index
      %c0_72 = arith.constant 0 : index
      %145 = vector.load %arg3[%c0_71, %c0_72] : memref<32x32xf32, #tpu.memory_space<vmem>>, vector<32x32xf32>
      %cst_73 = arith.constant dense<0.000000e+00> : vector<8x32xf32>
      %146 = tpu.matmul %144, %145, %cst_73 {dimension_numbers = #tpu.dot_dimension_numbers<[1], [0], [0], [1], [0, 0, 1, 1], [], []>} : vector<8x32xf32>, vector<32x32xf32>, vector<8x32xf32> -> vector<8x32xf32>
      %c0_74 = arith.constant 0 : index
      %c0_75 = arith.constant 0 : index
      %147 = vector.load %arg4[%c0_74, %c0_75] : memref<32x32xf32, #tpu.memory_space<vmem>>, vector<32x32xf32>
      %cst_76 = arith.constant dense<0.000000e+00> : vector<8x32xf32>
      %148 = tpu.matmul %144, %147, %cst_76 {dimension_numbers = #tpu.dot_dimension_numbers<[1], [0], [0], [1], [0, 0, 1, 1], [], []>} : vector<8x32xf32>, vector<32x32xf32>, vector<8x32xf32> -> vector<8x32xf32>
      %c0_77 = arith.constant 0 : index
      %c0_78 = arith.constant 0 : index
      %149 = vector.load %arg5[%c0_77, %c0_78] : memref<32x32xf32, #tpu.memory_space<vmem>>, vector<32x32xf32>
      %cst_79 = arith.constant dense<0.000000e+00> : vector<8x32xf32>
      %150 = tpu.matmul %144, %149, %cst_79 {dimension_numbers = #tpu.dot_dimension_numbers<[1], [0], [0], [1], [0, 0, 1, 1], [], []>} : vector<8x32xf32>, vector<32x32xf32>, vector<8x32xf32> -> vector<8x32xf32>
      %151 = vector.shape_cast %146 : vector<8x32xf32> to vector<8x4x8xf32>
      %152 = tpu.transpose %151, [1, 0, 2] : vector<8x4x8xf32> -> vector<4x8x8xf32>
      %c0_80 = arith.constant 0 : index
      %c0_81 = arith.constant 0 : index
      %c0_82 = arith.constant 0 : index
      %153 = vector.load %arg17[%c0_80, %c0_81, %c0_82] : memref<4x8x8xf32, #tpu.memory_space<vmem>>, vector<4x8x8xf32>
      tpu.vector_store %arg17[%c0_80, %c0_81, %c0_82], %152 {strides = array<i32>} : memref<4x8x8xf32, #tpu.memory_space<vmem>>, vector<4x8x8xf32>,
      %154 = vector.shape_cast %148 : vector<8x32xf32> to vector<8x4x8xf32>
      %155 = tpu.transpose %154, [1, 0, 2] : vector<8x4x8xf32> -> vector<4x8x8xf32>
      %c0_83 = arith.constant 0 : index
      %c0_84 = arith.constant 0 : index
      %c0_85 = arith.constant 0 : index
      %156 = vector.load %arg18[%c0_83, %c0_84, %c0_85] : memref<4x8x8xf32, #tpu.memory_space<vmem>>, vector<4x8x8xf32>
      tpu.vector_store %arg18[%c0_83, %c0_84, %c0_85], %155 {strides = array<i32>} : memref<4x8x8xf32, #tpu.memory_space<vmem>>, vector<4x8x8xf32>,
      %157 = vector.shape_cast %150 : vector<8x32xf32> to vector<8x4x8xf32>
      %158 = tpu.transpose %157, [1, 0, 2] : vector<8x4x8xf32> -> vector<4x8x8xf32>
      %c0_86 = arith.constant 0 : index
      %c0_87 = arith.constant 0 : index
      %c0_88 = arith.constant 0 : index
      %159 = vector.load %arg19[%c0_86, %c0_87, %c0_88] : memref<4x8x8xf32, #tpu.memory_space<vmem>>, vector<4x8x8xf32>
      tpu.vector_store %arg19[%c0_86, %c0_87, %c0_88], %158 {strides = array<i32>} : memref<4x8x8xf32, #tpu.memory_space<vmem>>, vector<4x8x8xf32>,
    } else {
    }
    %c8_i32 = arith.constant 8 : i32
    %3 = arith.muli %arg1, %c8_i32 : i32
    %4 = tpu.assume_multiple %3, 8 : i32
    %c0 = arith.constant 0 : index
    %5 = arith.index_cast %4 : i32 to index
    %c0_1 = arith.constant 0 : index
    %6 = vector.load %arg2[%c0, %5, %c0_1] : memref<1x8x32xf32, #tpu.memory_space<vmem>>, vector<1x8x32xf32>
    %7 = vector.shape_cast %6 : vector<1x8x32xf32> to vector<8x32xf32>
    %c0_2 = arith.constant 0 : index
    %8 = arith.index_cast %4 : i32 to index
    %c0_3 = arith.constant 0 : index
    %9 = vector.load %arg17[%c0_2, %8, %c0_3] : memref<4x8x8xf32, #tpu.memory_space<vmem>>, vector<4x8x8xf32>
    %cst = arith.constant 0xFF800000 : f32
    %10 = vector.broadcast %cst : f32 to vector<4x8x1xf32>
    %cst_4 = arith.constant 0.000000e+00 : f32
    %11 = vector.broadcast %cst_4 : f32 to vector<4x8x1xf32>
    %cst_5 = arith.constant 0.000000e+00 : f32
    %12 = vector.broadcast %cst_5 : f32 to vector<4x8x8xf32>
    %c0_6 = arith.constant 0 : index
    %c0_7 = arith.constant 0 : index
    %c0_8 = arith.constant 0 : index
    %13 = vector.load %arg18[%c0_6, %c0_7, %c0_8] : memref<4x8x8xf32, #tpu.memory_space<vmem>>, vector<4x8x8xf32>
    %c0_9 = arith.constant 0 : index
    %c0_10 = arith.constant 0 : index
    %c0_11 = arith.constant 0 : index
    %14 = vector.load %arg19[%c0_9, %c0_10, %c0_11] : memref<4x8x8xf32, #tpu.memory_space<vmem>>, vector<4x8x8xf32>
    "tpu.trace_start"() <{level = 10 : i32, message = "hqd,hkd->hqk"}> : () -> ()
    %cst_12 = arith.constant dense<0.000000e+00> : vector<4x8x8xf32>
    %15 = tpu.matmul %9, %13, %cst_12 {dimension_numbers = #tpu.dot_dimension_numbers<[2], [2], [1], [1], [0, 0, 0, 1, 1, 1], [0], [0]>} : vector<4x8x8xf32>, vector<4x8x8xf32>, vector<4x8x8xf32> -> vector<4x8x8xf32>
    "tpu.trace_stop"() : () -> ()
    %cst_13 = arith.constant dense<0xFF800000> : vector<4x8xf32>
    %16 = vector.multi_reduction <maximumf>, %15, %cst_13 [2] : vector<4x8x8xf32> to vector<4x8xf32>
    %17 = vector.shape_cast %16 : vector<4x8xf32> to vector<4x8x1xf32>
    %18 = arith.maximumf %10, %17 : vector<4x8x1xf32>
    %19 = arith.subf %10, %18 : vector<4x8x1xf32>
    %20 = math.exp %19 : vector<4x8x1xf32>
    %21 = vector.broadcast %18 : vector<4x8x1xf32> to vector<4x8x8xf32>
    %22 = arith.subf %15, %21 : vector<4x8x8xf32>
    %23 = math.exp %22 : vector<4x8x8xf32>
    %24 = arith.mulf %20, %11 : vector<4x8x1xf32>
    %cst_14 = arith.constant dense<0.000000e+00> : vector<4x8xf32>
    %25 = vector.multi_reduction <add>, %23, %cst_14 [2] : vector<4x8x8xf32> to vector<4x8xf32>
    %26 = vector.shape_cast %25 : vector<4x8xf32> to vector<4x8x1xf32>
    %27 = arith.addf %24, %26 : vector<4x8x1xf32>
    %28 = vector.broadcast %20 : vector<4x8x1xf32> to vector<4x8x8xf32>
    %29 = arith.mulf %28, %12 : vector<4x8x8xf32>
    "tpu.trace_start"() <{level = 10 : i32, message = "hqk,hkd->hqd"}> : () -> ()
    %cst_15 = arith.constant dense<0.000000e+00> : vector<4x8x8xf32>
    %30 = tpu.matmul %23, %14, %cst_15 {dimension_numbers = #tpu.dot_dimension_numbers<[2], [1], [1], [2], [0, 0, 0, 1, 1, 2], [0], [0]>} : vector<4x8x8xf32>, vector<4x8x8xf32>, vector<4x8x8xf32> -> vector<4x8x8xf32>
    "tpu.trace_stop"() : () -> ()
    %31 = arith.addf %29, %30 : vector<4x8x8xf32>
    %32 = tpu.reciprocal %27 {approx = true} : vector<4x8x1xf32> -> vector<4x8x1xf32>
    %33 = vector.broadcast %32 : vector<4x8x1xf32> to vector<4x8x8xf32>
    %34 = arith.mulf %31, %33 : vector<4x8x8xf32>
    %c0_16 = arith.constant 0 : index
    %c0_17 = arith.constant 0 : index
    %c0_18 = arith.constant 0 : index
    %35 = vector.load %arg6[%c0_16, %c0_17, %c0_18] : memref<4x8x32xf32, #tpu.memory_space<vmem>>, vector<4x8x32xf32>
    "tpu.trace_start"() <{level = 10 : i32, message = "hqd,hdD->hqD"}> : () -> ()
    %cst_19 = arith.constant dense<0.000000e+00> : vector<4x8x32xf32>
    %36 = tpu.matmul %34, %35, %cst_19 {dimension_numbers = #tpu.dot_dimension_numbers<[2], [1], [1], [2], [0, 0, 0, 1, 1, 2], [0], [0]>} : vector<4x8x8xf32>, vector<4x8x32xf32>, vector<4x8x32xf32> -> vector<4x8x32xf32>
    "tpu.trace_stop"() : () -> ()
    %cst_20 = arith.constant dense<0.000000e+00> : vector<8x32xf32>
    %37 = vector.multi_reduction <add>, %36, %cst_20 [0] : vector<4x8x32xf32> to vector<8x32xf32>
    %c0_21 = arith.constant 0 : index
    %c0_22 = arith.constant 0 : index
    %38 = vector.load %arg7[%c0_21, %c0_22] : memref<1x32xf32, #tpu.memory_space<vmem>>, vector<1x32xf32>
    %39 = vector.broadcast %38 : vector<1x32xf32> to vector<8x32xf32>
    %40 = arith.addf %37, %39 : vector<8x32xf32>
    %41 = arith.addf %7, %40 : vector<8x32xf32>
    %c0_23 = arith.constant 0 : index
    %c0_24 = arith.constant 0 : index
    %42 = vector.load %arg10[%c0_23, %c0_24] : memref<1x32xf32, #tpu.memory_space<vmem>>, vector<1x32xf32>
    %c0_25 = arith.constant 0 : index
    %c0_26 = arith.constant 0 : index
    %43 = vector.load %arg11[%c0_25, %c0_26] : memref<1x32xf32, #tpu.memory_space<vmem>>, vector<1x32xf32>
    %cst_27 = arith.constant dense<0.000000e+00> : vector<8xf32>
    %44 = vector.multi_reduction <add>, %41, %cst_27 [1] : vector<8x32xf32> to vector<8xf32>
    %45 = vector.shape_cast %44 : vector<8xf32> to vector<8x1xf32>
    %cst_28 = arith.constant 3.200000e+01 : f32
    %46 = vector.broadcast %cst_28 : f32 to vector<8x1xf32>
    %47 = arith.divf %45, %46 : vector<8x1xf32>
    %48 = arith.mulf %41, %41 : vector<8x32xf32>
    %cst_29 = arith.constant dense<0.000000e+00> : vector<8xf32>
    %49 = vector.multi_reduction <add>, %48, %cst_29 [1] : vector<8x32xf32> to vector<8xf32>
    %50 = vector.shape_cast %49 : vector<8xf32> to vector<8x1xf32>
    %cst_30 = arith.constant 3.200000e+01 : f32
    %51 = vector.broadcast %cst_30 : f32 to vector<8x1xf32>
    %52 = arith.divf %50, %51 : vector<8x1xf32>
    %53 = arith.mulf %47, %47 : vector<8x1xf32>
    %54 = arith.subf %52, %53 : vector<8x1xf32>
    %cst_31 = arith.constant 9.99999974E-6 : f32
    %55 = vector.broadcast %cst_31 : f32 to vector<8x1xf32>
    %56 = arith.addf %54, %55 : vector<8x1xf32>
    %57 = math.rsqrt %56 : vector<8x1xf32>
    %58 = vector.broadcast %47 : vector<8x1xf32> to vector<8x32xf32>
    %59 = arith.subf %41, %58 : vector<8x32xf32>
    %60 = vector.broadcast %57 : vector<8x1xf32> to vector<8x32xf32>
    %61 = arith.mulf %59, %60 : vector<8x32xf32>
    %62 = vector.broadcast %42 : vector<1x32xf32> to vector<8x32xf32>
    %63 = arith.mulf %61, %62 : vector<8x32xf32>
    %64 = vector.broadcast %43 : vector<1x32xf32> to vector<8x32xf32>
    %65 = arith.addf %63, %64 : vector<8x32xf32>
    %c0_32 = arith.constant 0 : index
    %c0_33 = arith.constant 0 : index
    %66 = vector.load %arg12[%c0_32, %c0_33] : memref<32x128xf32, #tpu.memory_space<vmem>>, vector<32x128xf32>
    %cst_34 = arith.constant dense<0.000000e+00> : vector<8x128xf32>
    %67 = tpu.matmul %65, %66, %cst_34 {dimension_numbers = #tpu.dot_dimension_numbers<[1], [0], [0], [1], [0, 0, 1, 1], [], []>} : vector<8x32xf32>, vector<32x128xf32>, vector<8x128xf32> -> vector<8x128xf32>
    %c0_35 = arith.constant 0 : index
    %c0_36 = arith.constant 0 : index
    %68 = vector.load %arg13[%c0_35, %c0_36] : memref<1x128xf32, #tpu.memory_space<vmem>>, vector<1x128xf32>
    %69 = vector.broadcast %68 : vector<1x128xf32> to vector<8x128xf32>
    %70 = arith.addf %67, %69 : vector<8x128xf32>
    %cst_37 = arith.constant 5.000000e-01 : f32
    %71 = vector.broadcast %cst_37 : f32 to vector<8x128xf32>
    %72 = arith.mulf %71, %70 : vector<8x128xf32>
    %cst_38 = arith.constant 0.707106769 : f32
    %73 = vector.broadcast %cst_38 : f32 to vector<8x128xf32>
    %74 = arith.mulf %70, %73 : vector<8x128xf32>
    %75 = math.absf %74 : vector<8x128xf32>
    %cst_39 = arith.constant 0.327591091 : f32
    %76 = vector.broadcast %cst_39 : f32 to vector<8x128xf32>
    %77 = arith.mulf %76, %75 : vector<8x128xf32>
    %cst_40 = arith.constant 1.000000e+00 : f32
    %78 = vector.broadcast %cst_40 : f32 to vector<8x128xf32>
    %79 = arith.addf %78, %77 : vector<8x128xf32>
    %80 = tpu.reciprocal %79 {approx = true} : vector<8x128xf32> -> vector<8x128xf32>
    %cst_41 = arith.constant 1.06140542 : f32
    %81 = vector.broadcast %cst_41 : f32 to vector<8x128xf32>
    %82 = arith.mulf %81, %80 : vector<8x128xf32>
    %cst_42 = arith.constant -1.45315206 : f32
    %83 = vector.broadcast %cst_42 : f32 to vector<8x128xf32>
    %84 = arith.addf %82, %83 : vector<8x128xf32>
    %85 = arith.mulf %84, %80 : vector<8x128xf32>
    %cst_43 = arith.constant 1.42141378 : f32
    %86 = vector.broadcast %cst_43 : f32 to vector<8x128xf32>
    %87 = arith.addf %85, %86 : vector<8x128xf32>
    %88 = arith.mulf %87, %80 : vector<8x128xf32>
    %cst_44 = arith.constant -0.284496725 : f32
    %89 = vector.broadcast %cst_44 : f32 to vector<8x128xf32>
    %90 = arith.addf %88, %89 : vector<8x128xf32>
    %91 = arith.mulf %90, %80 : vector<8x128xf32>
    %cst_45 = arith.constant 0.254829586 : f32
    %92 = vector.broadcast %cst_45 : f32 to vector<8x128xf32>
    %93 = arith.addf %91, %92 : vector<8x128xf32>
    %94 = arith.mulf %93, %80 : vector<8x128xf32>
    %cst_46 = arith.constant 0.000000e+00 : f32
    %95 = vector.broadcast %cst_46 : f32 to vector<8x128xf32>
    %96 = arith.subf %95, %75 : vector<8x128xf32>
    %97 = arith.mulf %96, %75 : vector<8x128xf32>
    %98 = math.exp %97 : vector<8x128xf32>
    %99 = arith.mulf %94, %98 : vector<8x128xf32>
    %cst_47 = arith.constant 1.000000e+00 : f32
    %100 = vector.broadcast %cst_47 : f32 to vector<8x128xf32>
    %101 = arith.subf %100, %99 : vector<8x128xf32>
    %cst_48 = arith.constant 0.000000e+00 : f32
    %102 = vector.broadcast %cst_48 : f32 to vector<8x128xf32>
    %103 = arith.cmpf oge, %74, %102 : vector<8x128xf32>
    %cst_49 = arith.constant 0.000000e+00 : f32
    %104 = vector.broadcast %cst_49 : f32 to vector<8x128xf32>
    %105 = arith.subf %104, %101 : vector<8x128xf32>
    %106 = arith.select %103, %101, %105 : vector<8x128xi1>, vector<8x128xf32>
    %cst_50 = arith.constant 1.000000e+00 : f32
    %107 = vector.broadcast %cst_50 : f32 to vector<8x128xf32>
    %108 = arith.addf %107, %106 : vector<8x128xf32>
    %109 = arith.mulf %72, %108 : vector<8x128xf32>
    %c0_51 = arith.constant 0 : index
    %c0_52 = arith.constant 0 : index
    %110 = vector.load %arg14[%c0_51, %c0_52] : memref<128x32xf32, #tpu.memory_space<vmem>>, vector<128x32xf32>
    %cst_53 = arith.constant dense<0.000000e+00> : vector<8x32xf32>
    %111 = tpu.matmul %109, %110, %cst_53 {dimension_numbers = #tpu.dot_dimension_numbers<[1], [0], [0], [1], [0, 0, 1, 1], [], []>} : vector<8x128xf32>, vector<128x32xf32>, vector<8x32xf32> -> vector<8x32xf32>
    %c0_54 = arith.constant 0 : index
    %c0_55 = arith.constant 0 : index
    %112 = vector.load %arg15[%c0_54, %c0_55] : memref<1x32xf32, #tpu.memory_space<vmem>>, vector<1x32xf32>
    %113 = vector.broadcast %112 : vector<1x32xf32> to vector<8x32xf32>
    %114 = arith.addf %111, %113 : vector<8x32xf32>
    %115 = arith.addf %41, %114 : vector<8x32xf32>
    %c0_56 = arith.constant 0 : index
    %c0_57 = arith.constant 0 : index
    %c0_58 = arith.constant 0 : index
    %116 = vector.load %arg16[%c0_56, %c0_57, %c0_58] : memref<1x8x32xf32, #tpu.memory_space<vmem>>, vector<1x8x32xf32>
    %117 = vector.shape_cast %116 : vector<1x8x32xf32> to vector<8x32xf32>
    %118 = vector.shape_cast %115 : vector<8x32xf32> to vector<1x8x32xf32>
    tpu.vector_store %arg16[%c0_56, %c0_57, %c0_58], %118 {strides = array<i32>} : memref<1x8x32xf32, #tpu.memory_space<vmem>>, vector<1x8x32xf32>,
    return
  }
  func.func @transform_0(%arg0: i32, %arg1: i32) -> (i32, i32, i32) {
    %c0_i32 = arith.constant 0 : i32
    %c0_i32_0 = arith.constant 0 : i32
    %c0_i32_1 = arith.constant 0 : i32
    return %arg0, %c0_i32, %c0_i32_0 : i32, i32, i32
  }
  func.func @transform_1(%arg0: i32, %arg1: i32) -> (i32, i32) {
    %c0_i32 = arith.constant 0 : i32
    %c0_i32_0 = arith.constant 0 : i32
    %c0_i32_1 = arith.constant 0 : i32
    return %c0_i32, %c0_i32_0 : i32, i32
  }
  func.func @transform_2(%arg0: i32, %arg1: i32) -> (i32, i32) {
    %c0_i32 = arith.constant 0 : i32
    %c0_i32_0 = arith.constant 0 : i32
    %c0_i32_1 = arith.constant 0 : i32
    return %c0_i32, %c0_i32_0 : i32, i32
  }
  func.func @transform_3(%arg0: i32, %arg1: i32) -> (i32, i32) {
    %c0_i32 = arith.constant 0 : i32
    %c0_i32_0 = arith.constant 0 : i32
    %c0_i32_1 = arith.constant 0 : i32
    return %c0_i32, %c0_i32_0 : i32, i32
  }
  func.func @transform_4(%arg0: i32, %arg1: i32) -> (i32, i32, i32) {
    %c0_i32 = arith.constant 0 : i32
    %c0_i32_0 = arith.constant 0 : i32
    %c0_i32_1 = arith.constant 0 : i32
    %c0_i32_2 = arith.constant 0 : i32
    return %c0_i32, %c0_i32_0, %c0_i32_1 : i32, i32, i32
  }
  func.func @transform_5(%arg0: i32, %arg1: i32) -> (i32, i32) {
    %c0_i32 = arith.constant 0 : i32
    %c0_i32_0 = arith.constant 0 : i32
    %c0_i32_1 = arith.constant 0 : i32
    return %c0_i32, %c0_i32_0 : i32, i32
  }
  func.func @transform_6(%arg0: i32, %arg1: i32) -> (i32, i32) {
    %c0_i32 = arith.constant 0 : i32
    %c0_i32_0 = arith.constant 0 : i32
    %c0_i32_1 = arith.constant 0 : i32
    return %c0_i32, %c0_i32_0 : i32, i32
  }
  func.func @transform_7(%arg0: i32, %arg1: i32) -> (i32, i32) {
    %c0_i32 = arith.constant 0 : i32
    %c0_i32_0 = arith.constant 0 : i32
    %c0_i32_1 = arith.constant 0 : i32
    return %c0_i32, %c0_i32_0 : i32, i32
  }
  func.func @transform_8(%arg0: i32, %arg1: i32) -> (i32, i32) {
    %c0_i32 = arith.constant 0 : i32
    %c0_i32_0 = arith.constant 0 : i32
    %c0_i32_1 = arith.constant 0 : i32
    return %c0_i32, %c0_i32_0 : i32, i32
  }
  func.func @transform_9(%arg0: i32, %arg1: i32) -> (i32, i32) {
    %c0_i32 = arith.constant 0 : i32
    %c0_i32_0 = arith.constant 0 : i32
    %c0_i32_1 = arith.constant 0 : i32
    return %c0_i32, %c0_i32_0 : i32, i32
  }
  func.func @transform_10(%arg0: i32, %arg1: i32) -> (i32, i32) {
    %c0_i32 = arith.constant 0 : i32
    %c0_i32_0 = arith.constant 0 : i32
    %c0_i32_1 = arith.constant 0 : i32
    return %c0_i32, %c0_i32_0 : i32, i32
  }
  func.func @transform_11(%arg0: i32, %arg1: i32) -> (i32, i32) {
    %c0_i32 = arith.constant 0 : i32
    %c0_i32_0 = arith.constant 0 : i32
    %c0_i32_1 = arith.constant 0 : i32
    return %c0_i32, %c0_i32_0 : i32, i32
  }
  func.func @transform_12(%arg0: i32, %arg1: i32) -> (i32, i32) {
    %c0_i32 = arith.constant 0 : i32
    %c0_i32_0 = arith.constant 0 : i32
    %c0_i32_1 = arith.constant 0 : i32
    return %c0_i32, %c0_i32_0 : i32, i32
  }
  func.func @transform_13(%arg0: i32, %arg1: i32) -> (i32, i32) {
    %c0_i32 = arith.constant 0 : i32
    %c0_i32_0 = arith.constant 0 : i32
    %c0_i32_1 = arith.constant 0 : i32
    return %c0_i32, %c0_i32_0 : i32, i32
  }
  func.func @transform_14(%arg0: i32, %arg1: i32) -> (i32, i32, i32) {
    %c0_i32 = arith.constant 0 : i32
    %c0_i32_0 = arith.constant 0 : i32
    return %arg0, %arg1, %c0_i32 : i32, i32, i32
  }
}

</mosaic_0001>

<llo_original>
// kernel: tpu_custom_call.1
$region0: #{tpu_custom_call.1}
  #allocation0 [shape = 'u32[]', space=smem, size = 0x4, offset = 0x4, fixed_abs, tag = 'smem constant byte address 0x4 - core index']
  #allocation1 [shape = 'u32[144,128]{1,0:T(1,128)}', space=vmem, size = 0x12000, scoped, tag = 'internal scratch']
  #allocation2 [shape = 'f32[4,8,8]{2,1,0:T(8,128)}', space=vmem, size = 0x4000, scoped, tag = 'scratch operand']
  #allocation3 [shape = 'f32[4,8,8]{2,1,0:T(8,128)}', space=vmem, size = 0x4000, scoped, tag = 'scratch operand']
  #allocation4 [shape = 'f32[4,8,8]{2,1,0:T(8,128)}', space=vmem, size = 0x4000, scoped, tag = 'scratch operand']
  %s0 = inlined_call_operand.hbm [shape: f32[2,8,32], index: 0, kind: input, shape index: {}]
  %s1 = inlined_call_operand.vmem [shape: f32[32,32], index: 1, kind: input, shape index: {}]
  %s2 = inlined_call_operand.vmem [shape: f32[32,32], index: 2, kind: input, shape index: {}]
  %s3 = inlined_call_operand.vmem [shape: f32[32,32], index: 3, kind: input, shape index: {}]
  %s4 = inlined_call_operand.vmem [shape: f32[4,8,32], index: 4, kind: input, shape index: {}]
  %s5 = inlined_call_operand.vmem [shape: f32[1,32], index: 5, kind: input, shape index: {}]
  %s6 = inlined_call_operand.vmem [shape: f32[1,32], index: 6, kind: input, shape index: {}]
  %s7 = inlined_call_operand.vmem [shape: f32[1,32], index: 7, kind: input, shape index: {}]
  %s8 = inlined_call_operand.vmem [shape: f32[1,32], index: 8, kind: input, shape index: {}]
  %s9 = inlined_call_operand.vmem [shape: f32[1,32], index: 9, kind: input, shape index: {}]
  %s10 = inlined_call_operand.vmem [shape: f32[32,128], index: 10, kind: input, shape index: {}]
  %s11 = inlined_call_operand.vmem [shape: f32[1,128], index: 11, kind: input, shape index: {}]
  %s12 = inlined_call_operand.vmem [shape: f32[128,32], index: 12, kind: input, shape index: {}]
  %s13 = inlined_call_operand.vmem [shape: f32[1,32], index: 13, kind: input, shape index: {}]
  %s14 = inlined_call_operand.hbm [shape: f32[2,8,32], index: 14, kind: output, shape index: {}]
  %s15 = sld [smem:[#allocation0]]
  $region97: #{tpu_custom_call.1} parent=0
    _
  %s17 = ssub.s32 1, %s15
  %s18 = scalar_select 0, %s17, %s15
  $region1: #{tpu_custom_call.1} parent=0
    #allocation5 [shape = 'u8[4096]{0}', space=vmem, size = 0x1000, scoped, tag = 'input window, operand 0, single buffered']
    #allocation6 [shape = 's32[2]{0}', space=sflag, size = 0x8, scoped, tag = 'scoped memory for tpu_custom_call.1']
    #allocation7 [shape = 's32[2]{0}', space=sflag, size = 0x8, scoped, tag = 'scoped memory for tpu_custom_call.1']
    #allocation8 [shape = 'u8[8192]{0}', space=vmem, size = 0x2000, scoped, tag = 'output window, operand 0']
    %19 = vsyncpa [#allocation6], 0
    %20 = vsyncpa [#allocation7], 0
    %s21 = scalar_lea.sflag [#allocation7], 1
    %22 = vsyncpa %s21, 0
    loop: start=0, step=1, limit=4
    $region2: #{tpu_custom_call.1} parent=1 // loop_pre_header
      _
    $region3: #{tpu_custom_call.1} parent=1 // loop_header
      %s24 = sphi 0, %s28
      %p25 = scmp.ge.s32.totalorder %s24, 4
      %s31 = sphi 0, %s43
      %s32 = sphi 0, %s39
      %s33 = sphi 0, %s31
      %s34 = sphi 0, %s32
      %s35 = sphi 0, %s33
      %s36 = sphi 0, %s34
      %s46 = sphi 0, %s48
      %s49 = sphi 0, %s46
      %s50 = sphi 0, %s49
      %s66 = sphi 0, %s50
      %s70 = sphi 0, %s70
      %s72 = sphi 0, %s70
      %s73 = sphi 0, %s72
      %s87 = sphi 0, %s73
      %s91 = sphi 0, %s91
      %s93 = sphi 0, %s91
      %s94 = sphi 0, %s93
      %s108 = sphi 0, %s94
      %s112 = sphi 0, %s112
      %s114 = sphi 0, %s112
      %s115 = sphi 0, %s114
      %s129 = sphi 0, %s115
      %s133 = sphi 0, %s133
      %s135 = sphi 0, %s133
      %s136 = sphi 0, %s135
      %s150 = sphi 0, %s136
      %s154 = sphi 0, %s154
      %s156 = sphi 0, %s154
      %s157 = sphi 0, %s156
      %s171 = sphi 0, %s157
      %s175 = sphi 0, %s175
      %s177 = sphi 0, %s175
      %s178 = sphi 0, %s177
      %s192 = sphi 0, %s178
      %s196 = sphi 0, %s196
      %s198 = sphi 0, %s196
      %s199 = sphi 0, %s198
      %s213 = sphi 0, %s199
      %s217 = sphi 0, %s217
      %s219 = sphi 0, %s217
      %s220 = sphi 0, %s219
      %s234 = sphi 0, %s220
      %s238 = sphi 0, %s238
      %s240 = sphi 0, %s238
      %s241 = sphi 0, %s240
      %s255 = sphi 0, %s241
      %s259 = sphi 0, %s259
      %s261 = sphi 0, %s259
      %s262 = sphi 0, %s261
      %s276 = sphi 0, %s262
      %s280 = sphi 0, %s280
      %s282 = sphi 0, %s280
      %s283 = sphi 0, %s282
      %s297 = sphi 0, %s283
      %s301 = sphi 0, %s301
      %s303 = sphi 0, %s301
      %s304 = sphi 0, %s303
      %s318 = sphi 0, %s304
      %s322 = sphi 0, %s322
      %s324 = sphi 0, %s322
      %s325 = sphi 0, %s324
      %s339 = sphi 0, %s325
      %s347 = sphi 0, %s349
      %s350 = sphi 0, %s347
      %s351 = sphi 0, %s350
      %s367 = sphi 0, %s351
    $region4: #{tpu_custom_call.1} parent=1 // loop_header_branch
      %27 = sbr.rel (%p25) target = $region8
    $region5: #{tpu_custom_call.1} parent=1 // loop_body
      %s29 = ssub.s32 %s24, 1
      %s30 = ssub.s32 %s24, 2
      %s37 = sadd.s32 1, %s32
      %p38 = scmp.ge.s32.totalorder %s37, 1
      %s39 = scalar_select %p38, 0, %s37
      %s40 = sadd.s32 1, %s31
      %s41 = scalar_select %p38, %s40, %s31
      %p42 = scmp.ge.s32.totalorder %s41, 2
      %s43 = scalar_select %p42, 0, %s41
      %s44 = ssub.s32 %s31, %s43
      %p45 = scmp.eq.s32.totalorder %s44, 0
      %s47 = sadd.s32 %s46, 1
      %s48 = scalar_select %p45, %s46, %s47
      %p51 = pneg %p45
      %p52 = scmp.eq.s32.totalorder %s24, 1
      %p53 = por %p51, %p52
      %p54 = scmp.ne.s32.totalorder %s46, %s49
      %p55 = scmp.eq.s32.totalorder %s24, 0
      %p56 = por %p54, %p55
      %p57 = scmp.ne.s32.totalorder %s46, %s49
      %p58 = scmp.eq.s32.totalorder %s29, 1
      %p59 = por %p57, %p58
      %p60 = scmp.ne.s32.totalorder %s49, %s50
      %p61 = scmp.eq.s32.totalorder %s29, 0
      %p62 = por %p60, %p61
      %p63 = scmp.ne.s32.totalorder %s49, %s50
      %p64 = scmp.eq.s32.totalorder %s30, 1
      %p65 = por %p63, %p64
      %p67 = scmp.ne.s32.totalorder %s50, %s66
      %p68 = scmp.eq.s32.totalorder %s30, 0
      %p69 = por %p67, %p68
      %s71 = sadd.s32 %s70, 1
      %p74 = scmp.eq.s32.totalorder %s24, 1
      %p75 = scmp.ne.s32.totalorder %s70, %s72
      %p76 = scmp.eq.s32.totalorder %s24, 0
      %p77 = por %p75, %p76
      %p78 = scmp.ne.s32.totalorder %s70, %s72
      %p79 = scmp.eq.s32.totalorder %s29, 1
      %p80 = por %p78, %p79
      %p81 = scmp.ne.s32.totalorder %s72, %s73
      %p82 = scmp.eq.s32.totalorder %s29, 0
      %p83 = por %p81, %p82
      %p84 = scmp.ne.s32.totalorder %s72, %s73
      %p85 = scmp.eq.s32.totalorder %s30, 1
      %p86 = por %p84, %p85
      %p88 = scmp.ne.s32.totalorder %s73, %s87
      %p89 = scmp.eq.s32.totalorder %s30, 0
      %p90 = por %p88, %p89
      %s92 = sadd.s32 %s91, 1
      %p95 = scmp.eq.s32.totalorder %s24, 1
      %p96 = scmp.ne.s32.totalorder %s91, %s93
      %p97 = scmp.eq.s32.totalorder %s24, 0
      %p98 = por %p96, %p97
      %p99 = scmp.ne.s32.totalorder %s91, %s93
      %p100 = scmp.eq.s32.totalorder %s29, 1
      %p101 = por %p99, %p100
      %p102 = scmp.ne.s32.totalorder %s93, %s94
      %p103 = scmp.eq.s32.totalorder %s29, 0
      %p104 = por %p102, %p103
      %p105 = scmp.ne.s32.totalorder %s93, %s94
      %p106 = scmp.eq.s32.totalorder %s30, 1
      %p107 = por %p105, %p106
      %p109 = scmp.ne.s32.totalorder %s94, %s108
      %p110 = scmp.eq.s32.totalorder %s30, 0
      %p111 = por %p109, %p110
      %s113 = sadd.s32 %s112, 1
      %p116 = scmp.eq.s32.totalorder %s24, 1
      %p117 = scmp.ne.s32.totalorder %s112, %s114
      %p118 = scmp.eq.s32.totalorder %s24, 0
      %p119 = por %p117, %p118
      %p120 = scmp.ne.s32.totalorder %s112, %s114
      %p121 = scmp.eq.s32.totalorder %s29, 1
      %p122 = por %p120, %p121
      %p123 = scmp.ne.s32.totalorder %s114, %s115
      %p124 = scmp.eq.s32.totalorder %s29, 0
      %p125 = por %p123, %p124
      %p126 = scmp.ne.s32.totalorder %s114, %s115
      %p127 = scmp.eq.s32.totalorder %s30, 1
      %p128 = por %p126, %p127
      %p130 = scmp.ne.s32.totalorder %s115, %s129
      %p131 = scmp.eq.s32.totalorder %s30, 0
      %p132 = por %p130, %p131
      %s134 = sadd.s32 %s133, 1
      %p137 = scmp.eq.s32.totalorder %s24, 1
      %p138 = scmp.ne.s32.totalorder %s133, %s135
      %p139 = scmp.eq.s32.totalorder %s24, 0
      %p140 = por %p138, %p139
      %p141 = scmp.ne.s32.totalorder %s133, %s135
      %p142 = scmp.eq.s32.totalorder %s29, 1
      %p143 = por %p141, %p142
      %p144 = scmp.ne.s32.totalorder %s135, %s136
      %p145 = scmp.eq.s32.totalorder %s29, 0
      %p146 = por %p144, %p145
      %p147 = scmp.ne.s32.totalorder %s135, %s136
      %p148 = scmp.eq.s32.totalorder %s30, 1
      %p149 = por %p147, %p148
      %p151 = scmp.ne.s32.totalorder %s136, %s150
      %p152 = scmp.eq.s32.totalorder %s30, 0
      %p153 = por %p151, %p152
      %s155 = sadd.s32 %s154, 1
      %p158 = scmp.eq.s32.totalorder %s24, 1
      %p159 = scmp.ne.s32.totalorder %s154, %s156
      %p160 = scmp.eq.s32.totalorder %s24, 0
      %p161 = por %p159, %p160
      %p162 = scmp.ne.s32.totalorder %s154, %s156
      %p163 = scmp.eq.s32.totalorder %s29, 1
      %p164 = por %p162, %p163
      %p165 = scmp.ne.s32.totalorder %s156, %s157
      %p166 = scmp.eq.s32.totalorder %s29, 0
      %p167 = por %p165, %p166
      %p168 = scmp.ne.s32.totalorder %s156, %s157
      %p169 = scmp.eq.s32.totalorder %s30, 1
      %p170 = por %p168, %p169
      %p172 = scmp.ne.s32.totalorder %s157, %s171
      %p173 = scmp.eq.s32.totalorder %s30, 0
      %p174 = por %p172, %p173
      %s176 = sadd.s32 %s175, 1
      %p179 = scmp.eq.s32.totalorder %s24, 1
      %p180 = scmp.ne.s32.totalorder %s175, %s177
      %p181 = scmp.eq.s32.totalorder %s24, 0
      %p182 = por %p180, %p181
      %p183 = scmp.ne.s32.totalorder %s175, %s177
      %p184 = scmp.eq.s32.totalorder %s29, 1
      %p185 = por %p183, %p184
      %p186 = scmp.ne.s32.totalorder %s177, %s178
      %p187 = scmp.eq.s32.totalorder %s29, 0
      %p188 = por %p186, %p187
      %p189 = scmp.ne.s32.totalorder %s177, %s178
      %p190 = scmp.eq.s32.totalorder %s30, 1
      %p191 = por %p189, %p190
      %p193 = scmp.ne.s32.totalorder %s178, %s192
      %p194 = scmp.eq.s32.totalorder %s30, 0
      %p195 = por %p193, %p194
      %s197 = sadd.s32 %s196, 1
      %p200 = scmp.eq.s32.totalorder %s24, 1
      %p201 = scmp.ne.s32.totalorder %s196, %s198
      %p202 = scmp.eq.s32.totalorder %s24, 0
      %p203 = por %p201, %p202
      %p204 = scmp.ne.s32.totalorder %s196, %s198
      %p205 = scmp.eq.s32.totalorder %s29, 1
      %p206 = por %p204, %p205
      %p207 = scmp.ne.s32.totalorder %s198, %s199
      %p208 = scmp.eq.s32.totalorder %s29, 0
      %p209 = por %p207, %p208
      %p210 = scmp.ne.s32.totalorder %s198, %s199
      %p211 = scmp.eq.s32.totalorder %s30, 1
      %p212 = por %p210, %p211
      %p214 = scmp.ne.s32.totalorder %s199, %s213
      %p215 = scmp.eq.s32.totalorder %s30, 0
      %p216 = por %p214, %p215
      %s218 = sadd.s32 %s217, 1
      %p221 = scmp.eq.s32.totalorder %s24, 1
      %p222 = scmp.ne.s32.totalorder %s217, %s219
      %p223 = scmp.eq.s32.totalorder %s24, 0
      %p224 = por %p222, %p223
      %p225 = scmp.ne.s32.totalorder %s217, %s219
      %p226 = scmp.eq.s32.totalorder %s29, 1
      %p227 = por %p225, %p226
      %p228 = scmp.ne.s32.totalorder %s219, %s220
      %p229 = scmp.eq.s32.totalorder %s29, 0
      %p230 = por %p228, %p229
      %p231 = scmp.ne.s32.totalorder %s219, %s220
      %p232 = scmp.eq.s32.totalorder %s30, 1
      %p233 = por %p231, %p232
      %p235 = scmp.ne.s32.totalorder %s220, %s234
      %p236 = scmp.eq.s32.totalorder %s30, 0
      %p237 = por %p235, %p236
      %s239 = sadd.s32 %s238, 1
      %p242 = scmp.eq.s32.totalorder %s24, 1
      %p243 = scmp.ne.s32.totalorder %s238, %s240
      %p244 = scmp.eq.s32.totalorder %s24, 0
      %p245 = por %p243, %p244
      %p246 = scmp.ne.s32.totalorder %s238, %s240
      %p247 = scmp.eq.s32.totalorder %s29, 1
      %p248 = por %p246, %p247
      %p249 = scmp.ne.s32.totalorder %s240, %s241
      %p250 = scmp.eq.s32.totalorder %s29, 0
      %p251 = por %p249, %p250
      %p252 = scmp.ne.s32.totalorder %s240, %s241
      %p253 = scmp.eq.s32.totalorder %s30, 1
      %p254 = por %p252, %p253
      %p256 = scmp.ne.s32.totalorder %s241, %s255
      %p257 = scmp.eq.s32.totalorder %s30, 0
      %p258 = por %p256, %p257
      %s260 = sadd.s32 %s259, 1
      %p263 = scmp.eq.s32.totalorder %s24, 1
      %p264 = scmp.ne.s32.totalorder %s259, %s261
      %p265 = scmp.eq.s32.totalorder %s24, 0
      %p266 = por %p264, %p265
      %p267 = scmp.ne.s32.totalorder %s259, %s261
      %p268 = scmp.eq.s32.totalorder %s29, 1
      %p269 = por %p267, %p268
      %p270 = scmp.ne.s32.totalorder %s261, %s262
      %p271 = scmp.eq.s32.totalorder %s29, 0
      %p272 = por %p270, %p271
      %p273 = scmp.ne.s32.totalorder %s261, %s262
      %p274 = scmp.eq.s32.totalorder %s30, 1
      %p275 = por %p273, %p274
      %p277 = scmp.ne.s32.totalorder %s262, %s276
      %p278 = scmp.eq.s32.totalorder %s30, 0
      %p279 = por %p277, %p278
      %s281 = sadd.s32 %s280, 1
      %p284 = scmp.eq.s32.totalorder %s24, 1
      %p285 = scmp.ne.s32.totalorder %s280, %s282
      %p286 = scmp.eq.s32.totalorder %s24, 0
      %p287 = por %p285, %p286
      %p288 = scmp.ne.s32.totalorder %s280, %s282
      %p289 = scmp.eq.s32.totalorder %s29, 1
      %p290 = por %p288, %p289
      %p291 = scmp.ne.s32.totalorder %s282, %s283
      %p292 = scmp.eq.s32.totalorder %s29, 0
      %p293 = por %p291, %p292
      %p294 = scmp.ne.s32.totalorder %s282, %s283
      %p295 = scmp.eq.s32.totalorder %s30, 1
      %p296 = por %p294, %p295
      %p298 = scmp.ne.s32.totalorder %s283, %s297
      %p299 = scmp.eq.s32.totalorder %s30, 0
      %p300 = por %p298, %p299
      %s302 = sadd.s32 %s301, 1
      %p305 = scmp.eq.s32.totalorder %s24, 1
      %p306 = scmp.ne.s32.totalorder %s301, %s303
      %p307 = scmp.eq.s32.totalorder %s24, 0
      %p308 = por %p306, %p307
      %p309 = scmp.ne.s32.totalorder %s301, %s303
      %p310 = scmp.eq.s32.totalorder %s29, 1
      %p311 = por %p309, %p310
      %p312 = scmp.ne.s32.totalorder %s303, %s304
      %p313 = scmp.eq.s32.totalorder %s29, 0
      %p314 = por %p312, %p313
      %p315 = scmp.ne.s32.totalorder %s303, %s304
      %p316 = scmp.eq.s32.totalorder %s30, 1
      %p317 = por %p315, %p316
      %p319 = scmp.ne.s32.totalorder %s304, %s318
      %p320 = scmp.eq.s32.totalorder %s30, 0
      %p321 = por %p319, %p320
      %s323 = sadd.s32 %s322, 1
      %p326 = scmp.eq.s32.totalorder %s24, 1
      %p327 = scmp.ne.s32.totalorder %s322, %s324
      %p328 = scmp.eq.s32.totalorder %s24, 0
      %p329 = por %p327, %p328
      %p330 = scmp.ne.s32.totalorder %s322, %s324
      %p331 = scmp.eq.s32.totalorder %s29, 1
      %p332 = por %p330, %p331
      %p333 = scmp.ne.s32.totalorder %s324, %s325
      %p334 = scmp.eq.s32.totalorder %s29, 0
      %p335 = por %p333, %p334
      %p336 = scmp.ne.s32.totalorder %s324, %s325
      %p337 = scmp.eq.s32.totalorder %s30, 1
      %p338 = por %p336, %p337
      %p340 = scmp.ne.s32.totalorder %s325, %s339
      %p341 = scmp.eq.s32.totalorder %s30, 0
      %p342 = por %p340, %p341
      %s343 = ssub.s32 %s31, %s43
      %s344 = ssub.s32 %s32, %s39
      %s345 = sor.u32 %s343, %s344
      %p346 = scmp.eq.s32.totalorder %s345, 0
      %s348 = sadd.s32 %s347, 1
      %s349 = scalar_select %p346, %s347, %s348
      %p352 = pneg %p346
      %p353 = scmp.eq.s32.totalorder %s24, 1
      %p354 = por %p352, %p353
      %p355 = scmp.ne.s32.totalorder %s347, %s350
      %p356 = scmp.eq.s32.totalorder %s24, 0
      %p357 = por %p355, %p356
      %p358 = scmp.ne.s32.totalorder %s347, %s350
      %p359 = scmp.eq.s32.totalorder %s29, 1
      %p360 = por %p358, %p359
      %p361 = scmp.ne.s32.totalorder %s350, %s351
      %p362 = scmp.eq.s32.totalorder %s29, 0
      %p363 = por %p361, %p362
      %p364 = scmp.ne.s32.totalorder %s350, %s351
      %p365 = scmp.eq.s32.totalorder %s30, 1
      %p366 = por %p364, %p365
      %p368 = scmp.ne.s32.totalorder %s351, %s367
      %p369 = scmp.eq.s32.totalorder %s30, 0
      %p370 = por %p368, %p369
      %p371 = scmp.le.s32.totalorder 1, %s24
      %p372 = scmp.lt.s32.totalorder %s24, 3
      %p373 = pnand %p371, %p372
      %p374 = pneg %p373
      // Predicated region
      $region9: #{tpu_custom_call.1} parent=5 // pred_check
        _
      $region10: #{tpu_custom_call.1} parent=5 // pred_check_branch
        %376 = sbr.rel (%p373) target = $region12
      $region11: #{tpu_custom_call.1} parent=5 // pred_region
        %s377 = ssub.s32 %s24, 1
        // Predicated region
        $region13: #{tpu_custom_call.1} parent=11 // pred_check
          %p378 = pneg %p62
        $region14: #{tpu_custom_call.1} parent=11 // pred_check_branch
          %380 = sbr.rel (%p378) target = $region16
        $region15: #{tpu_custom_call.1} parent=11 // pred_region
          %s382 = ssub.s32 128, 128
          %383 = vsyncadd [#allocation6], %s382
          %s384 = smul.addr %s33, 128
          %s385 = scalar_lea.hbm %s0, %s384
          %s387 = sshll.u32 [#allocation5], 4
          %s388 = int_to_ptr.vmem [resolvable:$true] %s387
          %390 = dma.hbm_to_vmem [thread:$0]  %s385, 128, %s388, [#allocation6]
        $region16: #{tpu_custom_call.1} parent=11 // pred_fallthru
          _
        // Predicated region
        $region17: #{tpu_custom_call.1} parent=11 // pred_check
          %p391 = pneg %p83
        $region18: #{tpu_custom_call.1} parent=11 // pred_check_branch
          %393 = sbr.rel (%p391) target = $region20
        $region19: #{tpu_custom_call.1} parent=11 // pred_region
          _
        $region20: #{tpu_custom_call.1} parent=11 // pred_fallthru
          _
        // Predicated region
        $region21: #{tpu_custom_call.1} parent=11 // pred_check
          %p394 = pneg %p104
        $region22: #{tpu_custom_call.1} parent=11 // pred_check_branch
          %396 = sbr.rel (%p394) target = $region24
        $region23: #{tpu_custom_call.1} parent=11 // pred_region
          _
        $region24: #{tpu_custom_call.1} parent=11 // pred_fallthru
          _
        // Predicated region
        $region25: #{tpu_custom_call.1} parent=11 // pred_check
          %p397 = pneg %p125
        $region26: #{tpu_custom_call.1} parent=11 // pred_check_branch
          %399 = sbr.rel (%p397) target = $region28
        $region27: #{tpu_custom_call.1} parent=11 // pred_region
          _
        $region28: #{tpu_custom_call.1} parent=11 // pred_fallthru
          _
        // Predicated region
        $region29: #{tpu_custom_call.1} parent=11 // pred_check
          %p400 = pneg %p146
        $region30: #{tpu_custom_call.1} parent=11 // pred_check_branch
          %402 = sbr.rel (%p400) target = $region32
        $region31: #{tpu_custom_call.1} parent=11 // pred_region
          _
        $region32: #{tpu_custom_call.1} parent=11 // pred_fallthru
          _
        // Predicated region
        $region33: #{tpu_custom_call.1} parent=11 // pred_check
          %p403 = pneg %p167
        $region34: #{tpu_custom_call.1} parent=11 // pred_check_branch
          %405 = sbr.rel (%p403) target = $region36
        $region35: #{tpu_custom_call.1} parent=11 // pred_region
          _
        $region36: #{tpu_custom_call.1} parent=11 // pred_fallthru
          _
        // Predicated region
        $region37: #{tpu_custom_call.1} parent=11 // pred_check
          %p406 = pneg %p188
        $region38: #{tpu_custom_call.1} parent=11 // pred_check_branch
          %408 = sbr.rel (%p406) target = $region40
        $region39: #{tpu_custom_call.1} parent=11 // pred_region
          _
        $region40: #{tpu_custom_call.1} parent=11 // pred_fallthru
          _
        // Predicated region
        $region41: #{tpu_custom_call.1} parent=11 // pred_check
          %p409 = pneg %p209
        $region42: #{tpu_custom_call.1} parent=11 // pred_check_branch
          %411 = sbr.rel (%p409) target = $region44
        $region43: #{tpu_custom_call.1} parent=11 // pred_region
          _
        $region44: #{tpu_custom_call.1} parent=11 // pred_fallthru
          _
        // Predicated region
        $region45: #{tpu_custom_call.1} parent=11 // pred_check
          %p412 = pneg %p230
        $region46: #{tpu_custom_call.1} parent=11 // pred_check_branch
          %414 = sbr.rel (%p412) target = $region48
        $region47: #{tpu_custom_call.1} parent=11 // pred_region
          _
        $region48: #{tpu_custom_call.1} parent=11 // pred_fallthru
          _
        // Predicated region
        $region49: #{tpu_custom_call.1} parent=11 // pred_check
          %p415 = pneg %p251
        $region50: #{tpu_custom_call.1} parent=11 // pred_check_branch
          %417 = sbr.rel (%p415) target = $region52
        $region51: #{tpu_custom_call.1} parent=11 // pred_region
          _
        $region52: #{tpu_custom_call.1} parent=11 // pred_fallthru
          _
        // Predicated region
        $region53: #{tpu_custom_call.1} parent=11 // pred_check
          %p418 = pneg %p272
        $region54: #{tpu_custom_call.1} parent=11 // pred_check_branch
          %420 = sbr.rel (%p418) target = $region56
        $region55: #{tpu_custom_call.1} parent=11 // pred_region
          _
        $region56: #{tpu_custom_call.1} parent=11 // pred_fallthru
          _
        // Predicated region
        $region57: #{tpu_custom_call.1} parent=11 // pred_check
          %p421 = pneg %p293
        $region58: #{tpu_custom_call.1} parent=11 // pred_check_branch
          %423 = sbr.rel (%p421) target = $region60
        $region59: #{tpu_custom_call.1} parent=11 // pred_region
          _
        $region60: #{tpu_custom_call.1} parent=11 // pred_fallthru
          _
        // Predicated region
        $region61: #{tpu_custom_call.1} parent=11 // pred_check
          %p424 = pneg %p314
        $region62: #{tpu_custom_call.1} parent=11 // pred_check_branch
          %426 = sbr.rel (%p424) target = $region64
        $region63: #{tpu_custom_call.1} parent=11 // pred_region
          _
        $region64: #{tpu_custom_call.1} parent=11 // pred_fallthru
          _
        // Predicated region
        $region65: #{tpu_custom_call.1} parent=11 // pred_check
          %p427 = pneg %p335
        $region66: #{tpu_custom_call.1} parent=11 // pred_check_branch
          %429 = sbr.rel (%p427) target = $region68
        $region67: #{tpu_custom_call.1} parent=11 // pred_region
          _
        $region68: #{tpu_custom_call.1} parent=11 // pred_fallthru
          _
      $region12: #{tpu_custom_call.1} parent=5 // pred_fallthru
        _
      %p430 = scmp.lt.s32.totalorder %s24, 2
      // Predicated region
      $region69: #{tpu_custom_call.1} parent=5 // pred_check
        %p431 = pneg %p430
      $region70: #{tpu_custom_call.1} parent=5 // pred_check_branch
        %433 = sbr.rel (%p431) target = $region72
      $region71: #{tpu_custom_call.1} parent=5 // pred_region
        _
      $region72: #{tpu_custom_call.1} parent=5 // pred_fallthru
        _
      %p434 = scmp.le.s32.totalorder 1, %s24
      %p435 = scmp.lt.s32.totalorder %s24, 3
      %p436 = pnand %p434, %p435
      %p437 = pneg %p436
      // Predicated region
      $region73: #{tpu_custom_call.1} parent=5 // pred_check
        _
      $region74: #{tpu_custom_call.1} parent=5 // pred_check_branch
        %439 = sbr.rel (%p436) target = $region76
      $region75: #{tpu_custom_call.1} parent=5 // pred_region
        %s440 = ssub.s32 %s24, 1
        // Predicated region
        $region77: #{tpu_custom_call.1} parent=75 // pred_check
          %p441 = pneg %p62
        $region78: #{tpu_custom_call.1} parent=75 // pred_check_branch
          %443 = sbr.rel (%p441) target = $region80
        $region79: #{tpu_custom_call.1} parent=75 // pred_region
          %444 = dma.done [#allocation6], 128
        $region80: #{tpu_custom_call.1} parent=75 // pred_fallthru
          _
        %p445 = pneg %p62
        %p446 = pneg %p59
        %p447 = pneg %p83
        %p448 = pneg %p80
        %p449 = pneg %p104
        %p450 = pneg %p101
        %p451 = pneg %p125
        %p452 = pneg %p122
        %p453 = pneg %p146
        %p454 = pneg %p143
        %p455 = pneg %p167
        %p456 = pneg %p164
        %p457 = pneg %p188
        %p458 = pneg %p185
        %p459 = pneg %p209
        %p460 = pneg %p206
        %p461 = pneg %p230
        %p462 = pneg %p227
        %p463 = pneg %p251
        %p464 = pneg %p248
        %p465 = pneg %p272
        %p466 = pneg %p269
        %p467 = pneg %p293
        %p468 = pneg %p290
        %p469 = pneg %p314
        %p470 = pneg %p311
        %p471 = pneg %p335
        %p472 = pneg %p332
        %p473 = pneg %p363
        %p474 = pneg %p360
        %s475 = sand.u32 %s350, 1
        %s476 = scalar_lea.sflag [#allocation7], %s475
        %s477 = sand.u32 %s350, 1
        %s478 = smul.addr %s477, 8
        %s479 = scalar_lea.vmem [#allocation8], %s478
        %p480 = scmp.eq.s32.totalorder %s34, 0
        // Predicated region
        $region81: #{tpu_custom_call.1} parent=75 // pred_check
          %p481 = pneg %p480
        $region82: #{tpu_custom_call.1} parent=75 // pred_check_branch
          %483 = sbr.rel (%p481) target = $region84
        $region83: #{tpu_custom_call.1} parent=75 // pred_region
          %v484 = vld [vmem:[#allocation5] sm:$0xff]
          %v485 = vld [vmem:[%s6] sm:$0x1]
          %v486 = vld [vmem:[%s7] sm:$0x1]
          %vm487 = vcmask 261120
          %v488 = vsel %vm487, %v484, 0.0
          %489 = vadd.xlane.f32.xlu0 %v488
          %v490 = vpop.xlane.xlu0 %489
          %v491 = vrcp.pop 32.0
          %v492 = vmul.f32 %v490, %v491
          %v493 = vmul.f32 %v484, %v484
          %v494 = vsel %vm487, %v493, 0.0
          %495 = vadd.xlane.f32.xlu0 %v494
          %v496 = vpop.xlane.xlu0 %495
          %v497 = vmul.f32 %v496, %v491
          %v498 = vmul.f32 %v492, %v492
          %v499 = vsub.f32 %v497, %v498
          %v500 = vadd.f32 %v499, 1e-05
          %v501 = vrsqrt.pop %v500
          %v502 = vsub.f32 %v484, %v492
          %v503 = vmul.f32 %v502, %v501
          %v505 = vlaneseq
          %v506 = vshrl.u32 %v505, 7
          %v507 = vsub.s32 0, %v506
          %v508 = vrot.slane %v485, %v507
          %v510 = vmul.f32 %v503, %v508
          %v512 = vlaneseq
          %v513 = vshrl.u32 %v512, 7
          %v514 = vsub.s32 0, %v513
          %v515 = vrot.slane %v486, %v514
          %v517 = vadd.f32 %v510, %v515
          %v518 = vld [vmem:[%s1] sm:$0xff]
          %v519 = vld [vmem:[%s1 + $0x8] sm:$0xff]
          %v520 = vld [vmem:[%s1 + $0x10] sm:$0xff]
          %v521 = vld [vmem:[%s1 + $0x18] sm:$0xff]
          %v523 = vsel %vm487, %v517, 0
          %525 = vmatprep.subr.mxu0 0.0
          %526 = vmatpush1.msra.mxu0 %v518
          %527 = vmatprep.subr.mxu0 0.0
          %528 = vmatpush1.msra.mxu0 %v519
          %529 = vmatprep.subr.mxu0 0.0
          %530 = vmatpush1.msra.mxu0 %v520
          %531 = vmatprep.subr.mxu0 0.0
          %532 = vmatpush1.msra.mxu0 %v521
          %533 = vmatprep.subr.mxu0 0.0
          %534 = vmatpush1.msra.mxu0 0.0
          %535 = vmatprep.subr.mxu0 0.0
          %536 = vmatpush1.msra.mxu0 0.0
          %537 = vmatprep.subr.mxu0 0.0
          %538 = vmatpush1.msra.mxu0 0.0
          %539 = vmatprep.subr.mxu0 0.0
          %540 = vmatpush1.msra.mxu0 0.0
          %541 = vmatprep.subr.mxu0 0.0
          %542 = vmatpush1.msra.mxu0 0.0
          %543 = vmatprep.subr.mxu0 0.0
          %544 = vmatpush1.msra.mxu0 0.0
          %545 = vmatprep.subr.mxu0 0.0
          %546 = vmatpush1.msra.mxu0 0.0
          %547 = vmatprep.subr.mxu0 0.0
          %548 = vmatpush1.msra.mxu0 0.0
          %549 = vmatprep.subr.mxu0 0.0
          %550 = vmatpush1.msra.mxu0 0.0
          %551 = vmatprep.subr.mxu0 0.0
          %552 = vmatpush1.msra.mxu0 0.0
          %553 = vmatprep.subr.mxu0 0.0
          %554 = vmatpush1.msra.mxu0 0.0
          %555 = vmatprep.subr.mxu0 0.0
          %556 = vmatpush1.msra.mxu0 0.0
          %557 = vmatprep.subr.mxu0 0.0
          %558 = vmatpush1.msra.mxu0 0.0
          %559 = vmatprep.subr.mxu0 0.0
          %560 = vmatpush1.msra.mxu0 0.0
          %561 = vmatprep.subr.mxu0 0.0
          %562 = vmatpush1.msra.mxu0 0.0
          %563 = vmatprep.subr.mxu0 0.0
          %564 = vmatpush1.msra.mxu0 0.0
          %565 = vmatprep.subr.mxu0 0.0
          %566 = vmatpush1.msra.mxu0 0.0
          %567 = vmatprep.subr.mxu0 0.0
          %568 = vmatpush1.msra.mxu0 0.0
          %569 = vmatprep.subr.mxu0 0.0
          %570 = vmatpush1.msra.mxu0 0.0
          %571 = vmatprep.subr.mxu0 0.0
          %572 = vmatpush1.msra.mxu0 0.0
          %573 = vmatprep.subr.mxu0 0.0
          %574 = vmatpush1.msra.mxu0 0.0
          %575 = vmatprep.subr.mxu0 0.0
          %576 = vmatpush1.msra.mxu0 0.0
          %577 = vmatprep.subr.mxu0 0.0
          %578 = vmatpush1.msra.mxu0 0.0
          %579 = vmatprep.subr.mxu0 0.0
          %580 = vmatpush1.msra.mxu0 0.0
          %581 = vmatprep.subr.mxu0 0.0
          %582 = vmatpush1.msra.mxu0 0.0
          %583 = vmatprep.subr.mxu0 0.0
          %584 = vmatpush1.msra.mxu0 0.0
          %585 = vmatprep.subr.mxu0 0.0
          %586 = vmatpush1.msra.mxu0 0.0
          %587 = vmatprep.subr.mxu0 0.0
          %588 = vmatpush1.msra.mxu0 0.0
          %589 = vmatprep.mubr.f32.mxu0 0.0
          %590 = vmatmul.mubr.f32.gmra.mrb[0].mxu0 %v523
          %v591 = vpop.f32.mrb[0].mxu0
          %v592 = vadd.f32 0.0, %v591
          %v593 = vpop.f32.mrb[0].mxu0
          %594 = vdwg.mxu0
          %v595 = vld [vmem:[%s2] sm:$0xff]
          %v596 = vld [vmem:[%s2 + $0x8] sm:$0xff]
          %v597 = vld [vmem:[%s2 + $0x10] sm:$0xff]
          %v598 = vld [vmem:[%s2 + $0x18] sm:$0xff]
          %599 = vmatprep.subr.mxu0 0.0
          %600 = vmatpush1.msra.mxu0 %v595
          %601 = vmatprep.subr.mxu0 0.0
          %602 = vmatpush1.msra.mxu0 %v596
          %603 = vmatprep.subr.mxu0 0.0
          %604 = vmatpush1.msra.mxu0 %v597
          %605 = vmatprep.subr.mxu0 0.0
          %606 = vmatpush1.msra.mxu0 %v598
          %607 = vmatprep.subr.mxu0 0.0
          %608 = vmatpush1.msra.mxu0 0.0
          %609 = vmatprep.subr.mxu0 0.0
          %610 = vmatpush1.msra.mxu0 0.0
          %611 = vmatprep.subr.mxu0 0.0
          %612 = vmatpush1.msra.mxu0 0.0
          %613 = vmatprep.subr.mxu0 0.0
          %614 = vmatpush1.msra.mxu0 0.0
          %615 = vmatprep.subr.mxu0 0.0
          %616 = vmatpush1.msra.mxu0 0.0
          %617 = vmatprep.subr.mxu0 0.0
          %618 = vmatpush1.msra.mxu0 0.0
          %619 = vmatprep.subr.mxu0 0.0
          %620 = vmatpush1.msra.mxu0 0.0
          %621 = vmatprep.subr.mxu0 0.0
          %622 = vmatpush1.msra.mxu0 0.0
          %623 = vmatprep.subr.mxu0 0.0
          %624 = vmatpush1.msra.mxu0 0.0
          %625 = vmatprep.subr.mxu0 0.0
          %626 = vmatpush1.msra.mxu0 0.0
          %627 = vmatprep.subr.mxu0 0.0
          %628 = vmatpush1.msra.mxu0 0.0
          %629 = vmatprep.subr.mxu0 0.0
          %630 = vmatpush1.msra.mxu0 0.0
          %631 = vmatprep.subr.mxu0 0.0
          %632 = vmatpush1.msra.mxu0 0.0
          %633 = vmatprep.subr.mxu0 0.0
          %634 = vmatpush1.msra.mxu0 0.0
          %635 = vmatprep.subr.mxu0 0.0
          %636 = vmatpush1.msra.mxu0 0.0
          %637 = vmatprep.subr.mxu0 0.0
          %638 = vmatpush1.msra.mxu0 0.0
          %639 = vmatprep.subr.mxu0 0.0
          %640 = vmatpush1.msra.mxu0 0.0
          %641 = vmatprep.subr.mxu0 0.0
          %642 = vmatpush1.msra.mxu0 0.0
          %643 = vmatprep.subr.mxu0 0.0
          %644 = vmatpush1.msra.mxu0 0.0
          %645 = vmatprep.subr.mxu0 0.0
          %646 = vmatpush1.msra.mxu0 0.0
          %647 = vmatprep.subr.mxu0 0.0
          %648 = vmatpush1.msra.mxu0 0.0
          %649 = vmatprep.subr.mxu0 0.0
          %650 = vmatpush1.msra.mxu0 0.0
          %651 = vmatprep.subr.mxu0 0.0
          %652 = vmatpush1.msra.mxu0 0.0
          %653 = vmatprep.subr.mxu0 0.0
          %654 = vmatpush1.msra.mxu0 0.0
          %655 = vmatprep.subr.mxu0 0.0
          %656 = vmatpush1.msra.mxu0 0.0
          %657 = vmatprep.subr.mxu0 0.0
          %658 = vmatpush1.msra.mxu0 0.0
          %659 = vmatprep.subr.mxu0 0.0
          %660 = vmatpush1.msra.mxu0 0.0
          %661 = vmatprep.subr.mxu0 0.0
          %662 = vmatpush1.msra.mxu0 0.0
          %663 = vmatprep.mubr.f32.mxu0 0.0
          %664 = vmatmul.mubr.f32.gmra.mrb[0].mxu0 %v523
          %v665 = vpop.f32.mrb[0].mxu0
          %v666 = vadd.f32 0.0, %v665
          %v667 = vpop.f32.mrb[0].mxu0
          %668 = vdwg.mxu0
          %v669 = vld [vmem:[%s3] sm:$0xff]
          %v670 = vld [vmem:[%s3 + $0x8] sm:$0xff]
          %v671 = vld [vmem:[%s3 + $0x10] sm:$0xff]
          %v672 = vld [vmem:[%s3 + $0x18] sm:$0xff]
          %673 = vmatprep.subr.mxu0 0.0
          %674 = vmatpush1.msra.mxu0 %v669
          %675 = vmatprep.subr.mxu0 0.0
          %676 = vmatpush1.msra.mxu0 %v670
          %677 = vmatprep.subr.mxu0 0.0
          %678 = vmatpush1.msra.mxu0 %v671
          %679 = vmatprep.subr.mxu0 0.0
          %680 = vmatpush1.msra.mxu0 %v672
          %681 = vmatprep.subr.mxu0 0.0
          %682 = vmatpush1.msra.mxu0 0.0
          %683 = vmatprep.subr.mxu0 0.0
          %684 = vmatpush1.msra.mxu0 0.0
          %685 = vmatprep.subr.mxu0 0.0
          %686 = vmatpush1.msra.mxu0 0.0
          %687 = vmatprep.subr.mxu0 0.0
          %688 = vmatpush1.msra.mxu0 0.0
          %689 = vmatprep.subr.mxu0 0.0
          %690 = vmatpush1.msra.mxu0 0.0
          %691 = vmatprep.subr.mxu0 0.0
          %692 = vmatpush1.msra.mxu0 0.0
          %693 = vmatprep.subr.mxu0 0.0
          %694 = vmatpush1.msra.mxu0 0.0
          %695 = vmatprep.subr.mxu0 0.0
          %696 = vmatpush1.msra.mxu0 0.0
          %697 = vmatprep.subr.mxu0 0.0
          %698 = vmatpush1.msra.mxu0 0.0
          %699 = vmatprep.subr.mxu0 0.0
          %700 = vmatpush1.msra.mxu0 0.0
          %701 = vmatprep.subr.mxu0 0.0
          %702 = vmatpush1.msra.mxu0 0.0
          %703 = vmatprep.subr.mxu0 0.0
          %704 = vmatpush1.msra.mxu0 0.0
          %705 = vmatprep.subr.mxu0 0.0
          %706 = vmatpush1.msra.mxu0 0.0
          %707 = vmatprep.subr.mxu0 0.0
          %708 = vmatpush1.msra.mxu0 0.0
          %709 = vmatprep.subr.mxu0 0.0
          %710 = vmatpush1.msra.mxu0 0.0
          %711 = vmatprep.subr.mxu0 0.0
          %712 = vmatpush1.msra.mxu0 0.0
          %713 = vmatprep.subr.mxu0 0.0
          %714 = vmatpush1.msra.mxu0 0.0
          %715 = vmatprep.subr.mxu0 0.0
          %716 = vmatpush1.msra.mxu0 0.0
          %717 = vmatprep.subr.mxu0 0.0
          %718 = vmatpush1.msra.mxu0 0.0
          %719 = vmatprep.subr.mxu0 0.0
          %720 = vmatpush1.msra.mxu0 0.0
          %721 = vmatprep.subr.mxu0 0.0
          %722 = vmatpush1.msra.mxu0 0.0
          %723 = vmatprep.subr.mxu0 0.0
          %724 = vmatpush1.msra.mxu0 0.0
          %725 = vmatprep.subr.mxu0 0.0
          %726 = vmatpush1.msra.mxu0 0.0
          %727 = vmatprep.subr.mxu0 0.0
          %728 = vmatpush1.msra.mxu0 0.0
          %729 = vmatprep.subr.mxu0 0.0
          %730 = vmatpush1.msra.mxu0 0.0
          %731 = vmatprep.subr.mxu0 0.0
          %732 = vmatpush1.msra.mxu0 0.0
          %733 = vmatprep.subr.mxu0 0.0
          %734 = vmatpush1.msra.mxu0 0.0
          %735 = vmatprep.subr.mxu0 0.0
          %736 = vmatpush1.msra.mxu0 0.0
          %737 = vmatprep.mubr.f32.mxu0 0.0
          %738 = vmatmul.mubr.f32.gmra.mrb[0].mxu0 %v523
          %v739 = vpop.f32.mrb[0].mxu0
          %v740 = vadd.f32 0.0, %v739
          %v741 = vpop.f32.mrb[0].mxu0
          %742 = vdwg.mxu0
          %744 = vrot.lane.b32.xlu0 %v592, 120
          %v745 = vpop.permute.xlu0 %744
          %747 = vrot.lane.b32.xlu0 %v592, 112
          %v748 = vpop.permute.xlu0 %747
          %750 = vrot.lane.b32.xlu0 %v592, 104
          %v751 = vpop.permute.xlu0 %750
          %v753 = vcombine.low %v592, %v748
          %v754 = vcombine.high %v592, %v748
          %v756 = vunpack.c.l.s4 1983009808
          %v757 = vunpack.c.0.s8 %v756
          %v758 = vlaneseq
          %v759 = vshrl.u32 %v758, 7
          %v760 = vsub.s32 %v757, %v759
          %v761 = vrot.slane %v753, %v760
          %v763 = vunpack.c.l.s4 1983009808
          %v764 = vunpack.c.0.s8 %v763
          %v765 = vlaneseq
          %v766 = vshrl.u32 %v765, 7
          %v767 = vsub.s32 %v764, %v766
          %v768 = vrot.slane %v754, %v767
          %v769 = vcombine.low %v745, %v751
          %v770 = vcombine.high %v745, %v751
          %v772 = vunpack.c.l.s4 1983009808
          %v773 = vunpack.c.0.s8 %v772
          %v774 = vlaneseq
          %v775 = vshrl.u32 %v774, 7
          %v776 = vsub.s32 %v773, %v775
          %v777 = vrot.slane %v769, %v776
          %v779 = vunpack.c.l.s4 1983009808
          %v780 = vunpack.c.0.s8 %v779
          %v781 = vlaneseq
          %v782 = vshrl.u32 %v781, 7
          %v783 = vsub.s32 %v780, %v782
          %v784 = vrot.slane %v770, %v783
          %v785 = vcombine.low %v761, %v777
          %v786 = vcombine.high %v761, %v777
          %v788 = vunpack.c.l.s4 1934713408
          %v789 = vunpack.c.0.s8 %v788
          %v790 = vlaneseq
          %v791 = vshrl.u32 %v790, 7
          %v792 = vsub.s32 %v789, %v791
          %v793 = vrot.slane %v785, %v792
          %v795 = vunpack.c.l.s4 1934713408
          %v796 = vunpack.c.0.s8 %v795
          %v797 = vlaneseq
          %v798 = vshrl.u32 %v797, 7
          %v799 = vsub.s32 %v796, %v798
          %v800 = vrot.slane %v786, %v799
          %v801 = vcombine.low %v768, %v784
          %v802 = vcombine.high %v768, %v784
          %v804 = vunpack.c.l.s4 1934713408
          %v805 = vunpack.c.0.s8 %v804
          %v806 = vlaneseq
          %v807 = vshrl.u32 %v806, 7
          %v808 = vsub.s32 %v805, %v807
          %v809 = vrot.slane %v801, %v808
          %v811 = vunpack.c.l.s4 1934713408
          %v812 = vunpack.c.0.s8 %v811
          %v813 = vlaneseq
          %v814 = vshrl.u32 %v813, 7
          %v815 = vsub.s32 %v812, %v814
          %v816 = vrot.slane %v802, %v815
          %v817 = vcombine.high %v793, 0.0
          %v818 = vcombine.high %v800, 0.0
          %v819 = vcombine.high %v809, 0.0
          %v820 = vcombine.high %v816, 0.0
          %v821 = vcombine.low %v793, %v800
          %v823 = vunpack.c.l.s4 1983009808
          %v824 = vunpack.c.0.s8 %v823
          %v825 = vlaneseq
          %v826 = vshrl.u32 %v825, 7
          %v827 = vsub.s32 %v824, %v826
          %v828 = vrot.slane %v821, %v827
          %v829 = vcombine.low %v817, %v818
          %v831 = vunpack.c.l.s4 1983009808
          %v832 = vunpack.c.0.s8 %v831
          %v833 = vlaneseq
          %v834 = vshrl.u32 %v833, 7
          %v835 = vsub.s32 %v832, %v834
          %v836 = vrot.slane %v829, %v835
          %v837 = vcombine.low %v809, %v816
          %v839 = vunpack.c.l.s4 1983009808
          %v840 = vunpack.c.0.s8 %v839
          %v841 = vlaneseq
          %v842 = vshrl.u32 %v841, 7
          %v843 = vsub.s32 %v840, %v842
          %v844 = vrot.slane %v837, %v843
          %v845 = vcombine.low %v819, %v820
          %v847 = vunpack.c.l.s4 1983009808
          %v848 = vunpack.c.0.s8 %v847
          %v849 = vlaneseq
          %v850 = vshrl.u32 %v849, 7
          %v851 = vsub.s32 %v848, %v850
          %v852 = vrot.slane %v845, %v851
          %v853 = vcombine.low %v828, %v836
          %v854 = vcombine.high %v828, %v836
          %v856 = vunpack.c.l.s4 1934713408
          %v857 = vunpack.c.0.s8 %v856
          %v858 = vlaneseq
          %v859 = vshrl.u32 %v858, 7
          %v860 = vsub.s32 %v857, %v859
          %v861 = vrot.slane %v853, %v860
          %v863 = vunpack.c.l.s4 1934713408
          %v864 = vunpack.c.0.s8 %v863
          %v865 = vlaneseq
          %v866 = vshrl.u32 %v865, 7
          %v867 = vsub.s32 %v864, %v866
          %v868 = vrot.slane %v854, %v867
          %v869 = vcombine.low %v844, %v852
          %v870 = vcombine.high %v844, %v852
          %v872 = vunpack.c.l.s4 1934713408
          %v873 = vunpack.c.0.s8 %v872
          %v874 = vlaneseq
          %v875 = vshrl.u32 %v874, 7
          %v876 = vsub.s32 %v873, %v875
          %v877 = vrot.slane %v869, %v876
          %v879 = vunpack.c.l.s4 1934713408
          %v880 = vunpack.c.0.s8 %v879
          %v881 = vlaneseq
          %v882 = vshrl.u32 %v881, 7
          %v883 = vsub.s32 %v880, %v882
          %v884 = vrot.slane %v870, %v883
          %v885 = vcombine.low %v861, %v877
          %v886 = vcombine.high %v861, %v877
          %v887 = vcombine.low %v868, %v884
          %v888 = vcombine.high %v868, %v884
          %vm889 = vcmask 64512
          %890 = vst.msk [vmem:[#allocation2] sm:$0xff] %vm889, %v885
          %891 = vst.msk [vmem:[#allocation2 + $0x8] sm:$0xff] %vm889, %v886
          %892 = vst.msk [vmem:[#allocation2 + $0x10] sm:$0xff] %vm889, %v887
          %893 = vst.msk [vmem:[#allocation2 + $0x18] sm:$0xff] %vm889, %v888
          %895 = vrot.lane.b32.xlu0 %v666, 120
          %v896 = vpop.permute.xlu0 %895
          %898 = vrot.lane.b32.xlu0 %v666, 112
          %v899 = vpop.permute.xlu0 %898
          %901 = vrot.lane.b32.xlu0 %v666, 104
          %v902 = vpop.permute.xlu0 %901
          %v904 = vcombine.low %v666, %v899
          %v905 = vcombine.high %v666, %v899
          %v907 = vunpack.c.l.s4 1983009808
          %v908 = vunpack.c.0.s8 %v907
          %v909 = vlaneseq
          %v910 = vshrl.u32 %v909, 7
          %v911 = vsub.s32 %v908, %v910
          %v912 = vrot.slane %v904, %v911
          %v914 = vunpack.c.l.s4 1983009808
          %v915 = vunpack.c.0.s8 %v914
          %v916 = vlaneseq
          %v917 = vshrl.u32 %v916, 7
          %v918 = vsub.s32 %v915, %v917
          %v919 = vrot.slane %v905, %v918
          %v920 = vcombine.low %v896, %v902
          %v921 = vcombine.high %v896, %v902
          %v923 = vunpack.c.l.s4 1983009808
          %v924 = vunpack.c.0.s8 %v923
          %v925 = vlaneseq
          %v926 = vshrl.u32 %v925, 7
          %v927 = vsub.s32 %v924, %v926
          %v928 = vrot.slane %v920, %v927
          %v930 = vunpack.c.l.s4 1983009808
          %v931 = vunpack.c.0.s8 %v930
          %v932 = vlaneseq
          %v933 = vshrl.u32 %v932, 7
          %v934 = vsub.s32 %v931, %v933
          %v935 = vrot.slane %v921, %v934
          %v936 = vcombine.low %v912, %v928
          %v937 = vcombine.high %v912, %v928
          %v939 = vunpack.c.l.s4 1934713408
          %v940 = vunpack.c.0.s8 %v939
          %v941 = vlaneseq
          %v942 = vshrl.u32 %v941, 7
          %v943 = vsub.s32 %v940, %v942
          %v944 = vrot.slane %v936, %v943
          %v946 = vunpack.c.l.s4 1934713408
          %v947 = vunpack.c.0.s8 %v946
          %v948 = vlaneseq
          %v949 = vshrl.u32 %v948, 7
          %v950 = vsub.s32 %v947, %v949
          %v951 = vrot.slane %v937, %v950
          %v952 = vcombine.low %v919, %v935
          %v953 = vcombine.high %v919, %v935
          %v955 = vunpack.c.l.s4 1934713408
          %v956 = vunpack.c.0.s8 %v955
          %v957 = vlaneseq
          %v958 = vshrl.u32 %v957, 7
          %v959 = vsub.s32 %v956, %v958
          %v960 = vrot.slane %v952, %v959
          %v962 = vunpack.c.l.s4 1934713408
          %v963 = vunpack.c.0.s8 %v962
          %v964 = vlaneseq
          %v965 = vshrl.u32 %v964, 7
          %v966 = vsub.s32 %v963, %v965
          %v967 = vrot.slane %v953, %v966
          %v968 = vcombine.high %v944, 0.0
          %v969 = vcombine.high %v951, 0.0
          %v970 = vcombine.high %v960, 0.0
          %v971 = vcombine.high %v967, 0.0
          %v972 = vcombine.low %v944, %v951
          %v974 = vunpack.c.l.s4 1983009808
          %v975 = vunpack.c.0.s8 %v974
          %v976 = vlaneseq
          %v977 = vshrl.u32 %v976, 7
          %v978 = vsub.s32 %v975, %v977
          %v979 = vrot.slane %v972, %v978
          %v980 = vcombine.low %v968, %v969
          %v982 = vunpack.c.l.s4 1983009808
          %v983 = vunpack.c.0.s8 %v982
          %v984 = vlaneseq
          %v985 = vshrl.u32 %v984, 7
          %v986 = vsub.s32 %v983, %v985
          %v987 = vrot.slane %v980, %v986
          %v988 = vcombine.low %v960, %v967
          %v990 = vunpack.c.l.s4 1983009808
          %v991 = vunpack.c.0.s8 %v990
          %v992 = vlaneseq
          %v993 = vshrl.u32 %v992, 7
          %v994 = vsub.s32 %v991, %v993
          %v995 = vrot.slane %v988, %v994
          %v996 = vcombine.low %v970, %v971
          %v998 = vunpack.c.l.s4 1983009808
          %v999 = vunpack.c.0.s8 %v998
          %v1000 = vlaneseq
          %v1001 = vshrl.u32 %v1000, 7
          %v1002 = vsub.s32 %v999, %v1001
          %v1003 = vrot.slane %v996, %v1002
          %v1004 = vcombine.low %v979, %v987
          %v1005 = vcombine.high %v979, %v987
          %v1007 = vunpack.c.l.s4 1934713408
          %v1008 = vunpack.c.0.s8 %v1007
          %v1009 = vlaneseq
          %v1010 = vshrl.u32 %v1009, 7
          %v1011 = vsub.s32 %v1008, %v1010
          %v1012 = vrot.slane %v1004, %v1011
          %v1014 = vunpack.c.l.s4 1934713408
          %v1015 = vunpack.c.0.s8 %v1014
          %v1016 = vlaneseq
          %v1017 = vshrl.u32 %v1016, 7
          %v1018 = vsub.s32 %v1015, %v1017
          %v1019 = vrot.slane %v1005, %v1018
          %v1020 = vcombine.low %v995, %v1003
          %v1021 = vcombine.high %v995, %v1003
          %v1023 = vunpack.c.l.s4 1934713408
          %v1024 = vunpack.c.0.s8 %v1023
          %v1025 = vlaneseq
          %v1026 = vshrl.u32 %v1025, 7
          %v1027 = vsub.s32 %v1024, %v1026
          %v1028 = vrot.slane %v1020, %v1027
          %v1030 = vunpack.c.l.s4 1934713408
          %v1031 = vunpack.c.0.s8 %v1030
          %v1032 = vlaneseq
          %v1033 = vshrl.u32 %v1032, 7
          %v1034 = vsub.s32 %v1031, %v1033
          %v1035 = vrot.slane %v1021, %v1034
          %v1036 = vcombine.low %v1012, %v1028
          %v1037 = vcombine.high %v1012, %v1028
          %v1038 = vcombine.low %v1019, %v1035
          %v1039 = vcombine.high %v1019, %v1035
          %1040 = vst.msk [vmem:[#allocation3] sm:$0xff] %vm889, %v1036
          %1041 = vst.msk [vmem:[#allocation3 + $0x8] sm:$0xff] %vm889, %v1037
          %1042 = vst.msk [vmem:[#allocation3 + $0x10] sm:$0xff] %vm889, %v1038
          %1043 = vst.msk [vmem:[#allocation3 + $0x18] sm:$0xff] %vm889, %v1039
          %1045 = vrot.lane.b32.xlu0 %v740, 120
          %v1046 = vpop.permute.xlu0 %1045
          %1048 = vrot.lane.b32.xlu0 %v740, 112
          %v1049 = vpop.permute.xlu0 %1048
          %1051 = vrot.lane.b32.xlu0 %v740, 104
          %v1052 = vpop.permute.xlu0 %1051
          %v1054 = vcombine.low %v740, %v1049
          %v1055 = vcombine.high %v740, %v1049
          %v1057 = vunpack.c.l.s4 1983009808
          %v1058 = vunpack.c.0.s8 %v1057
          %v1059 = vlaneseq
          %v1060 = vshrl.u32 %v1059, 7
          %v1061 = vsub.s32 %v1058, %v1060
          %v1062 = vrot.slane %v1054, %v1061
          %v1064 = vunpack.c.l.s4 1983009808
          %v1065 = vunpack.c.0.s8 %v1064
          %v1066 = vlaneseq
          %v1067 = vshrl.u32 %v1066, 7
          %v1068 = vsub.s32 %v1065, %v1067
          %v1069 = vrot.slane %v1055, %v1068
          %v1070 = vcombine.low %v1046, %v1052
          %v1071 = vcombine.high %v1046, %v1052
          %v1073 = vunpack.c.l.s4 1983009808
          %v1074 = vunpack.c.0.s8 %v1073
          %v1075 = vlaneseq
          %v1076 = vshrl.u32 %v1075, 7
          %v1077 = vsub.s32 %v1074, %v1076
          %v1078 = vrot.slane %v1070, %v1077
          %v1080 = vunpack.c.l.s4 1983009808
          %v1081 = vunpack.c.0.s8 %v1080
          %v1082 = vlaneseq
          %v1083 = vshrl.u32 %v1082, 7
          %v1084 = vsub.s32 %v1081, %v1083
          %v1085 = vrot.slane %v1071, %v1084
          %v1086 = vcombine.low %v1062, %v1078
          %v1087 = vcombine.high %v1062, %v1078
          %v1089 = vunpack.c.l.s4 1934713408
          %v1090 = vunpack.c.0.s8 %v1089
          %v1091 = vlaneseq
          %v1092 = vshrl.u32 %v1091, 7
          %v1093 = vsub.s32 %v1090, %v1092
          %v1094 = vrot.slane %v1086, %v1093
          %v1096 = vunpack.c.l.s4 1934713408
          %v1097 = vunpack.c.0.s8 %v1096
          %v1098 = vlaneseq
          %v1099 = vshrl.u32 %v1098, 7
          %v1100 = vsub.s32 %v1097, %v1099
          %v1101 = vrot.slane %v1087, %v1100
          %v1102 = vcombine.low %v1069, %v1085
          %v1103 = vcombine.high %v1069, %v1085
          %v1105 = vunpack.c.l.s4 1934713408
          %v1106 = vunpack.c.0.s8 %v1105
          %v1107 = vlaneseq
          %v1108 = vshrl.u32 %v1107, 7
          %v1109 = vsub.s32 %v1106, %v1108
          %v1110 = vrot.slane %v1102, %v1109
          %v1112 = vunpack.c.l.s4 1934713408
          %v1113 = vunpack.c.0.s8 %v1112
          %v1114 = vlaneseq
          %v1115 = vshrl.u32 %v1114, 7
          %v1116 = vsub.s32 %v1113, %v1115
          %v1117 = vrot.slane %v1103, %v1116
          %v1118 = vcombine.high %v1094, 0.0
          %v1119 = vcombine.high %v1101, 0.0
          %v1120 = vcombine.high %v1110, 0.0
          %v1121 = vcombine.high %v1117, 0.0
          %v1122 = vcombine.low %v1094, %v1101
          %v1124 = vunpack.c.l.s4 1983009808
          %v1125 = vunpack.c.0.s8 %v1124
          %v1126 = vlaneseq
          %v1127 = vshrl.u32 %v1126, 7
          %v1128 = vsub.s32 %v1125, %v1127
          %v1129 = vrot.slane %v1122, %v1128
          %v1130 = vcombine.low %v1118, %v1119
          %v1132 = vunpack.c.l.s4 1983009808
          %v1133 = vunpack.c.0.s8 %v1132
          %v1134 = vlaneseq
          %v1135 = vshrl.u32 %v1134, 7
          %v1136 = vsub.s32 %v1133, %v1135
          %v1137 = vrot.slane %v1130, %v1136
          %v1138 = vcombine.low %v1110, %v1117
          %v1140 = vunpack.c.l.s4 1983009808
          %v1141 = vunpack.c.0.s8 %v1140
          %v1142 = vlaneseq
          %v1143 = vshrl.u32 %v1142, 7
          %v1144 = vsub.s32 %v1141, %v1143
          %v1145 = vrot.slane %v1138, %v1144
          %v1146 = vcombine.low %v1120, %v1121
          %v1148 = vunpack.c.l.s4 1983009808
          %v1149 = vunpack.c.0.s8 %v1148
          %v1150 = vlaneseq
          %v1151 = vshrl.u32 %v1150, 7
          %v1152 = vsub.s32 %v1149, %v1151
          %v1153 = vrot.slane %v1146, %v1152
          %v1154 = vcombine.low %v1129, %v1137
          %v1155 = vcombine.high %v1129, %v1137
          %v1157 = vunpack.c.l.s4 1934713408
          %v1158 = vunpack.c.0.s8 %v1157
          %v1159 = vlaneseq
          %v1160 = vshrl.u32 %v1159, 7
          %v1161 = vsub.s32 %v1158, %v1160
          %v1162 = vrot.slane %v1154, %v1161
          %v1164 = vunpack.c.l.s4 1934713408
          %v1165 = vunpack.c.0.s8 %v1164
          %v1166 = vlaneseq
          %v1167 = vshrl.u32 %v1166, 7
          %v1168 = vsub.s32 %v1165, %v1167
          %v1169 = vrot.slane %v1155, %v1168
          %v1170 = vcombine.low %v1145, %v1153
          %v1171 = vcombine.high %v1145, %v1153
          %v1173 = vunpack.c.l.s4 1934713408
          %v1174 = vunpack.c.0.s8 %v1173
          %v1175 = vlaneseq
          %v1176 = vshrl.u32 %v1175, 7
          %v1177 = vsub.s32 %v1174, %v1176
          %v1178 = vrot.slane %v1170, %v1177
          %v1180 = vunpack.c.l.s4 1934713408
          %v1181 = vunpack.c.0.s8 %v1180
          %v1182 = vlaneseq
          %v1183 = vshrl.u32 %v1182, 7
          %v1184 = vsub.s32 %v1181, %v1183
          %v1185 = vrot.slane %v1171, %v1184
          %v1186 = vcombine.low %v1162, %v1178
          %v1187 = vcombine.high %v1162, %v1178
          %v1188 = vcombine.low %v1169, %v1185
          %v1189 = vcombine.high %v1169, %v1185
          %1190 = vst.msk [vmem:[#allocation4] sm:$0xff] %vm889, %v1186
          %1191 = vst.msk [vmem:[#allocation4 + $0x8] sm:$0xff] %vm889, %v1187
          %1192 = vst.msk [vmem:[#allocation4 + $0x10] sm:$0xff] %vm889, %v1188
          %1193 = vst.msk [vmem:[#allocation4 + $0x18] sm:$0xff] %vm889, %v1189
        $region84: #{tpu_custom_call.1} parent=75 // pred_fallthru
          _
        %s1194 = smul.u32 %s34, 8
        %s1195 = scalar_lea.vmem [#allocation5], %s1194
        %v1196 = vld [vmem:[%s1195] sm:$0xff]
        %s1197 = scalar_lea.vmem [#allocation2], %s1194
        %v1198 = vld [vmem:[%s1197] sm:$0xff]
        %v1199 = vld [vmem:[%s1197 + $0x8] sm:$0xff]
        %v1200 = vld [vmem:[%s1197 + $0x10] sm:$0xff]
        %v1201 = vld [vmem:[%s1197 + $0x18] sm:$0xff]
        %v1202 = vld [vmem:[#allocation3] sm:$0xff]
        %v1203 = vld [vmem:[#allocation3 + $0x8] sm:$0xff]
        %v1204 = vld [vmem:[#allocation3 + $0x10] sm:$0xff]
        %v1205 = vld [vmem:[#allocation3 + $0x18] sm:$0xff]
        %v1206 = vld [vmem:[#allocation4] sm:$0xff]
        %v1207 = vld [vmem:[#allocation4 + $0x8] sm:$0xff]
        %v1208 = vld [vmem:[#allocation4 + $0x10] sm:$0xff]
        %v1209 = vld [vmem:[#allocation4 + $0x18] sm:$0xff]
        %vm1210 = vcmask 64512
        %v1212 = vsel %vm1210, %v1198, 0
        %v1215 = vsel %vm1210, %v1202, 0
        %1217 = vmatprep.subr.mxu0 0.0
        %1218 = vmatpush1.xpose.msra.mxu0 %v1215
        %1219 = vmatprep.subr.mxu0 0.0
        %1220 = vmatpush1.xpose.msra.mxu0 0.0
        %1221 = vmatprep.subr.mxu0 0.0
        %1222 = vmatpush1.xpose.msra.mxu0 0.0
        %1223 = vmatprep.subr.mxu0 0.0
        %1224 = vmatpush1.xpose.msra.mxu0 0.0
        %1225 = vmatprep.subr.mxu0 0.0
        %1226 = vmatpush1.xpose.msra.mxu0 0.0
        %1227 = vmatprep.subr.mxu0 0.0
        %1228 = vmatpush1.xpose.msra.mxu0 0.0
        %1229 = vmatprep.subr.mxu0 0.0
        %1230 = vmatpush1.xpose.msra.mxu0 0.0
        %1231 = vmatprep.subr.mxu0 0.0
        %1232 = vmatpush1.xpose.msra.mxu0 0.0
        %1233 = vmatprep.subr.mxu0 0.0
        %1234 = vmatpush1.xpose.msra.mxu0 0.0
        %1235 = vmatprep.subr.mxu0 0.0
        %1236 = vmatpush1.xpose.msra.mxu0 0.0
        %1237 = vmatprep.subr.mxu0 0.0
        %1238 = vmatpush1.xpose.msra.mxu0 0.0
        %1239 = vmatprep.subr.mxu0 0.0
        %1240 = vmatpush1.xpose.msra.mxu0 0.0
        %1241 = vmatprep.subr.mxu0 0.0
        %1242 = vmatpush1.xpose.msra.mxu0 0.0
        %1243 = vmatprep.subr.mxu0 0.0
        %1244 = vmatpush1.xpose.msra.mxu0 0.0
        %1245 = vmatprep.subr.mxu0 0.0
        %1246 = vmatpush1.xpose.msra.mxu0 0.0
        %1247 = vmatprep.subr.mxu0 0.0
        %1248 = vmatpush1.xpose.msra.mxu0 0.0
        %1249 = vmatprep.subr.mxu0 0.0
        %1250 = vmatpush1.xpose.msra.mxu0 0.0
        %1251 = vmatprep.subr.mxu0 0.0
        %1252 = vmatpush1.xpose.msra.mxu0 0.0
        %1253 = vmatprep.subr.mxu0 0.0
        %1254 = vmatpush1.xpose.msra.mxu0 0.0
        %1255 = vmatprep.subr.mxu0 0.0
        %1256 = vmatpush1.xpose.msra.mxu0 0.0
        %1257 = vmatprep.subr.mxu0 0.0
        %1258 = vmatpush1.xpose.msra.mxu0 0.0
        %1259 = vmatprep.subr.mxu0 0.0
        %1260 = vmatpush1.xpose.msra.mxu0 0.0
        %1261 = vmatprep.subr.mxu0 0.0
        %1262 = vmatpush1.xpose.msra.mxu0 0.0
        %1263 = vmatprep.subr.mxu0 0.0
        %1264 = vmatpush1.xpose.msra.mxu0 0.0
        %1265 = vmatprep.subr.mxu0 0.0
        %1266 = vmatpush1.xpose.msra.mxu0 0.0
        %1267 = vmatprep.subr.mxu0 0.0
        %1268 = vmatpush1.xpose.msra.mxu0 0.0
        %1269 = vmatprep.subr.mxu0 0.0
        %1270 = vmatpush1.xpose.msra.mxu0 0.0
        %1271 = vmatprep.subr.mxu0 0.0
        %1272 = vmatpush1.xpose.msra.mxu0 0.0
        %1273 = vmatprep.subr.mxu0 0.0
        %1274 = vmatpush1.xpose.msra.mxu0 0.0
        %1275 = vmatprep.subr.mxu0 0.0
        %1276 = vmatpush1.xpose.msra.mxu0 0.0
        %1277 = vmatprep.subr.mxu0 0.0
        %1278 = vmatpush1.xpose.msra.mxu0 0.0
        %1279 = vmatprep.subr.mxu0 0.0
        %1280 = vmatpush1.xpose.msra.mxu0 0.0
        %1281 = vmatprep.mubr.f32.mxu0 0.0
        %1282 = vmatmul.mubr.f32.gmra.mrb[0].mxu0 %v1212
        %v1283 = vpop.f32.mrb[0].mxu0
        %v1284 = vadd.f32 0.0, %v1283
        %v1285 = vpop.f32.mrb[0].mxu0
        %1286 = vdwg.mxu0
        %v1288 = vsel %vm1210, %v1199, 0
        %v1291 = vsel %vm1210, %v1203, 0
        %1293 = vmatprep.subr.mxu0 0.0
        %1294 = vmatpush1.xpose.msra.mxu0 %v1291
        %1295 = vmatprep.subr.mxu0 0.0
        %1296 = vmatpush1.xpose.msra.mxu0 0.0
        %1297 = vmatprep.subr.mxu0 0.0
        %1298 = vmatpush1.xpose.msra.mxu0 0.0
        %1299 = vmatprep.subr.mxu0 0.0
        %1300 = vmatpush1.xpose.msra.mxu0 0.0
        %1301 = vmatprep.subr.mxu0 0.0
        %1302 = vmatpush1.xpose.msra.mxu0 0.0
        %1303 = vmatprep.subr.mxu0 0.0
        %1304 = vmatpush1.xpose.msra.mxu0 0.0
        %1305 = vmatprep.subr.mxu0 0.0
        %1306 = vmatpush1.xpose.msra.mxu0 0.0
        %1307 = vmatprep.subr.mxu0 0.0
        %1308 = vmatpush1.xpose.msra.mxu0 0.0
        %1309 = vmatprep.subr.mxu0 0.0
        %1310 = vmatpush1.xpose.msra.mxu0 0.0
        %1311 = vmatprep.subr.mxu0 0.0
        %1312 = vmatpush1.xpose.msra.mxu0 0.0
        %1313 = vmatprep.subr.mxu0 0.0
        %1314 = vmatpush1.xpose.msra.mxu0 0.0
        %1315 = vmatprep.subr.mxu0 0.0
        %1316 = vmatpush1.xpose.msra.mxu0 0.0
        %1317 = vmatprep.subr.mxu0 0.0
        %1318 = vmatpush1.xpose.msra.mxu0 0.0
        %1319 = vmatprep.subr.mxu0 0.0
        %1320 = vmatpush1.xpose.msra.mxu0 0.0
        %1321 = vmatprep.subr.mxu0 0.0
        %1322 = vmatpush1.xpose.msra.mxu0 0.0
        %1323 = vmatprep.subr.mxu0 0.0
        %1324 = vmatpush1.xpose.msra.mxu0 0.0
        %1325 = vmatprep.subr.mxu0 0.0
        %1326 = vmatpush1.xpose.msra.mxu0 0.0
        %1327 = vmatprep.subr.mxu0 0.0
        %1328 = vmatpush1.xpose.msra.mxu0 0.0
        %1329 = vmatprep.subr.mxu0 0.0
        %1330 = vmatpush1.xpose.msra.mxu0 0.0
        %1331 = vmatprep.subr.mxu0 0.0
        %1332 = vmatpush1.xpose.msra.mxu0 0.0
        %1333 = vmatprep.subr.mxu0 0.0
        %1334 = vmatpush1.xpose.msra.mxu0 0.0
        %1335 = vmatprep.subr.mxu0 0.0
        %1336 = vmatpush1.xpose.msra.mxu0 0.0
        %1337 = vmatprep.subr.mxu0 0.0
        %1338 = vmatpush1.xpose.msra.mxu0 0.0
        %1339 = vmatprep.subr.mxu0 0.0
        %1340 = vmatpush1.xpose.msra.mxu0 0.0
        %1341 = vmatprep.subr.mxu0 0.0
        %1342 = vmatpush1.xpose.msra.mxu0 0.0
        %1343 = vmatprep.subr.mxu0 0.0
        %1344 = vmatpush1.xpose.msra.mxu0 0.0
        %1345 = vmatprep.subr.mxu0 0.0
        %1346 = vmatpush1.xpose.msra.mxu0 0.0
        %1347 = vmatprep.subr.mxu0 0.0
        %1348 = vmatpush1.xpose.msra.mxu0 0.0
        %1349 = vmatprep.subr.mxu0 0.0
        %1350 = vmatpush1.xpose.msra.mxu0 0.0
        %1351 = vmatprep.subr.mxu0 0.0
        %1352 = vmatpush1.xpose.msra.mxu0 0.0
        %1353 = vmatprep.subr.mxu0 0.0
        %1354 = vmatpush1.xpose.msra.mxu0 0.0
        %1355 = vmatprep.subr.mxu0 0.0
        %1356 = vmatpush1.xpose.msra.mxu0 0.0
        %1357 = vmatprep.mubr.f32.mxu0 0.0
        %1358 = vmatmul.mubr.f32.gmra.mrb[0].mxu0 %v1288
        %v1359 = vpop.f32.mrb[0].mxu0
        %v1360 = vadd.f32 0.0, %v1359
        %v1361 = vpop.f32.mrb[0].mxu0
        %1362 = vdwg.mxu0
        %v1364 = vsel %vm1210, %v1200, 0
        %v1367 = vsel %vm1210, %v1204, 0
        %1369 = vmatprep.subr.mxu0 0.0
        %1370 = vmatpush1.xpose.msra.mxu0 %v1367
        %1371 = vmatprep.subr.mxu0 0.0
        %1372 = vmatpush1.xpose.msra.mxu0 0.0
        %1373 = vmatprep.subr.mxu0 0.0
        %1374 = vmatpush1.xpose.msra.mxu0 0.0
        %1375 = vmatprep.subr.mxu0 0.0
        %1376 = vmatpush1.xpose.msra.mxu0 0.0
        %1377 = vmatprep.subr.mxu0 0.0
        %1378 = vmatpush1.xpose.msra.mxu0 0.0
        %1379 = vmatprep.subr.mxu0 0.0
        %1380 = vmatpush1.xpose.msra.mxu0 0.0
        %1381 = vmatprep.subr.mxu0 0.0
        %1382 = vmatpush1.xpose.msra.mxu0 0.0
        %1383 = vmatprep.subr.mxu0 0.0
        %1384 = vmatpush1.xpose.msra.mxu0 0.0
        %1385 = vmatprep.subr.mxu0 0.0
        %1386 = vmatpush1.xpose.msra.mxu0 0.0
        %1387 = vmatprep.subr.mxu0 0.0
        %1388 = vmatpush1.xpose.msra.mxu0 0.0
        %1389 = vmatprep.subr.mxu0 0.0
        %1390 = vmatpush1.xpose.msra.mxu0 0.0
        %1391 = vmatprep.subr.mxu0 0.0
        %1392 = vmatpush1.xpose.msra.mxu0 0.0
        %1393 = vmatprep.subr.mxu0 0.0
        %1394 = vmatpush1.xpose.msra.mxu0 0.0
        %1395 = vmatprep.subr.mxu0 0.0
        %1396 = vmatpush1.xpose.msra.mxu0 0.0
        %1397 = vmatprep.subr.mxu0 0.0
        %1398 = vmatpush1.xpose.msra.mxu0 0.0
        %1399 = vmatprep.subr.mxu0 0.0
        %1400 = vmatpush1.xpose.msra.mxu0 0.0
        %1401 = vmatprep.subr.mxu0 0.0
        %1402 = vmatpush1.xpose.msra.mxu0 0.0
        %1403 = vmatprep.subr.mxu0 0.0
        %1404 = vmatpush1.xpose.msra.mxu0 0.0
        %1405 = vmatprep.subr.mxu0 0.0
        %1406 = vmatpush1.xpose.msra.mxu0 0.0
        %1407 = vmatprep.subr.mxu0 0.0
        %1408 = vmatpush1.xpose.msra.mxu0 0.0
        %1409 = vmatprep.subr.mxu0 0.0
        %1410 = vmatpush1.xpose.msra.mxu0 0.0
        %1411 = vmatprep.subr.mxu0 0.0
        %1412 = vmatpush1.xpose.msra.mxu0 0.0
        %1413 = vmatprep.subr.mxu0 0.0
        %1414 = vmatpush1.xpose.msra.mxu0 0.0
        %1415 = vmatprep.subr.mxu0 0.0
        %1416 = vmatpush1.xpose.msra.mxu0 0.0
        %1417 = vmatprep.subr.mxu0 0.0
        %1418 = vmatpush1.xpose.msra.mxu0 0.0
        %1419 = vmatprep.subr.mxu0 0.0
        %1420 = vmatpush1.xpose.msra.mxu0 0.0
        %1421 = vmatprep.subr.mxu0 0.0
        %1422 = vmatpush1.xpose.msra.mxu0 0.0
        %1423 = vmatprep.subr.mxu0 0.0
        %1424 = vmatpush1.xpose.msra.mxu0 0.0
        %1425 = vmatprep.subr.mxu0 0.0
        %1426 = vmatpush1.xpose.msra.mxu0 0.0
        %1427 = vmatprep.subr.mxu0 0.0
        %1428 = vmatpush1.xpose.msra.mxu0 0.0
        %1429 = vmatprep.subr.mxu0 0.0
        %1430 = vmatpush1.xpose.msra.mxu0 0.0
        %1431 = vmatprep.subr.mxu0 0.0
        %1432 = vmatpush1.xpose.msra.mxu0 0.0
        %1433 = vmatprep.mubr.f32.mxu0 0.0
        %1434 = vmatmul.mubr.f32.gmra.mrb[0].mxu0 %v1364
        %v1435 = vpop.f32.mrb[0].mxu0
        %v1436 = vadd.f32 0.0, %v1435
        %v1437 = vpop.f32.mrb[0].mxu0
        %1438 = vdwg.mxu0
        %v1440 = vsel %vm1210, %v1201, 0
        %v1443 = vsel %vm1210, %v1205, 0
        %1445 = vmatprep.subr.mxu0 0.0
        %1446 = vmatpush1.xpose.msra.mxu0 %v1443
        %1447 = vmatprep.subr.mxu0 0.0
        %1448 = vmatpush1.xpose.msra.mxu0 0.0
        %1449 = vmatprep.subr.mxu0 0.0
        %1450 = vmatpush1.xpose.msra.mxu0 0.0
        %1451 = vmatprep.subr.mxu0 0.0
        %1452 = vmatpush1.xpose.msra.mxu0 0.0
        %1453 = vmatprep.subr.mxu0 0.0
        %1454 = vmatpush1.xpose.msra.mxu0 0.0
        %1455 = vmatprep.subr.mxu0 0.0
        %1456 = vmatpush1.xpose.msra.mxu0 0.0
        %1457 = vmatprep.subr.mxu0 0.0
        %1458 = vmatpush1.xpose.msra.mxu0 0.0
        %1459 = vmatprep.subr.mxu0 0.0
        %1460 = vmatpush1.xpose.msra.mxu0 0.0
        %1461 = vmatprep.subr.mxu0 0.0
        %1462 = vmatpush1.xpose.msra.mxu0 0.0
        %1463 = vmatprep.subr.mxu0 0.0
        %1464 = vmatpush1.xpose.msra.mxu0 0.0
        %1465 = vmatprep.subr.mxu0 0.0
        %1466 = vmatpush1.xpose.msra.mxu0 0.0
        %1467 = vmatprep.subr.mxu0 0.0
        %1468 = vmatpush1.xpose.msra.mxu0 0.0
        %1469 = vmatprep.subr.mxu0 0.0
        %1470 = vmatpush1.xpose.msra.mxu0 0.0
        %1471 = vmatprep.subr.mxu0 0.0
        %1472 = vmatpush1.xpose.msra.mxu0 0.0
        %1473 = vmatprep.subr.mxu0 0.0
        %1474 = vmatpush1.xpose.msra.mxu0 0.0
        %1475 = vmatprep.subr.mxu0 0.0
        %1476 = vmatpush1.xpose.msra.mxu0 0.0
        %1477 = vmatprep.subr.mxu0 0.0
        %1478 = vmatpush1.xpose.msra.mxu0 0.0
        %1479 = vmatprep.subr.mxu0 0.0
        %1480 = vmatpush1.xpose.msra.mxu0 0.0
        %1481 = vmatprep.subr.mxu0 0.0
        %1482 = vmatpush1.xpose.msra.mxu0 0.0
        %1483 = vmatprep.subr.mxu0 0.0
        %1484 = vmatpush1.xpose.msra.mxu0 0.0
        %1485 = vmatprep.subr.mxu0 0.0
        %1486 = vmatpush1.xpose.msra.mxu0 0.0
        %1487 = vmatprep.subr.mxu0 0.0
        %1488 = vmatpush1.xpose.msra.mxu0 0.0
        %1489 = vmatprep.subr.mxu0 0.0
        %1490 = vmatpush1.xpose.msra.mxu0 0.0
        %1491 = vmatprep.subr.mxu0 0.0
        %1492 = vmatpush1.xpose.msra.mxu0 0.0
        %1493 = vmatprep.subr.mxu0 0.0
        %1494 = vmatpush1.xpose.msra.mxu0 0.0
        %1495 = vmatprep.subr.mxu0 0.0
        %1496 = vmatpush1.xpose.msra.mxu0 0.0
        %1497 = vmatprep.subr.mxu0 0.0
        %1498 = vmatpush1.xpose.msra.mxu0 0.0
        %1499 = vmatprep.subr.mxu0 0.0
        %1500 = vmatpush1.xpose.msra.mxu0 0.0
        %1501 = vmatprep.subr.mxu0 0.0
        %1502 = vmatpush1.xpose.msra.mxu0 0.0
        %1503 = vmatprep.subr.mxu0 0.0
        %1504 = vmatpush1.xpose.msra.mxu0 0.0
        %1505 = vmatprep.subr.mxu0 0.0
        %1506 = vmatpush1.xpose.msra.mxu0 0.0
        %1507 = vmatprep.subr.mxu0 0.0
        %1508 = vmatpush1.xpose.msra.mxu0 0.0
        %1509 = vmatprep.mubr.f32.mxu0 0.0
        %1510 = vmatmul.mubr.f32.gmra.mrb[0].mxu0 %v1440
        %v1511 = vpop.f32.mrb[0].mxu0
        %v1512 = vadd.f32 0.0, %v1511
        %v1513 = vpop.f32.mrb[0].mxu0
        %1514 = vdwg.mxu0
        %v1515 = vsel %vm1210, %v1284, -inf
        %1516 = vmax.xlane.f32.xlu0 %v1515
        %v1517 = vpop.xlane.xlu0 %1516
        %v1518 = vsel %vm1210, %v1360, -inf
        %1519 = vmax.xlane.f32.xlu0 %v1518
        %v1520 = vpop.xlane.xlu0 %1519
        %v1521 = vsel %vm1210, %v1436, -inf
        %1522 = vmax.xlane.f32.xlu0 %v1521
        %v1523 = vpop.xlane.xlu0 %1522
        %v1524 = vsel %vm1210, %v1512, -inf
        %1525 = vmax.xlane.f32.xlu0 %v1524
        %v1526 = vpop.xlane.xlu0 %1525
        %v1527 = vsub.f32 -inf, %v1517
        %v1528 = vsub.f32 -inf, %v1520
        %v1529 = vsub.f32 -inf, %v1523
        %v1530 = vsub.f32 -inf, %v1526
        %v1531 = vmul.f32 %v1527, 1.442695
        %v1532 = vpow.pop %v1531
        %v1533 = vmul.f32 %v1528, 1.442695
        %v1534 = vpow.pop %v1533
        %v1535 = vmul.f32 %v1529, 1.442695
        %v1536 = vpow.pop %v1535
        %v1537 = vmul.f32 %v1530, 1.442695
        %v1538 = vpow.pop %v1537
        %v1539 = vsub.f32 %v1284, %v1517
        %v1540 = vsub.f32 %v1360, %v1520
        %v1541 = vsub.f32 %v1436, %v1523
        %v1542 = vsub.f32 %v1512, %v1526
        %v1543 = vmul.f32 %v1539, 1.442695
        %v1544 = vpow.pop %v1543
        %v1545 = vmul.f32 %v1540, 1.442695
        %v1546 = vpow.pop %v1545
        %v1547 = vmul.f32 %v1541, 1.442695
        %v1548 = vpow.pop %v1547
        %v1549 = vmul.f32 %v1542, 1.442695
        %v1550 = vpow.pop %v1549
        %v1551 = vmul.f32 %v1532, 0.0
        %v1552 = vmul.f32 %v1534, 0.0
        %v1553 = vmul.f32 %v1536, 0.0
        %v1554 = vmul.f32 %v1538, 0.0
        %v1555 = vsel %vm1210, %v1544, 0.0
        %1556 = vadd.xlane.f32.xlu0 %v1555
        %v1557 = vpop.xlane.xlu0 %1556
        %v1558 = vsel %vm1210, %v1546, 0.0
        %1559 = vadd.xlane.f32.xlu0 %v1558
        %v1560 = vpop.xlane.xlu0 %1559
        %v1561 = vsel %vm1210, %v1548, 0.0
        %1562 = vadd.xlane.f32.xlu0 %v1561
        %v1563 = vpop.xlane.xlu0 %1562
        %v1564 = vsel %vm1210, %v1550, 0.0
        %1565 = vadd.xlane.f32.xlu0 %v1564
        %v1566 = vpop.xlane.xlu0 %1565
        %v1567 = vadd.f32 %v1551, %v1557
        %v1568 = vadd.f32 %v1552, %v1560
        %v1569 = vadd.f32 %v1553, %v1563
        %v1570 = vadd.f32 %v1554, %v1566
        %v1572 = vsel %vm1210, %v1544, 0
        %1574 = vmatprep.subr.mxu0 0.0
        %1575 = vmatpush1.msra.mxu0 %v1206
        %1576 = vmatprep.subr.mxu0 0.0
        %1577 = vmatpush1.msra.mxu0 0.0
        %1578 = vmatprep.subr.mxu0 0.0
        %1579 = vmatpush1.msra.mxu0 0.0
        %1580 = vmatprep.subr.mxu0 0.0
        %1581 = vmatpush1.msra.mxu0 0.0
        %1582 = vmatprep.subr.mxu0 0.0
        %1583 = vmatpush1.msra.mxu0 0.0
        %1584 = vmatprep.subr.mxu0 0.0
        %1585 = vmatpush1.msra.mxu0 0.0
        %1586 = vmatprep.subr.mxu0 0.0
        %1587 = vmatpush1.msra.mxu0 0.0
        %1588 = vmatprep.subr.mxu0 0.0
        %1589 = vmatpush1.msra.mxu0 0.0
        %1590 = vmatprep.subr.mxu0 0.0
        %1591 = vmatpush1.msra.mxu0 0.0
        %1592 = vmatprep.subr.mxu0 0.0
        %1593 = vmatpush1.msra.mxu0 0.0
        %1594 = vmatprep.subr.mxu0 0.0
        %1595 = vmatpush1.msra.mxu0 0.0
        %1596 = vmatprep.subr.mxu0 0.0
        %1597 = vmatpush1.msra.mxu0 0.0
        %1598 = vmatprep.subr.mxu0 0.0
        %1599 = vmatpush1.msra.mxu0 0.0
        %1600 = vmatprep.subr.mxu0 0.0
        %1601 = vmatpush1.msra.mxu0 0.0
        %1602 = vmatprep.subr.mxu0 0.0
        %1603 = vmatpush1.msra.mxu0 0.0
        %1604 = vmatprep.subr.mxu0 0.0
        %1605 = vmatpush1.msra.mxu0 0.0
        %1606 = vmatprep.subr.mxu0 0.0
        %1607 = vmatpush1.msra.mxu0 0.0
        %1608 = vmatprep.subr.mxu0 0.0
        %1609 = vmatpush1.msra.mxu0 0.0
        %1610 = vmatprep.subr.mxu0 0.0
        %1611 = vmatpush1.msra.mxu0 0.0
        %1612 = vmatprep.subr.mxu0 0.0
        %1613 = vmatpush1.msra.mxu0 0.0
        %1614 = vmatprep.subr.mxu0 0.0
        %1615 = vmatpush1.msra.mxu0 0.0
        %1616 = vmatprep.subr.mxu0 0.0
        %1617 = vmatpush1.msra.mxu0 0.0
        %1618 = vmatprep.subr.mxu0 0.0
        %1619 = vmatpush1.msra.mxu0 0.0
        %1620 = vmatprep.subr.mxu0 0.0
        %1621 = vmatpush1.msra.mxu0 0.0
        %1622 = vmatprep.subr.mxu0 0.0
        %1623 = vmatpush1.msra.mxu0 0.0
        %1624 = vmatprep.subr.mxu0 0.0
        %1625 = vmatpush1.msra.mxu0 0.0
        %1626 = vmatprep.subr.mxu0 0.0
        %1627 = vmatpush1.msra.mxu0 0.0
        %1628 = vmatprep.subr.mxu0 0.0
        %1629 = vmatpush1.msra.mxu0 0.0
        %1630 = vmatprep.subr.mxu0 0.0
        %1631 = vmatpush1.msra.mxu0 0.0
        %1632 = vmatprep.subr.mxu0 0.0
        %1633 = vmatpush1.msra.mxu0 0.0
        %1634 = vmatprep.subr.mxu0 0.0
        %1635 = vmatpush1.msra.mxu0 0.0
        %1636 = vmatprep.subr.mxu0 0.0
        %1637 = vmatpush1.msra.mxu0 0.0
        %1638 = vmatprep.mubr.f32.mxu0 0.0
        %1639 = vmatmul.mubr.f32.gmra.mrb[0].mxu0 %v1572
        %v1640 = vpop.f32.mrb[0].mxu0
        %v1641 = vadd.f32 0.0, %v1640
        %v1642 = vpop.f32.mrb[0].mxu0
        %1643 = vdwg.mxu0
        %v1645 = vsel %vm1210, %v1546, 0
        %1647 = vmatprep.subr.mxu0 0.0
        %1648 = vmatpush1.msra.mxu0 %v1207
        %1649 = vmatprep.subr.mxu0 0.0
        %1650 = vmatpush1.msra.mxu0 0.0
        %1651 = vmatprep.subr.mxu0 0.0
        %1652 = vmatpush1.msra.mxu0 0.0
        %1653 = vmatprep.subr.mxu0 0.0
        %1654 = vmatpush1.msra.mxu0 0.0
        %1655 = vmatprep.subr.mxu0 0.0
        %1656 = vmatpush1.msra.mxu0 0.0
        %1657 = vmatprep.subr.mxu0 0.0
        %1658 = vmatpush1.msra.mxu0 0.0
        %1659 = vmatprep.subr.mxu0 0.0
        %1660 = vmatpush1.msra.mxu0 0.0
        %1661 = vmatprep.subr.mxu0 0.0
        %1662 = vmatpush1.msra.mxu0 0.0
        %1663 = vmatprep.subr.mxu0 0.0
        %1664 = vmatpush1.msra.mxu0 0.0
        %1665 = vmatprep.subr.mxu0 0.0
        %1666 = vmatpush1.msra.mxu0 0.0
        %1667 = vmatprep.subr.mxu0 0.0
        %1668 = vmatpush1.msra.mxu0 0.0
        %1669 = vmatprep.subr.mxu0 0.0
        %1670 = vmatpush1.msra.mxu0 0.0
        %1671 = vmatprep.subr.mxu0 0.0
        %1672 = vmatpush1.msra.mxu0 0.0
        %1673 = vmatprep.subr.mxu0 0.0
        %1674 = vmatpush1.msra.mxu0 0.0
        %1675 = vmatprep.subr.mxu0 0.0
        %1676 = vmatpush1.msra.mxu0 0.0
        %1677 = vmatprep.subr.mxu0 0.0
        %1678 = vmatpush1.msra.mxu0 0.0
        %1679 = vmatprep.subr.mxu0 0.0
        %1680 = vmatpush1.msra.mxu0 0.0
        %1681 = vmatprep.subr.mxu0 0.0
        %1682 = vmatpush1.msra.mxu0 0.0
        %1683 = vmatprep.subr.mxu0 0.0
        %1684 = vmatpush1.msra.mxu0 0.0
        %1685 = vmatprep.subr.mxu0 0.0
        %1686 = vmatpush1.msra.mxu0 0.0
        %1687 = vmatprep.subr.mxu0 0.0
        %1688 = vmatpush1.msra.mxu0 0.0
        %1689 = vmatprep.subr.mxu0 0.0
        %1690 = vmatpush1.msra.mxu0 0.0
        %1691 = vmatprep.subr.mxu0 0.0
        %1692 = vmatpush1.msra.mxu0 0.0
        %1693 = vmatprep.subr.mxu0 0.0
        %1694 = vmatpush1.msra.mxu0 0.0
        %1695 = vmatprep.subr.mxu0 0.0
        %1696 = vmatpush1.msra.mxu0 0.0
        %1697 = vmatprep.subr.mxu0 0.0
        %1698 = vmatpush1.msra.mxu0 0.0
        %1699 = vmatprep.subr.mxu0 0.0
        %1700 = vmatpush1.msra.mxu0 0.0
        %1701 = vmatprep.subr.mxu0 0.0
        %1702 = vmatpush1.msra.mxu0 0.0
        %1703 = vmatprep.subr.mxu0 0.0
        %1704 = vmatpush1.msra.mxu0 0.0
        %1705 = vmatprep.subr.mxu0 0.0
        %1706 = vmatpush1.msra.mxu0 0.0
        %1707 = vmatprep.subr.mxu0 0.0
        %1708 = vmatpush1.msra.mxu0 0.0
        %1709 = vmatprep.subr.mxu0 0.0
        %1710 = vmatpush1.msra.mxu0 0.0
        %1711 = vmatprep.mubr.f32.mxu0 0.0
        %1712 = vmatmul.mubr.f32.gmra.mrb[0].mxu0 %v1645
        %v1713 = vpop.f32.mrb[0].mxu0
        %v1714 = vadd.f32 0.0, %v1713
        %v1715 = vpop.f32.mrb[0].mxu0
        %1716 = vdwg.mxu0
        %v1718 = vsel %vm1210, %v1548, 0
        %1720 = vmatprep.subr.mxu0 0.0
        %1721 = vmatpush1.msra.mxu0 %v1208
        %1722 = vmatprep.subr.mxu0 0.0
        %1723 = vmatpush1.msra.mxu0 0.0
        %1724 = vmatprep.subr.mxu0 0.0
        %1725 = vmatpush1.msra.mxu0 0.0
        %1726 = vmatprep.subr.mxu0 0.0
        %1727 = vmatpush1.msra.mxu0 0.0
        %1728 = vmatprep.subr.mxu0 0.0
        %1729 = vmatpush1.msra.mxu0 0.0
        %1730 = vmatprep.subr.mxu0 0.0
        %1731 = vmatpush1.msra.mxu0 0.0
        %1732 = vmatprep.subr.mxu0 0.0
        %1733 = vmatpush1.msra.mxu0 0.0
        %1734 = vmatprep.subr.mxu0 0.0
        %1735 = vmatpush1.msra.mxu0 0.0
        %1736 = vmatprep.subr.mxu0 0.0
        %1737 = vmatpush1.msra.mxu0 0.0
        %1738 = vmatprep.subr.mxu0 0.0
        %1739 = vmatpush1.msra.mxu0 0.0
        %1740 = vmatprep.subr.mxu0 0.0
        %1741 = vmatpush1.msra.mxu0 0.0
        %1742 = vmatprep.subr.mxu0 0.0
        %1743 = vmatpush1.msra.mxu0 0.0
        %1744 = vmatprep.subr.mxu0 0.0
        %1745 = vmatpush1.msra.mxu0 0.0
        %1746 = vmatprep.subr.mxu0 0.0
        %1747 = vmatpush1.msra.mxu0 0.0
        %1748 = vmatprep.subr.mxu0 0.0
        %1749 = vmatpush1.msra.mxu0 0.0
        %1750 = vmatprep.subr.mxu0 0.0
        %1751 = vmatpush1.msra.mxu0 0.0
        %1752 = vmatprep.subr.mxu0 0.0
        %1753 = vmatpush1.msra.mxu0 0.0
        %1754 = vmatprep.subr.mxu0 0.0
        %1755 = vmatpush1.msra.mxu0 0.0
        %1756 = vmatprep.subr.mxu0 0.0
        %1757 = vmatpush1.msra.mxu0 0.0
        %1758 = vmatprep.subr.mxu0 0.0
        %1759 = vmatpush1.msra.mxu0 0.0
        %1760 = vmatprep.subr.mxu0 0.0
        %1761 = vmatpush1.msra.mxu0 0.0
        %1762 = vmatprep.subr.mxu0 0.0
        %1763 = vmatpush1.msra.mxu0 0.0
        %1764 = vmatprep.subr.mxu0 0.0
        %1765 = vmatpush1.msra.mxu0 0.0
        %1766 = vmatprep.subr.mxu0 0.0
        %1767 = vmatpush1.msra.mxu0 0.0
        %1768 = vmatprep.subr.mxu0 0.0
        %1769 = vmatpush1.msra.mxu0 0.0
        %1770 = vmatprep.subr.mxu0 0.0
        %1771 = vmatpush1.msra.mxu0 0.0
        %1772 = vmatprep.subr.mxu0 0.0
        %1773 = vmatpush1.msra.mxu0 0.0
        %1774 = vmatprep.subr.mxu0 0.0
        %1775 = vmatpush1.msra.mxu0 0.0
        %1776 = vmatprep.subr.mxu0 0.0
        %1777 = vmatpush1.msra.mxu0 0.0
        %1778 = vmatprep.subr.mxu0 0.0
        %1779 = vmatpush1.msra.mxu0 0.0
        %1780 = vmatprep.subr.mxu0 0.0
        %1781 = vmatpush1.msra.mxu0 0.0
        %1782 = vmatprep.subr.mxu0 0.0
        %1783 = vmatpush1.msra.mxu0 0.0
        %1784 = vmatprep.mubr.f32.mxu0 0.0
        %1785 = vmatmul.mubr.f32.gmra.mrb[0].mxu0 %v1718
        %v1786 = vpop.f32.mrb[0].mxu0
        %v1787 = vadd.f32 0.0, %v1786
        %v1788 = vpop.f32.mrb[0].mxu0
        %1789 = vdwg.mxu0
        %v1791 = vsel %vm1210, %v1550, 0
        %1793 = vmatprep.subr.mxu0 0.0
        %1794 = vmatpush1.msra.mxu0 %v1209
        %1795 = vmatprep.subr.mxu0 0.0
        %1796 = vmatpush1.msra.mxu0 0.0
        %1797 = vmatprep.subr.mxu0 0.0
        %1798 = vmatpush1.msra.mxu0 0.0
        %1799 = vmatprep.subr.mxu0 0.0
        %1800 = vmatpush1.msra.mxu0 0.0
        %1801 = vmatprep.subr.mxu0 0.0
        %1802 = vmatpush1.msra.mxu0 0.0
        %1803 = vmatprep.subr.mxu0 0.0
        %1804 = vmatpush1.msra.mxu0 0.0
        %1805 = vmatprep.subr.mxu0 0.0
        %1806 = vmatpush1.msra.mxu0 0.0
        %1807 = vmatprep.subr.mxu0 0.0
        %1808 = vmatpush1.msra.mxu0 0.0
        %1809 = vmatprep.subr.mxu0 0.0
        %1810 = vmatpush1.msra.mxu0 0.0
        %1811 = vmatprep.subr.mxu0 0.0
        %1812 = vmatpush1.msra.mxu0 0.0
        %1813 = vmatprep.subr.mxu0 0.0
        %1814 = vmatpush1.msra.mxu0 0.0
        %1815 = vmatprep.subr.mxu0 0.0
        %1816 = vmatpush1.msra.mxu0 0.0
        %1817 = vmatprep.subr.mxu0 0.0
        %1818 = vmatpush1.msra.mxu0 0.0
        %1819 = vmatprep.subr.mxu0 0.0
        %1820 = vmatpush1.msra.mxu0 0.0
        %1821 = vmatprep.subr.mxu0 0.0
        %1822 = vmatpush1.msra.mxu0 0.0
        %1823 = vmatprep.subr.mxu0 0.0
        %1824 = vmatpush1.msra.mxu0 0.0
        %1825 = vmatprep.subr.mxu0 0.0
        %1826 = vmatpush1.msra.mxu0 0.0
        %1827 = vmatprep.subr.mxu0 0.0
        %1828 = vmatpush1.msra.mxu0 0.0
        %1829 = vmatprep.subr.mxu0 0.0
        %1830 = vmatpush1.msra.mxu0 0.0
        %1831 = vmatprep.subr.mxu0 0.0
        %1832 = vmatpush1.msra.mxu0 0.0
        %1833 = vmatprep.subr.mxu0 0.0
        %1834 = vmatpush1.msra.mxu0 0.0
        %1835 = vmatprep.subr.mxu0 0.0
        %1836 = vmatpush1.msra.mxu0 0.0
        %1837 = vmatprep.subr.mxu0 0.0
        %1838 = vmatpush1.msra.mxu0 0.0
        %1839 = vmatprep.subr.mxu0 0.0
        %1840 = vmatpush1.msra.mxu0 0.0
        %1841 = vmatprep.subr.mxu0 0.0
        %1842 = vmatpush1.msra.mxu0 0.0
        %1843 = vmatprep.subr.mxu0 0.0
        %1844 = vmatpush1.msra.mxu0 0.0
        %1845 = vmatprep.subr.mxu0 0.0
        %1846 = vmatpush1.msra.mxu0 0.0
        %1847 = vmatprep.subr.mxu0 0.0
        %1848 = vmatpush1.msra.mxu0 0.0
        %1849 = vmatprep.subr.mxu0 0.0
        %1850 = vmatpush1.msra.mxu0 0.0
        %1851 = vmatprep.subr.mxu0 0.0
        %1852 = vmatpush1.msra.mxu0 0.0
        %1853 = vmatprep.subr.mxu0 0.0
        %1854 = vmatpush1.msra.mxu0 0.0
        %1855 = vmatprep.subr.mxu0 0.0
        %1856 = vmatpush1.msra.mxu0 0.0
        %1857 = vmatprep.mubr.f32.mxu0 0.0
        %1858 = vmatmul.mubr.f32.gmra.mrb[0].mxu0 %v1791
        %v1859 = vpop.f32.mrb[0].mxu0
        %v1860 = vadd.f32 0.0, %v1859
        %v1861 = vpop.f32.mrb[0].mxu0
        %1862 = vdwg.mxu0
        %v1863 = vadd.f32 %v1551, %v1641
        %v1864 = vadd.f32 %v1552, %v1714
        %v1865 = vadd.f32 %v1553, %v1787
        %v1866 = vadd.f32 %v1554, %v1860
        %v1867 = vrcp.pop %v1567
        %v1868 = vrcp.pop %v1568
        %v1869 = vrcp.pop %v1569
        %v1870 = vrcp.pop %v1570
        %v1871 = vmul.f32 %v1863, %v1867
        %v1872 = vmul.f32 %v1864, %v1868
        %v1873 = vmul.f32 %v1865, %v1869
        %v1874 = vmul.f32 %v1866, %v1870
        %v1875 = vld [vmem:[%s4] sm:$0xff]
        %v1876 = vld [vmem:[%s4 + $0x8] sm:$0xff]
        %v1877 = vld [vmem:[%s4 + $0x10] sm:$0xff]
        %v1878 = vld [vmem:[%s4 + $0x18] sm:$0xff]
        %v1880 = vsel %vm1210, %v1871, 0
        %1882 = vmatprep.subr.mxu0 0.0
        %1883 = vmatpush1.msra.mxu0 %v1875
        %1884 = vmatprep.subr.mxu0 0.0
        %1885 = vmatpush1.msra.mxu0 0.0
        %1886 = vmatprep.subr.mxu0 0.0
        %1887 = vmatpush1.msra.mxu0 0.0
        %1888 = vmatprep.subr.mxu0 0.0
        %1889 = vmatpush1.msra.mxu0 0.0
        %1890 = vmatprep.subr.mxu0 0.0
        %1891 = vmatpush1.msra.mxu0 0.0
        %1892 = vmatprep.subr.mxu0 0.0
        %1893 = vmatpush1.msra.mxu0 0.0
        %1894 = vmatprep.subr.mxu0 0.0
        %1895 = vmatpush1.msra.mxu0 0.0
        %1896 = vmatprep.subr.mxu0 0.0
        %1897 = vmatpush1.msra.mxu0 0.0
        %1898 = vmatprep.subr.mxu0 0.0
        %1899 = vmatpush1.msra.mxu0 0.0
        %1900 = vmatprep.subr.mxu0 0.0
        %1901 = vmatpush1.msra.mxu0 0.0
        %1902 = vmatprep.subr.mxu0 0.0
        %1903 = vmatpush1.msra.mxu0 0.0
        %1904 = vmatprep.subr.mxu0 0.0
        %1905 = vmatpush1.msra.mxu0 0.0
        %1906 = vmatprep.subr.mxu0 0.0
        %1907 = vmatpush1.msra.mxu0 0.0
        %1908 = vmatprep.subr.mxu0 0.0
        %1909 = vmatpush1.msra.mxu0 0.0
        %1910 = vmatprep.subr.mxu0 0.0
        %1911 = vmatpush1.msra.mxu0 0.0
        %1912 = vmatprep.subr.mxu0 0.0
        %1913 = vmatpush1.msra.mxu0 0.0
        %1914 = vmatprep.subr.mxu0 0.0
        %1915 = vmatpush1.msra.mxu0 0.0
        %1916 = vmatprep.subr.mxu0 0.0
        %1917 = vmatpush1.msra.mxu0 0.0
        %1918 = vmatprep.subr.mxu0 0.0
        %1919 = vmatpush1.msra.mxu0 0.0
        %1920 = vmatprep.subr.mxu0 0.0
        %1921 = vmatpush1.msra.mxu0 0.0
        %1922 = vmatprep.subr.mxu0 0.0
        %1923 = vmatpush1.msra.mxu0 0.0
        %1924 = vmatprep.subr.mxu0 0.0
        %1925 = vmatpush1.msra.mxu0 0.0
        %1926 = vmatprep.subr.mxu0 0.0
        %1927 = vmatpush1.msra.mxu0 0.0
        %1928 = vmatprep.subr.mxu0 0.0
        %1929 = vmatpush1.msra.mxu0 0.0
        %1930 = vmatprep.subr.mxu0 0.0
        %1931 = vmatpush1.msra.mxu0 0.0
        %1932 = vmatprep.subr.mxu0 0.0
        %1933 = vmatpush1.msra.mxu0 0.0
        %1934 = vmatprep.subr.mxu0 0.0
        %1935 = vmatpush1.msra.mxu0 0.0
        %1936 = vmatprep.subr.mxu0 0.0
        %1937 = vmatpush1.msra.mxu0 0.0
        %1938 = vmatprep.subr.mxu0 0.0
        %1939 = vmatpush1.msra.mxu0 0.0
        %1940 = vmatprep.subr.mxu0 0.0
        %1941 = vmatpush1.msra.mxu0 0.0
        %1942 = vmatprep.subr.mxu0 0.0
        %1943 = vmatpush1.msra.mxu0 0.0
        %1944 = vmatprep.subr.mxu0 0.0
        %1945 = vmatpush1.msra.mxu0 0.0
        %1946 = vmatprep.mubr.f32.mxu0 0.0
        %1947 = vmatmul.mubr.f32.gmra.mrb[0].mxu0 %v1880
        %v1948 = vpop.f32.mrb[0].mxu0
        %v1949 = vadd.f32 0.0, %v1948
        %v1950 = vpop.f32.mrb[0].mxu0
        %1951 = vdwg.mxu0
        %v1953 = vsel %vm1210, %v1872, 0
        %1955 = vmatprep.subr.mxu0 0.0
        %1956 = vmatpush1.msra.mxu0 %v1876
        %1957 = vmatprep.subr.mxu0 0.0
        %1958 = vmatpush1.msra.mxu0 0.0
        %1959 = vmatprep.subr.mxu0 0.0
        %1960 = vmatpush1.msra.mxu0 0.0
        %1961 = vmatprep.subr.mxu0 0.0
        %1962 = vmatpush1.msra.mxu0 0.0
        %1963 = vmatprep.subr.mxu0 0.0
        %1964 = vmatpush1.msra.mxu0 0.0
        %1965 = vmatprep.subr.mxu0 0.0
        %1966 = vmatpush1.msra.mxu0 0.0
        %1967 = vmatprep.subr.mxu0 0.0
        %1968 = vmatpush1.msra.mxu0 0.0
        %1969 = vmatprep.subr.mxu0 0.0
        %1970 = vmatpush1.msra.mxu0 0.0
        %1971 = vmatprep.subr.mxu0 0.0
        %1972 = vmatpush1.msra.mxu0 0.0
        %1973 = vmatprep.subr.mxu0 0.0
        %1974 = vmatpush1.msra.mxu0 0.0
        %1975 = vmatprep.subr.mxu0 0.0
        %1976 = vmatpush1.msra.mxu0 0.0
        %1977 = vmatprep.subr.mxu0 0.0
        %1978 = vmatpush1.msra.mxu0 0.0
        %1979 = vmatprep.subr.mxu0 0.0
        %1980 = vmatpush1.msra.mxu0 0.0
        %1981 = vmatprep.subr.mxu0 0.0
        %1982 = vmatpush1.msra.mxu0 0.0
        %1983 = vmatprep.subr.mxu0 0.0
        %1984 = vmatpush1.msra.mxu0 0.0
        %1985 = vmatprep.subr.mxu0 0.0
        %1986 = vmatpush1.msra.mxu0 0.0
        %1987 = vmatprep.subr.mxu0 0.0
        %1988 = vmatpush1.msra.mxu0 0.0
        %1989 = vmatprep.subr.mxu0 0.0
        %1990 = vmatpush1.msra.mxu0 0.0
        %1991 = vmatprep.subr.mxu0 0.0
        %1992 = vmatpush1.msra.mxu0 0.0
        %1993 = vmatprep.subr.mxu0 0.0
        %1994 = vmatpush1.msra.mxu0 0.0
        %1995 = vmatprep.subr.mxu0 0.0
        %1996 = vmatpush1.msra.mxu0 0.0
        %1997 = vmatprep.subr.mxu0 0.0
        %1998 = vmatpush1.msra.mxu0 0.0
        %1999 = vmatprep.subr.mxu0 0.0
        %2000 = vmatpush1.msra.mxu0 0.0
        %2001 = vmatprep.subr.mxu0 0.0
        %2002 = vmatpush1.msra.mxu0 0.0
        %2003 = vmatprep.subr.mxu0 0.0
        %2004 = vmatpush1.msra.mxu0 0.0
        %2005 = vmatprep.subr.mxu0 0.0
        %2006 = vmatpush1.msra.mxu0 0.0
        %2007 = vmatprep.subr.mxu0 0.0
        %2008 = vmatpush1.msra.mxu0 0.0
        %2009 = vmatprep.subr.mxu0 0.0
        %2010 = vmatpush1.msra.mxu0 0.0
        %2011 = vmatprep.subr.mxu0 0.0
        %2012 = vmatpush1.msra.mxu0 0.0
        %2013 = vmatprep.subr.mxu0 0.0
        %2014 = vmatpush1.msra.mxu0 0.0
        %2015 = vmatprep.subr.mxu0 0.0
        %2016 = vmatpush1.msra.mxu0 0.0
        %2017 = vmatprep.subr.mxu0 0.0
        %2018 = vmatpush1.msra.mxu0 0.0
        %2019 = vmatprep.mubr.f32.mxu0 0.0
        %2020 = vmatmul.mubr.f32.gmra.mrb[0].mxu0 %v1953
        %v2021 = vpop.f32.mrb[0].mxu0
        %v2022 = vadd.f32 0.0, %v2021
        %v2023 = vpop.f32.mrb[0].mxu0
        %2024 = vdwg.mxu0
        %v2026 = vsel %vm1210, %v1873, 0
        %2028 = vmatprep.subr.mxu0 0.0
        %2029 = vmatpush1.msra.mxu0 %v1877
        %2030 = vmatprep.subr.mxu0 0.0
        %2031 = vmatpush1.msra.mxu0 0.0
        %2032 = vmatprep.subr.mxu0 0.0
        %2033 = vmatpush1.msra.mxu0 0.0
        %2034 = vmatprep.subr.mxu0 0.0
        %2035 = vmatpush1.msra.mxu0 0.0
        %2036 = vmatprep.subr.mxu0 0.0
        %2037 = vmatpush1.msra.mxu0 0.0
        %2038 = vmatprep.subr.mxu0 0.0
        %2039 = vmatpush1.msra.mxu0 0.0
        %2040 = vmatprep.subr.mxu0 0.0
        %2041 = vmatpush1.msra.mxu0 0.0
        %2042 = vmatprep.subr.mxu0 0.0
        %2043 = vmatpush1.msra.mxu0 0.0
        %2044 = vmatprep.subr.mxu0 0.0
        %2045 = vmatpush1.msra.mxu0 0.0
        %2046 = vmatprep.subr.mxu0 0.0
        %2047 = vmatpush1.msra.mxu0 0.0
        %2048 = vmatprep.subr.mxu0 0.0
        %2049 = vmatpush1.msra.mxu0 0.0
        %2050 = vmatprep.subr.mxu0 0.0
        %2051 = vmatpush1.msra.mxu0 0.0
        %2052 = vmatprep.subr.mxu0 0.0
        %2053 = vmatpush1.msra.mxu0 0.0
        %2054 = vmatprep.subr.mxu0 0.0
        %2055 = vmatpush1.msra.mxu0 0.0
        %2056 = vmatprep.subr.mxu0 0.0
        %2057 = vmatpush1.msra.mxu0 0.0
        %2058 = vmatprep.subr.mxu0 0.0
        %2059 = vmatpush1.msra.mxu0 0.0
        %2060 = vmatprep.subr.mxu0 0.0
        %2061 = vmatpush1.msra.mxu0 0.0
        %2062 = vmatprep.subr.mxu0 0.0
        %2063 = vmatpush1.msra.mxu0 0.0
        %2064 = vmatprep.subr.mxu0 0.0
        %2065 = vmatpush1.msra.mxu0 0.0
        %2066 = vmatprep.subr.mxu0 0.0
        %2067 = vmatpush1.msra.mxu0 0.0
        %2068 = vmatprep.subr.mxu0 0.0
        %2069 = vmatpush1.msra.mxu0 0.0
        %2070 = vmatprep.subr.mxu0 0.0
        %2071 = vmatpush1.msra.mxu0 0.0
        %2072 = vmatprep.subr.mxu0 0.0
        %2073 = vmatpush1.msra.mxu0 0.0
        %2074 = vmatprep.subr.mxu0 0.0
        %2075 = vmatpush1.msra.mxu0 0.0
        %2076 = vmatprep.subr.mxu0 0.0
        %2077 = vmatpush1.msra.mxu0 0.0
        %2078 = vmatprep.subr.mxu0 0.0
        %2079 = vmatpush1.msra.mxu0 0.0
        %2080 = vmatprep.subr.mxu0 0.0
        %2081 = vmatpush1.msra.mxu0 0.0
        %2082 = vmatprep.subr.mxu0 0.0
        %2083 = vmatpush1.msra.mxu0 0.0
        %2084 = vmatprep.subr.mxu0 0.0
        %2085 = vmatpush1.msra.mxu0 0.0
        %2086 = vmatprep.subr.mxu0 0.0
        %2087 = vmatpush1.msra.mxu0 0.0
        %2088 = vmatprep.subr.mxu0 0.0
        %2089 = vmatpush1.msra.mxu0 0.0
        %2090 = vmatprep.subr.mxu0 0.0
        %2091 = vmatpush1.msra.mxu0 0.0
        %2092 = vmatprep.mubr.f32.mxu0 0.0
        %2093 = vmatmul.mubr.f32.gmra.mrb[0].mxu0 %v2026
        %v2094 = vpop.f32.mrb[0].mxu0
        %v2095 = vadd.f32 0.0, %v2094
        %v2096 = vpop.f32.mrb[0].mxu0
        %2097 = vdwg.mxu0
        %v2099 = vsel %vm1210, %v1874, 0
        %2101 = vmatprep.subr.mxu0 0.0
        %2102 = vmatpush1.msra.mxu0 %v1878
        %2103 = vmatprep.subr.mxu0 0.0
        %2104 = vmatpush1.msra.mxu0 0.0
        %2105 = vmatprep.subr.mxu0 0.0
        %2106 = vmatpush1.msra.mxu0 0.0
        %2107 = vmatprep.subr.mxu0 0.0
        %2108 = vmatpush1.msra.mxu0 0.0
        %2109 = vmatprep.subr.mxu0 0.0
        %2110 = vmatpush1.msra.mxu0 0.0
        %2111 = vmatprep.subr.mxu0 0.0
        %2112 = vmatpush1.msra.mxu0 0.0
        %2113 = vmatprep.subr.mxu0 0.0
        %2114 = vmatpush1.msra.mxu0 0.0
        %2115 = vmatprep.subr.mxu0 0.0
        %2116 = vmatpush1.msra.mxu0 0.0
        %2117 = vmatprep.subr.mxu0 0.0
        %2118 = vmatpush1.msra.mxu0 0.0
        %2119 = vmatprep.subr.mxu0 0.0
        %2120 = vmatpush1.msra.mxu0 0.0
        %2121 = vmatprep.subr.mxu0 0.0
        %2122 = vmatpush1.msra.mxu0 0.0
        %2123 = vmatprep.subr.mxu0 0.0
        %2124 = vmatpush1.msra.mxu0 0.0
        %2125 = vmatprep.subr.mxu0 0.0
        %2126 = vmatpush1.msra.mxu0 0.0
        %2127 = vmatprep.subr.mxu0 0.0
        %2128 = vmatpush1.msra.mxu0 0.0
        %2129 = vmatprep.subr.mxu0 0.0
        %2130 = vmatpush1.msra.mxu0 0.0
        %2131 = vmatprep.subr.mxu0 0.0
        %2132 = vmatpush1.msra.mxu0 0.0
        %2133 = vmatprep.subr.mxu0 0.0
        %2134 = vmatpush1.msra.mxu0 0.0
        %2135 = vmatprep.subr.mxu0 0.0
        %2136 = vmatpush1.msra.mxu0 0.0
        %2137 = vmatprep.subr.mxu0 0.0
        %2138 = vmatpush1.msra.mxu0 0.0
        %2139 = vmatprep.subr.mxu0 0.0
        %2140 = vmatpush1.msra.mxu0 0.0
        %2141 = vmatprep.subr.mxu0 0.0
        %2142 = vmatpush1.msra.mxu0 0.0
        %2143 = vmatprep.subr.mxu0 0.0
        %2144 = vmatpush1.msra.mxu0 0.0
        %2145 = vmatprep.subr.mxu0 0.0
        %2146 = vmatpush1.msra.mxu0 0.0
        %2147 = vmatprep.subr.mxu0 0.0
        %2148 = vmatpush1.msra.mxu0 0.0
        %2149 = vmatprep.subr.mxu0 0.0
        %2150 = vmatpush1.msra.mxu0 0.0
        %2151 = vmatprep.subr.mxu0 0.0
        %2152 = vmatpush1.msra.mxu0 0.0
        %2153 = vmatprep.subr.mxu0 0.0
        %2154 = vmatpush1.msra.mxu0 0.0
        %2155 = vmatprep.subr.mxu0 0.0
        %2156 = vmatpush1.msra.mxu0 0.0
        %2157 = vmatprep.subr.mxu0 0.0
        %2158 = vmatpush1.msra.mxu0 0.0
        %2159 = vmatprep.subr.mxu0 0.0
        %2160 = vmatpush1.msra.mxu0 0.0
        %2161 = vmatprep.subr.mxu0 0.0
        %2162 = vmatpush1.msra.mxu0 0.0
        %2163 = vmatprep.subr.mxu0 0.0
        %2164 = vmatpush1.msra.mxu0 0.0
        %2165 = vmatprep.mubr.f32.mxu0 0.0
        %2166 = vmatmul.mubr.f32.gmra.mrb[0].mxu0 %v2099
        %v2167 = vpop.f32.mrb[0].mxu0
        %v2168 = vadd.f32 0.0, %v2167
        %v2169 = vpop.f32.mrb[0].mxu0
        %2170 = vdwg.mxu0
        %vm2171 = vcmask 261120
        %v2172 = vsel %vm2171, %v1949, 0.0
        %v2173 = vsel %vm2171, %v2022, 0.0
        %v2174 = vadd.f32 %v2172, %v2173
        %v2175 = vsel %vm2171, %v2095, 0.0
        %v2176 = vadd.f32 %v2174, %v2175
        %v2177 = vsel %vm2171, %v2168, 0.0
        %v2178 = vadd.f32 %v2176, %v2177
        %v2179 = vld [vmem:[%s5] sm:$0x1]
        %v2181 = vlaneseq
        %v2182 = vshrl.u32 %v2181, 7
        %v2183 = vsub.s32 0, %v2182
        %v2184 = vrot.slane %v2179, %v2183
        %v2186 = vadd.f32 %v2178, %v2184
        %v2187 = vadd.f32 %v1196, %v2186
        %v2188 = vld [vmem:[%s8] sm:$0x1]
        %v2189 = vld [vmem:[%s9] sm:$0x1]
        %v2190 = vsel %vm2171, %v2187, 0.0
        %2191 = vadd.xlane.f32.xlu0 %v2190
        %v2192 = vpop.xlane.xlu0 %2191
        %v2193 = vrcp.pop 32.0
        %v2194 = vmul.f32 %v2192, %v2193
        %v2195 = vmul.f32 %v2187, %v2187
        %v2196 = vsel %vm2171, %v2195, 0.0
        %2197 = vadd.xlane.f32.xlu0 %v2196
        %v2198 = vpop.xlane.xlu0 %2197
        %v2199 = vmul.f32 %v2198, %v2193
        %v2200 = vmul.f32 %v2194, %v2194
        %v2201 = vsub.f32 %v2199, %v2200
        %v2202 = vadd.f32 %v2201, 1e-05
        %v2203 = vrsqrt.pop %v2202
        %v2204 = vsub.f32 %v2187, %v2194
        %v2205 = vmul.f32 %v2204, %v2203
        %v2207 = vlaneseq
        %v2208 = vshrl.u32 %v2207, 7
        %v2209 = vsub.s32 0, %v2208
        %v2210 = vrot.slane %v2188, %v2209
        %v2212 = vmul.f32 %v2205, %v2210
        %v2214 = vlaneseq
        %v2215 = vshrl.u32 %v2214, 7
        %v2216 = vsub.s32 0, %v2215
        %v2217 = vrot.slane %v2189, %v2216
        %v2219 = vadd.f32 %v2212, %v2217
        %v2220 = vld [vmem:[%s10] sm:$0xff]
        %v2221 = vld [vmem:[%s10 + $0x8] sm:$0xff]
        %v2222 = vld [vmem:[%s10 + $0x10] sm:$0xff]
        %v2223 = vld [vmem:[%s10 + $0x18] sm:$0xff]
        %v2224 = vld [vmem:[%s11] sm:$0x1]
        %v2226 = vlaneseq
        %v2227 = vshrl.u32 %v2226, 7
        %v2228 = vsub.s32 0, %v2227
        %v2229 = vrot.slane %v2224, %v2228
        %v2232 = vsel %vm2171, %v2219, 0
        %2234 = vmatprep.subr.mxu0 0.0
        %2235 = vmatpush1.msra.mxu0 %v2220
        %2236 = vmatprep.subr.mxu0 0.0
        %2237 = vmatpush1.msra.mxu0 %v2221
        %2238 = vmatprep.subr.mxu0 0.0
        %2239 = vmatpush1.msra.mxu0 %v2222
        %2240 = vmatprep.subr.mxu0 0.0
        %2241 = vmatpush1.msra.mxu0 %v2223
        %2242 = vmatprep.subr.mxu0 0.0
        %2243 = vmatpush1.msra.mxu0 0.0
        %2244 = vmatprep.subr.mxu0 0.0
        %2245 = vmatpush1.msra.mxu0 0.0
        %2246 = vmatprep.subr.mxu0 0.0
        %2247 = vmatpush1.msra.mxu0 0.0
        %2248 = vmatprep.subr.mxu0 0.0
        %2249 = vmatpush1.msra.mxu0 0.0
        %2250 = vmatprep.subr.mxu0 0.0
        %2251 = vmatpush1.msra.mxu0 0.0
        %2252 = vmatprep.subr.mxu0 0.0
        %2253 = vmatpush1.msra.mxu0 0.0
        %2254 = vmatprep.subr.mxu0 0.0
        %2255 = vmatpush1.msra.mxu0 0.0
        %2256 = vmatprep.subr.mxu0 0.0
        %2257 = vmatpush1.msra.mxu0 0.0
        %2258 = vmatprep.subr.mxu0 0.0
        %2259 = vmatpush1.msra.mxu0 0.0
        %2260 = vmatprep.subr.mxu0 0.0
        %2261 = vmatpush1.msra.mxu0 0.0
        %2262 = vmatprep.subr.mxu0 0.0
        %2263 = vmatpush1.msra.mxu0 0.0
        %2264 = vmatprep.subr.mxu0 0.0
        %2265 = vmatpush1.msra.mxu0 0.0
        %2266 = vmatprep.subr.mxu0 0.0
        %2267 = vmatpush1.msra.mxu0 0.0
        %2268 = vmatprep.subr.mxu0 0.0
        %2269 = vmatpush1.msra.mxu0 0.0
        %2270 = vmatprep.subr.mxu0 0.0
        %2271 = vmatpush1.msra.mxu0 0.0
        %2272 = vmatprep.subr.mxu0 0.0
        %2273 = vmatpush1.msra.mxu0 0.0
        %2274 = vmatprep.subr.mxu0 0.0
        %2275 = vmatpush1.msra.mxu0 0.0
        %2276 = vmatprep.subr.mxu0 0.0
        %2277 = vmatpush1.msra.mxu0 0.0
        %2278 = vmatprep.subr.mxu0 0.0
        %2279 = vmatpush1.msra.mxu0 0.0
        %2280 = vmatprep.subr.mxu0 0.0
        %2281 = vmatpush1.msra.mxu0 0.0
        %2282 = vmatprep.subr.mxu0 0.0
        %2283 = vmatpush1.msra.mxu0 0.0
        %2284 = vmatprep.subr.mxu0 0.0
        %2285 = vmatpush1.msra.mxu0 0.0
        %2286 = vmatprep.subr.mxu0 0.0
        %2287 = vmatpush1.msra.mxu0 0.0
        %2288 = vmatprep.subr.mxu0 0.0
        %2289 = vmatpush1.msra.mxu0 0.0
        %2290 = vmatprep.subr.mxu0 0.0
        %2291 = vmatpush1.msra.mxu0 0.0
        %2292 = vmatprep.subr.mxu0 0.0
        %2293 = vmatpush1.msra.mxu0 0.0
        %2294 = vmatprep.subr.mxu0 0.0
        %2295 = vmatpush1.msra.mxu0 0.0
        %2296 = vmatprep.subr.mxu0 0.0
        %2297 = vmatpush1.msra.mxu0 0.0
        %2298 = vmatprep.mubr.f32.mxu0 0.0
        %2299 = vmatmul.mubr.f32.gmra.mrb[0].mxu0 %v2232
        %v2300 = vpop.f32.mrb[0].mxu0
        %v2301 = vadd.f32 %v2229, %v2300
        %v2302 = vpop.f32.mrb[0].mxu0
        %2303 = vdwg.mxu0
        %v2304 = vmul.f32 %v2301, 0.5
        %v2305 = vmul.f32 %v2301, 0.70710677
        %v2306 = vand.u32 2147483647, %v2305
        %v2307 = vmul.f32 %v2306, 0.3275911
        %v2308 = vadd.f32 %v2307, 1.0
        %v2309 = vrcp.pop %v2308
        %v2310 = vmul.f32 %v2309, 1.0614054
        %v2311 = vadd.f32 %v2310, -1.4531521
        %v2312 = vmul.f32 %v2311, %v2309
        %v2313 = vadd.f32 %v2312, 1.4214138
        %v2314 = vmul.f32 %v2313, %v2309
        %v2315 = vadd.f32 %v2314, -0.28449672
        %v2316 = vmul.f32 %v2315, %v2309
        %v2317 = vadd.f32 %v2316, 0.2548296
        %v2318 = vmul.f32 %v2317, %v2309
        %v2319 = vsub.f32 0.0, %v2306
        %v2320 = vmul.f32 %v2319, %v2306
        %v2321 = vmul.f32 %v2320, 1.442695
        %v2322 = vpow.pop %v2321
        %v2323 = vmul.f32 %v2318, %v2322
        %v2324 = vsub.f32 1.0, %v2323
        %vm2325 = vcmp.ge.f32.partialorder %v2305, 0.0
        %v2326 = vsub.f32 0.0, %v2324
        %v2327 = vsel %vm2325, %v2324, %v2326
        %v2328 = vadd.f32 %v2327, 1.0
        %v2329 = vmul.f32 %v2304, %v2328
        %v2330 = vld [vmem:[%s12] sm:$0xff]
        %v2331 = vld [vmem:[%s12 + $0x8] sm:$0xff]
        %v2332 = vld [vmem:[%s12 + $0x10] sm:$0xff]
        %v2333 = vld [vmem:[%s12 + $0x18] sm:$0xff]
        %v2334 = vld [vmem:[%s12 + $0x20] sm:$0xff]
        %v2335 = vld [vmem:[%s12 + $0x28] sm:$0xff]
        %v2336 = vld [vmem:[%s12 + $0x30] sm:$0xff]
        %v2337 = vld [vmem:[%s12 + $0x38] sm:$0xff]
        %v2338 = vld [vmem:[%s12 + $0x40] sm:$0xff]
        %v2339 = vld [vmem:[%s12 + $0x48] sm:$0xff]
        %v2340 = vld [vmem:[%s12 + $0x50] sm:$0xff]
        %v2341 = vld [vmem:[%s12 + $0x58] sm:$0xff]
        %v2342 = vld [vmem:[%s12 + $0x60] sm:$0xff]
        %v2343 = vld [vmem:[%s12 + $0x68] sm:$0xff]
        %v2344 = vld [vmem:[%s12 + $0x70] sm:$0xff]
        %v2345 = vld [vmem:[%s12 + $0x78] sm:$0xff]
        %v2346 = vld [vmem:[%s13] sm:$0x1]
        %v2348 = vlaneseq
        %v2349 = vshrl.u32 %v2348, 7
        %v2350 = vsub.s32 0, %v2349
        %v2351 = vrot.slane %v2346, %v2350
        %2353 = vmatprep.subr.mxu0 0.0
        %2354 = vmatpush1.msra.mxu0 %v2330
        %2355 = vmatprep.subr.mxu0 0.0
        %2356 = vmatpush1.msra.mxu0 %v2331
        %2357 = vmatprep.subr.mxu0 0.0
        %2358 = vmatpush1.msra.mxu0 %v2332
        %2359 = vmatprep.subr.mxu0 0.0
        %2360 = vmatpush1.msra.mxu0 %v2333
        %2361 = vmatprep.subr.mxu0 0.0
        %2362 = vmatpush1.msra.mxu0 %v2334
        %2363 = vmatprep.subr.mxu0 0.0
        %2364 = vmatpush1.msra.mxu0 %v2335
        %2365 = vmatprep.subr.mxu0 0.0
        %2366 = vmatpush1.msra.mxu0 %v2336
        %2367 = vmatprep.subr.mxu0 0.0
        %2368 = vmatpush1.msra.mxu0 %v2337
        %2369 = vmatprep.subr.mxu0 0.0
        %2370 = vmatpush1.msra.mxu0 %v2338
        %2371 = vmatprep.subr.mxu0 0.0
        %2372 = vmatpush1.msra.mxu0 %v2339
        %2373 = vmatprep.subr.mxu0 0.0
        %2374 = vmatpush1.msra.mxu0 %v2340
        %2375 = vmatprep.subr.mxu0 0.0
        %2376 = vmatpush1.msra.mxu0 %v2341
        %2377 = vmatprep.subr.mxu0 0.0
        %2378 = vmatpush1.msra.mxu0 %v2342
        %2379 = vmatprep.subr.mxu0 0.0
        %2380 = vmatpush1.msra.mxu0 %v2343
        %2381 = vmatprep.subr.mxu0 0.0
        %2382 = vmatpush1.msra.mxu0 %v2344
        %2383 = vmatprep.subr.mxu0 0.0
        %2384 = vmatpush1.msra.mxu0 %v2345
        %2385 = vmatprep.subr.mxu0 0.0
        %2386 = vmatpush1.msra.mxu0 0.0
        %2387 = vmatprep.subr.mxu0 0.0
        %2388 = vmatpush1.msra.mxu0 0.0
        %2389 = vmatprep.subr.mxu0 0.0
        %2390 = vmatpush1.msra.mxu0 0.0
        %2391 = vmatprep.subr.mxu0 0.0
        %2392 = vmatpush1.msra.mxu0 0.0
        %2393 = vmatprep.subr.mxu0 0.0
        %2394 = vmatpush1.msra.mxu0 0.0
        %2395 = vmatprep.subr.mxu0 0.0
        %2396 = vmatpush1.msra.mxu0 0.0
        %2397 = vmatprep.subr.mxu0 0.0
        %2398 = vmatpush1.msra.mxu0 0.0
        %2399 = vmatprep.subr.mxu0 0.0
        %2400 = vmatpush1.msra.mxu0 0.0
        %2401 = vmatprep.subr.mxu0 0.0
        %2402 = vmatpush1.msra.mxu0 0.0
        %2403 = vmatprep.subr.mxu0 0.0
        %2404 = vmatpush1.msra.mxu0 0.0
        %2405 = vmatprep.subr.mxu0 0.0
        %2406 = vmatpush1.msra.mxu0 0.0
        %2407 = vmatprep.subr.mxu0 0.0
        %2408 = vmatpush1.msra.mxu0 0.0
        %2409 = vmatprep.subr.mxu0 0.0
        %2410 = vmatpush1.msra.mxu0 0.0
        %2411 = vmatprep.subr.mxu0 0.0
        %2412 = vmatpush1.msra.mxu0 0.0
        %2413 = vmatprep.subr.mxu0 0.0
        %2414 = vmatpush1.msra.mxu0 0.0
        %2415 = vmatprep.subr.mxu0 0.0
        %2416 = vmatpush1.msra.mxu0 0.0
        %2417 = vmatprep.mubr.f32.mxu0 0.0
        %2418 = vmatmul.mubr.f32.gmra.mrb[0].mxu0 %v2329
        %v2419 = vpop.f32.mrb[0].mxu0
        %v2420 = vadd.f32 %v2351, %v2419
        %v2421 = vpop.f32.mrb[0].mxu0
        %2422 = vdwg.mxu0
        %v2423 = vadd.f32 %v2187, %v2420
        %2424 = vst.msk [vmem:[%s479] sm:$0xff] %vm2171, %v2423
        %s2425 = sand.u32 %s350, 1
        %s2426 = scalar_lea.sflag [#allocation7], %s2425
        %s2427 = sand.u32 %s350, 1
        %s2428 = smul.addr %s2427, 8
        %s2429 = scalar_lea.vmem [#allocation8], %s2428
        // Predicated region
        $region85: #{tpu_custom_call.1} parent=75 // pred_check
          %p2430 = pneg %p360
        $region86: #{tpu_custom_call.1} parent=75 // pred_check_branch
          %2432 = sbr.rel (%p2430) target = $region88
        $region87: #{tpu_custom_call.1} parent=75 // pred_region
          %s2434 = ssub.s32 128, 128
          %2435 = vsyncadd %s2426, %s2434
          %s2436 = sadd.s32 %s34, %s33
          %s2437 = smul.addr %s2436, 128
          %s2438 = scalar_lea.hbm %s14, %s2437
          %s2440 = sshll.u32 %s2429, 4
          %s2441 = int_to_ptr.vmem [resolvable:$true] %s2440
          %2443 = dma.vmem_to_hbm [thread:$0]  %s2441, 128, %s2438, %s2426
        $region88: #{tpu_custom_call.1} parent=75 // pred_fallthru
          _
      $region76: #{tpu_custom_call.1} parent=5 // pred_fallthru
        _
      %p2444 = scmp.le.s32.totalorder 2, %s24
      // Predicated region
      $region89: #{tpu_custom_call.1} parent=5 // pred_check
        %p2445 = pneg %p2444
      $region90: #{tpu_custom_call.1} parent=5 // pred_check_branch
        %2447 = sbr.rel (%p2445) target = $region92
      $region91: #{tpu_custom_call.1} parent=5 // pred_region
        %s2448 = ssub.s32 %s24, 2
        // Predicated region
        $region93: #{tpu_custom_call.1} parent=91 // pred_check
          %p2449 = pneg %p366
        $region94: #{tpu_custom_call.1} parent=91 // pred_check_branch
          %2451 = sbr.rel (%p2449) target = $region96
        $region95: #{tpu_custom_call.1} parent=91 // pred_region
          %s2452 = sand.u32 %s351, 1
          %s2453 = scalar_lea.sflag [#allocation7], %s2452
          %s2454 = sand.u32 %s351, 1
          %s2455 = smul.addr %s2454, 8
          %s2456 = scalar_lea.vmem [#allocation8], %s2455
          %2457 = dma.done %s2453, 128
        $region96: #{tpu_custom_call.1} parent=91 // pred_fallthru
          _
      $region92: #{tpu_custom_call.1} parent=5 // pred_fallthru
        _
    $region6: #{tpu_custom_call.1} parent=1 // loop_footer
      %s28 = sadd.s32 1, %s24
    $region7: #{tpu_custom_call.1} parent=1 // loop_footer_branch
      %23 = sbr.rel target = $region3
    $region8: #{tpu_custom_call.1} parent=1 // loop_exit
      _
    %2458 = vsyncpa [#allocation6], 1
    %s2459 = scalar_lea.sflag [#allocation6], 1
    %2460 = vsyncpa %s2459, 1
    %2461 = vsyncpa [#allocation7], 1
    %s2462 = scalar_lea.sflag [#allocation7], 1
    %2463 = vsyncpa %s2462, 1

// kernel: tpu_custom_call.1
$region0: #{tpu_custom_call.1}
  #allocation0 [shape = 'u32[]', space=smem, size = 0x4, offset = 0x4, fixed_abs, tag = 'smem constant byte address 0x4 - core index']
  #allocation1 [shape = 'u32[144,128]{1,0:T(1,128)}', space=vmem, size = 0x12000, scoped, tag = 'internal scratch']
  #allocation2 [shape = 'f32[4,8,8]{2,1,0:T(8,128)}', space=vmem, size = 0x4000, scoped, tag = 'scratch operand']
  #allocation3 [shape = 'f32[4,8,8]{2,1,0:T(8,128)}', space=vmem, size = 0x4000, scoped, tag = 'scratch operand']
  #allocation4 [shape = 'f32[4,8,8]{2,1,0:T(8,128)}', space=vmem, size = 0x4000, scoped, tag = 'scratch operand']
  %s0 = inlined_call_operand.hbm [shape: f32[2,8,32], index: 0, kind: input, shape index: {}]
  %s1 = inlined_call_operand.vmem [shape: f32[32,32], index: 1, kind: input, shape index: {}]
  %s2 = inlined_call_operand.vmem [shape: f32[32,32], index: 2, kind: input, shape index: {}]
  %s3 = inlined_call_operand.vmem [shape: f32[32,32], index: 3, kind: input, shape index: {}]
  %s4 = inlined_call_operand.vmem [shape: f32[4,8,32], index: 4, kind: input, shape index: {}]
  %s5 = inlined_call_operand.vmem [shape: f32[1,32], index: 5, kind: input, shape index: {}]
  %s6 = inlined_call_operand.vmem [shape: f32[1,32], index: 6, kind: input, shape index: {}]
  %s7 = inlined_call_operand.vmem [shape: f32[1,32], index: 7, kind: input, shape index: {}]
  %s8 = inlined_call_operand.vmem [shape: f32[1,32], index: 8, kind: input, shape index: {}]
  %s9 = inlined_call_operand.vmem [shape: f32[1,32], index: 9, kind: input, shape index: {}]
  %s10 = inlined_call_operand.vmem [shape: f32[32,128], index: 10, kind: input, shape index: {}]
  %s11 = inlined_call_operand.vmem [shape: f32[1,128], index: 11, kind: input, shape index: {}]
  %s12 = inlined_call_operand.vmem [shape: f32[128,32], index: 12, kind: input, shape index: {}]
  %s13 = inlined_call_operand.vmem [shape: f32[1,32], index: 13, kind: input, shape index: {}]
  %s14 = inlined_call_operand.hbm [shape: f32[2,8,32], index: 14, kind: output, shape index: {}]
  %s15 = sld [smem:[#allocation0]]
  $region97: #{tpu_custom_call.1} parent=0
    _
  %s17 = ssub.s32 1, %s15
  %s18 = scalar_select 0, %s17, %s15
  $region1: #{tpu_custom_call.1} parent=0
    #allocation5 [shape = 'u8[8192]{0}', space=vmem, size = 0x2000, scoped, tag = 'input window, operand 0']
    #allocation6 [shape = 's32[2]{0}', space=sflag, size = 0x8, scoped, tag = 'scoped memory for tpu_custom_call.1']
    #allocation7 [shape = 's32[2]{0}', space=sflag, size = 0x8, scoped, tag = 'scoped memory for tpu_custom_call.1']
    #allocation8 [shape = 'u8[8192]{0}', space=vmem, size = 0x2000, scoped, tag = 'output window, operand 0']
    %19 = vsyncpa [#allocation6], 0
    %s20 = scalar_lea.sflag [#allocation6], 1
    %21 = vsyncpa %s20, 0
    %22 = vsyncpa [#allocation7], 0
    %s23 = scalar_lea.sflag [#allocation7], 1
    %24 = vsyncpa %s23, 0
    loop: start=0, step=1, limit=4
    $region2: #{tpu_custom_call.1} parent=1 // loop_pre_header
      _
    $region3: #{tpu_custom_call.1} parent=1 // loop_header
      %s26 = sphi 0, %s30
      %p27 = scmp.ge.s32.totalorder %s26, 4
      %s33 = sphi 0, %s45
      %s34 = sphi 0, %s41
      %s35 = sphi 0, %s33
      %s36 = sphi 0, %s34
      %s37 = sphi 0, %s35
      %s38 = sphi 0, %s36
      %s48 = sphi 0, %s50
      %s51 = sphi 0, %s48
      %s52 = sphi 0, %s51
      %s68 = sphi 0, %s52
      %s72 = sphi 0, %s72
      %s74 = sphi 0, %s72
      %s75 = sphi 0, %s74
      %s89 = sphi 0, %s75
      %s93 = sphi 0, %s93
      %s95 = sphi 0, %s93
      %s96 = sphi 0, %s95
      %s110 = sphi 0, %s96
      %s114 = sphi 0, %s114
      %s116 = sphi 0, %s114
      %s117 = sphi 0, %s116
      %s131 = sphi 0, %s117
      %s135 = sphi 0, %s135
      %s137 = sphi 0, %s135
      %s138 = sphi 0, %s137
      %s152 = sphi 0, %s138
      %s156 = sphi 0, %s156
      %s158 = sphi 0, %s156
      %s159 = sphi 0, %s158
      %s173 = sphi 0, %s159
      %s177 = sphi 0, %s177
      %s179 = sphi 0, %s177
      %s180 = sphi 0, %s179
      %s194 = sphi 0, %s180
      %s198 = sphi 0, %s198
      %s200 = sphi 0, %s198
      %s201 = sphi 0, %s200
      %s215 = sphi 0, %s201
      %s219 = sphi 0, %s219
      %s221 = sphi 0, %s219
      %s222 = sphi 0, %s221
      %s236 = sphi 0, %s222
      %s240 = sphi 0, %s240
      %s242 = sphi 0, %s240
      %s243 = sphi 0, %s242
      %s257 = sphi 0, %s243
      %s261 = sphi 0, %s261
      %s263 = sphi 0, %s261
      %s264 = sphi 0, %s263
      %s278 = sphi 0, %s264
      %s282 = sphi 0, %s282
      %s284 = sphi 0, %s282
      %s285 = sphi 0, %s284
      %s299 = sphi 0, %s285
      %s303 = sphi 0, %s303
      %s305 = sphi 0, %s303
      %s306 = sphi 0, %s305
      %s320 = sphi 0, %s306
      %s324 = sphi 0, %s324
      %s326 = sphi 0, %s324
      %s327 = sphi 0, %s326
      %s341 = sphi 0, %s327
      %s349 = sphi 0, %s351
      %s352 = sphi 0, %s349
      %s353 = sphi 0, %s352
      %s369 = sphi 0, %s353
    $region4: #{tpu_custom_call.1} parent=1 // loop_header_branch
      %29 = sbr.rel (%p27) target = $region8
    $region5: #{tpu_custom_call.1} parent=1 // loop_body
      %s31 = ssub.s32 %s26, 1
      %s32 = ssub.s32 %s26, 2
      %s39 = sadd.s32 1, %s34
      %p40 = scmp.ge.s32.totalorder %s39, 1
      %s41 = scalar_select %p40, 0, %s39
      %s42 = sadd.s32 1, %s33
      %s43 = scalar_select %p40, %s42, %s33
      %p44 = scmp.ge.s32.totalorder %s43, 2
      %s45 = scalar_select %p44, 0, %s43
      %s46 = ssub.s32 %s33, %s45
      %p47 = scmp.eq.s32.totalorder %s46, 0
      %s49 = sadd.s32 %s48, 1
      %s50 = scalar_select %p47, %s48, %s49
      %p53 = pneg %p47
      %p54 = scmp.eq.s32.totalorder %s26, 1
      %p55 = por %p53, %p54
      %p56 = scmp.ne.s32.totalorder %s48, %s51
      %p57 = scmp.eq.s32.totalorder %s26, 0
      %p58 = por %p56, %p57
      %p59 = scmp.ne.s32.totalorder %s48, %s51
      %p60 = scmp.eq.s32.totalorder %s31, 1
      %p61 = por %p59, %p60
      %p62 = scmp.ne.s32.totalorder %s51, %s52
      %p63 = scmp.eq.s32.totalorder %s31, 0
      %p64 = por %p62, %p63
      %p65 = scmp.ne.s32.totalorder %s51, %s52
      %p66 = scmp.eq.s32.totalorder %s32, 1
      %p67 = por %p65, %p66
      %p69 = scmp.ne.s32.totalorder %s52, %s68
      %p70 = scmp.eq.s32.totalorder %s32, 0
      %p71 = por %p69, %p70
      %s73 = sadd.s32 %s72, 1
      %p76 = scmp.eq.s32.totalorder %s26, 1
      %p77 = scmp.ne.s32.totalorder %s72, %s74
      %p78 = scmp.eq.s32.totalorder %s26, 0
      %p79 = por %p77, %p78
      %p80 = scmp.ne.s32.totalorder %s72, %s74
      %p81 = scmp.eq.s32.totalorder %s31, 1
      %p82 = por %p80, %p81
      %p83 = scmp.ne.s32.totalorder %s74, %s75
      %p84 = scmp.eq.s32.totalorder %s31, 0
      %p85 = por %p83, %p84
      %p86 = scmp.ne.s32.totalorder %s74, %s75
      %p87 = scmp.eq.s32.totalorder %s32, 1
      %p88 = por %p86, %p87
      %p90 = scmp.ne.s32.totalorder %s75, %s89
      %p91 = scmp.eq.s32.totalorder %s32, 0
      %p92 = por %p90, %p91
      %s94 = sadd.s32 %s93, 1
      %p97 = scmp.eq.s32.totalorder %s26, 1
      %p98 = scmp.ne.s32.totalorder %s93, %s95
      %p99 = scmp.eq.s32.totalorder %s26, 0
      %p100 = por %p98, %p99
      %p101 = scmp.ne.s32.totalorder %s93, %s95
      %p102 = scmp.eq.s32.totalorder %s31, 1
      %p103 = por %p101, %p102
      %p104 = scmp.ne.s32.totalorder %s95, %s96
      %p105 = scmp.eq.s32.totalorder %s31, 0
      %p106 = por %p104, %p105
      %p107 = scmp.ne.s32.totalorder %s95, %s96
      %p108 = scmp.eq.s32.totalorder %s32, 1
      %p109 = por %p107, %p108
      %p111 = scmp.ne.s32.totalorder %s96, %s110
      %p112 = scmp.eq.s32.totalorder %s32, 0
      %p113 = por %p111, %p112
      %s115 = sadd.s32 %s114, 1
      %p118 = scmp.eq.s32.totalorder %s26, 1
      %p119 = scmp.ne.s32.totalorder %s114, %s116
      %p120 = scmp.eq.s32.totalorder %s26, 0
      %p121 = por %p119, %p120
      %p122 = scmp.ne.s32.totalorder %s114, %s116
      %p123 = scmp.eq.s32.totalorder %s31, 1
      %p124 = por %p122, %p123
      %p125 = scmp.ne.s32.totalorder %s116, %s117
      %p126 = scmp.eq.s32.totalorder %s31, 0
      %p127 = por %p125, %p126
      %p128 = scmp.ne.s32.totalorder %s116, %s117
      %p129 = scmp.eq.s32.totalorder %s32, 1
      %p130 = por %p128, %p129
      %p132 = scmp.ne.s32.totalorder %s117, %s131
      %p133 = scmp.eq.s32.totalorder %s32, 0
      %p134 = por %p132, %p133
      %s136 = sadd.s32 %s135, 1
      %p139 = scmp.eq.s32.totalorder %s26, 1
      %p140 = scmp.ne.s32.totalorder %s135, %s137
      %p141 = scmp.eq.s32.totalorder %s26, 0
      %p142 = por %p140, %p141
      %p143 = scmp.ne.s32.totalorder %s135, %s137
      %p144 = scmp.eq.s32.totalorder %s31, 1
      %p145 = por %p143, %p144
      %p146 = scmp.ne.s32.totalorder %s137, %s138
      %p147 = scmp.eq.s32.totalorder %s31, 0
      %p148 = por %p146, %p147
      %p149 = scmp.ne.s32.totalorder %s137, %s138
      %p150 = scmp.eq.s32.totalorder %s32, 1
      %p151 = por %p149, %p150
      %p153 = scmp.ne.s32.totalorder %s138, %s152
      %p154 = scmp.eq.s32.totalorder %s32, 0
      %p155 = por %p153, %p154
      %s157 = sadd.s32 %s156, 1
      %p160 = scmp.eq.s32.totalorder %s26, 1
      %p161 = scmp.ne.s32.totalorder %s156, %s158
      %p162 = scmp.eq.s32.totalorder %s26, 0
      %p163 = por %p161, %p162
      %p164 = scmp.ne.s32.totalorder %s156, %s158
      %p165 = scmp.eq.s32.totalorder %s31, 1
      %p166 = por %p164, %p165
      %p167 = scmp.ne.s32.totalorder %s158, %s159
      %p168 = scmp.eq.s32.totalorder %s31, 0
      %p169 = por %p167, %p168
      %p170 = scmp.ne.s32.totalorder %s158, %s159
      %p171 = scmp.eq.s32.totalorder %s32, 1
      %p172 = por %p170, %p171
      %p174 = scmp.ne.s32.totalorder %s159, %s173
      %p175 = scmp.eq.s32.totalorder %s32, 0
      %p176 = por %p174, %p175
      %s178 = sadd.s32 %s177, 1
      %p181 = scmp.eq.s32.totalorder %s26, 1
      %p182 = scmp.ne.s32.totalorder %s177, %s179
      %p183 = scmp.eq.s32.totalorder %s26, 0
      %p184 = por %p182, %p183
      %p185 = scmp.ne.s32.totalorder %s177, %s179
      %p186 = scmp.eq.s32.totalorder %s31, 1
      %p187 = por %p185, %p186
      %p188 = scmp.ne.s32.totalorder %s179, %s180
      %p189 = scmp.eq.s32.totalorder %s31, 0
      %p190 = por %p188, %p189
      %p191 = scmp.ne.s32.totalorder %s179, %s180
      %p192 = scmp.eq.s32.totalorder %s32, 1
      %p193 = por %p191, %p192
      %p195 = scmp.ne.s32.totalorder %s180, %s194
      %p196 = scmp.eq.s32.totalorder %s32, 0
      %p197 = por %p195, %p196
      %s199 = sadd.s32 %s198, 1
      %p202 = scmp.eq.s32.totalorder %s26, 1
      %p203 = scmp.ne.s32.totalorder %s198, %s200
      %p204 = scmp.eq.s32.totalorder %s26, 0
      %p205 = por %p203, %p204
      %p206 = scmp.ne.s32.totalorder %s198, %s200
      %p207 = scmp.eq.s32.totalorder %s31, 1
      %p208 = por %p206, %p207
      %p209 = scmp.ne.s32.totalorder %s200, %s201
      %p210 = scmp.eq.s32.totalorder %s31, 0
      %p211 = por %p209, %p210
      %p212 = scmp.ne.s32.totalorder %s200, %s201
      %p213 = scmp.eq.s32.totalorder %s32, 1
      %p214 = por %p212, %p213
      %p216 = scmp.ne.s32.totalorder %s201, %s215
      %p217 = scmp.eq.s32.totalorder %s32, 0
      %p218 = por %p216, %p217
      %s220 = sadd.s32 %s219, 1
      %p223 = scmp.eq.s32.totalorder %s26, 1
      %p224 = scmp.ne.s32.totalorder %s219, %s221
      %p225 = scmp.eq.s32.totalorder %s26, 0
      %p226 = por %p224, %p225
      %p227 = scmp.ne.s32.totalorder %s219, %s221
      %p228 = scmp.eq.s32.totalorder %s31, 1
      %p229 = por %p227, %p228
      %p230 = scmp.ne.s32.totalorder %s221, %s222
      %p231 = scmp.eq.s32.totalorder %s31, 0
      %p232 = por %p230, %p231
      %p233 = scmp.ne.s32.totalorder %s221, %s222
      %p234 = scmp.eq.s32.totalorder %s32, 1
      %p235 = por %p233, %p234
      %p237 = scmp.ne.s32.totalorder %s222, %s236
      %p238 = scmp.eq.s32.totalorder %s32, 0
      %p239 = por %p237, %p238
      %s241 = sadd.s32 %s240, 1
      %p244 = scmp.eq.s32.totalorder %s26, 1
      %p245 = scmp.ne.s32.totalorder %s240, %s242
      %p246 = scmp.eq.s32.totalorder %s26, 0
      %p247 = por %p245, %p246
      %p248 = scmp.ne.s32.totalorder %s240, %s242
      %p249 = scmp.eq.s32.totalorder %s31, 1
      %p250 = por %p248, %p249
      %p251 = scmp.ne.s32.totalorder %s242, %s243
      %p252 = scmp.eq.s32.totalorder %s31, 0
      %p253 = por %p251, %p252
      %p254 = scmp.ne.s32.totalorder %s242, %s243
      %p255 = scmp.eq.s32.totalorder %s32, 1
      %p256 = por %p254, %p255
      %p258 = scmp.ne.s32.totalorder %s243, %s257
      %p259 = scmp.eq.s32.totalorder %s32, 0
      %p260 = por %p258, %p259
      %s262 = sadd.s32 %s261, 1
      %p265 = scmp.eq.s32.totalorder %s26, 1
      %p266 = scmp.ne.s32.totalorder %s261, %s263
      %p267 = scmp.eq.s32.totalorder %s26, 0
      %p268 = por %p266, %p267
      %p269 = scmp.ne.s32.totalorder %s261, %s263
      %p270 = scmp.eq.s32.totalorder %s31, 1
      %p271 = por %p269, %p270
      %p272 = scmp.ne.s32.totalorder %s263, %s264
      %p273 = scmp.eq.s32.totalorder %s31, 0
      %p274 = por %p272, %p273
      %p275 = scmp.ne.s32.totalorder %s263, %s264
      %p276 = scmp.eq.s32.totalorder %s32, 1
      %p277 = por %p275, %p276
      %p279 = scmp.ne.s32.totalorder %s264, %s278
      %p280 = scmp.eq.s32.totalorder %s32, 0
      %p281 = por %p279, %p280
      %s283 = sadd.s32 %s282, 1
      %p286 = scmp.eq.s32.totalorder %s26, 1
      %p287 = scmp.ne.s32.totalorder %s282, %s284
      %p288 = scmp.eq.s32.totalorder %s26, 0
      %p289 = por %p287, %p288
      %p290 = scmp.ne.s32.totalorder %s282, %s284
      %p291 = scmp.eq.s32.totalorder %s31, 1
      %p292 = por %p290, %p291
      %p293 = scmp.ne.s32.totalorder %s284, %s285
      %p294 = scmp.eq.s32.totalorder %s31, 0
      %p295 = por %p293, %p294
      %p296 = scmp.ne.s32.totalorder %s284, %s285
      %p297 = scmp.eq.s32.totalorder %s32, 1
      %p298 = por %p296, %p297
      %p300 = scmp.ne.s32.totalorder %s285, %s299
      %p301 = scmp.eq.s32.totalorder %s32, 0
      %p302 = por %p300, %p301
      %s304 = sadd.s32 %s303, 1
      %p307 = scmp.eq.s32.totalorder %s26, 1
      %p308 = scmp.ne.s32.totalorder %s303, %s305
      %p309 = scmp.eq.s32.totalorder %s26, 0
      %p310 = por %p308, %p309
      %p311 = scmp.ne.s32.totalorder %s303, %s305
      %p312 = scmp.eq.s32.totalorder %s31, 1
      %p313 = por %p311, %p312
      %p314 = scmp.ne.s32.totalorder %s305, %s306
      %p315 = scmp.eq.s32.totalorder %s31, 0
      %p316 = por %p314, %p315
      %p317 = scmp.ne.s32.totalorder %s305, %s306
      %p318 = scmp.eq.s32.totalorder %s32, 1
      %p319 = por %p317, %p318
      %p321 = scmp.ne.s32.totalorder %s306, %s320
      %p322 = scmp.eq.s32.totalorder %s32, 0
      %p323 = por %p321, %p322
      %s325 = sadd.s32 %s324, 1
      %p328 = scmp.eq.s32.totalorder %s26, 1
      %p329 = scmp.ne.s32.totalorder %s324, %s326
      %p330 = scmp.eq.s32.totalorder %s26, 0
      %p331 = por %p329, %p330
      %p332 = scmp.ne.s32.totalorder %s324, %s326
      %p333 = scmp.eq.s32.totalorder %s31, 1
      %p334 = por %p332, %p333
      %p335 = scmp.ne.s32.totalorder %s326, %s327
      %p336 = scmp.eq.s32.totalorder %s31, 0
      %p337 = por %p335, %p336
      %p338 = scmp.ne.s32.totalorder %s326, %s327
      %p339 = scmp.eq.s32.totalorder %s32, 1
      %p340 = por %p338, %p339
      %p342 = scmp.ne.s32.totalorder %s327, %s341
      %p343 = scmp.eq.s32.totalorder %s32, 0
      %p344 = por %p342, %p343
      %s345 = ssub.s32 %s33, %s45
      %s346 = ssub.s32 %s34, %s41
      %s347 = sor.u32 %s345, %s346
      %p348 = scmp.eq.s32.totalorder %s347, 0
      %s350 = sadd.s32 %s349, 1
      %s351 = scalar_select %p348, %s349, %s350
      %p354 = pneg %p348
      %p355 = scmp.eq.s32.totalorder %s26, 1
      %p356 = por %p354, %p355
      %p357 = scmp.ne.s32.totalorder %s349, %s352
      %p358 = scmp.eq.s32.totalorder %s26, 0
      %p359 = por %p357, %p358
      %p360 = scmp.ne.s32.totalorder %s349, %s352
      %p361 = scmp.eq.s32.totalorder %s31, 1
      %p362 = por %p360, %p361
      %p363 = scmp.ne.s32.totalorder %s352, %s353
      %p364 = scmp.eq.s32.totalorder %s31, 0
      %p365 = por %p363, %p364
      %p366 = scmp.ne.s32.totalorder %s352, %s353
      %p367 = scmp.eq.s32.totalorder %s32, 1
      %p368 = por %p366, %p367
      %p370 = scmp.ne.s32.totalorder %s353, %s369
      %p371 = scmp.eq.s32.totalorder %s32, 0
      %p372 = por %p370, %p371
      %p373 = scmp.le.s32.totalorder 1, %s26
      %p374 = scmp.lt.s32.totalorder %s26, 3
      %p375 = pnand %p373, %p374
      %p376 = pneg %p375
      // Predicated region
      $region9: #{tpu_custom_call.1} parent=5 // pred_check
        _
      $region10: #{tpu_custom_call.1} parent=5 // pred_check_branch
        %378 = sbr.rel (%p375) target = $region12
      $region11: #{tpu_custom_call.1} parent=5 // pred_region
        %s379 = ssub.s32 %s26, 1
        // Predicated region
        $region13: #{tpu_custom_call.1} parent=11 // pred_check
          %p380 = pneg %p85
        $region14: #{tpu_custom_call.1} parent=11 // pred_check_branch
          %382 = sbr.rel (%p380) target = $region16
        $region15: #{tpu_custom_call.1} parent=11 // pred_region
          _
        $region16: #{tpu_custom_call.1} parent=11 // pred_fallthru
          _
        // Predicated region
        $region17: #{tpu_custom_call.1} parent=11 // pred_check
          %p383 = pneg %p106
        $region18: #{tpu_custom_call.1} parent=11 // pred_check_branch
          %385 = sbr.rel (%p383) target = $region20
        $region19: #{tpu_custom_call.1} parent=11 // pred_region
          _
        $region20: #{tpu_custom_call.1} parent=11 // pred_fallthru
          _
        // Predicated region
        $region21: #{tpu_custom_call.1} parent=11 // pred_check
          %p386 = pneg %p127
        $region22: #{tpu_custom_call.1} parent=11 // pred_check_branch
          %388 = sbr.rel (%p386) target = $region24
        $region23: #{tpu_custom_call.1} parent=11 // pred_region
          _
        $region24: #{tpu_custom_call.1} parent=11 // pred_fallthru
          _
        // Predicated region
        $region25: #{tpu_custom_call.1} parent=11 // pred_check
          %p389 = pneg %p148
        $region26: #{tpu_custom_call.1} parent=11 // pred_check_branch
          %391 = sbr.rel (%p389) target = $region28
        $region27: #{tpu_custom_call.1} parent=11 // pred_region
          _
        $region28: #{tpu_custom_call.1} parent=11 // pred_fallthru
          _
        // Predicated region
        $region29: #{tpu_custom_call.1} parent=11 // pred_check
          %p392 = pneg %p169
        $region30: #{tpu_custom_call.1} parent=11 // pred_check_branch
          %394 = sbr.rel (%p392) target = $region32
        $region31: #{tpu_custom_call.1} parent=11 // pred_region
          _
        $region32: #{tpu_custom_call.1} parent=11 // pred_fallthru
          _
        // Predicated region
        $region33: #{tpu_custom_call.1} parent=11 // pred_check
          %p395 = pneg %p190
        $region34: #{tpu_custom_call.1} parent=11 // pred_check_branch
          %397 = sbr.rel (%p395) target = $region36
        $region35: #{tpu_custom_call.1} parent=11 // pred_region
          _
        $region36: #{tpu_custom_call.1} parent=11 // pred_fallthru
          _
        // Predicated region
        $region37: #{tpu_custom_call.1} parent=11 // pred_check
          %p398 = pneg %p211
        $region38: #{tpu_custom_call.1} parent=11 // pred_check_branch
          %400 = sbr.rel (%p398) target = $region40
        $region39: #{tpu_custom_call.1} parent=11 // pred_region
          _
        $region40: #{tpu_custom_call.1} parent=11 // pred_fallthru
          _
        // Predicated region
        $region41: #{tpu_custom_call.1} parent=11 // pred_check
          %p401 = pneg %p232
        $region42: #{tpu_custom_call.1} parent=11 // pred_check_branch
          %403 = sbr.rel (%p401) target = $region44
        $region43: #{tpu_custom_call.1} parent=11 // pred_region
          _
        $region44: #{tpu_custom_call.1} parent=11 // pred_fallthru
          _
        // Predicated region
        $region45: #{tpu_custom_call.1} parent=11 // pred_check
          %p404 = pneg %p253
        $region46: #{tpu_custom_call.1} parent=11 // pred_check_branch
          %406 = sbr.rel (%p404) target = $region48
        $region47: #{tpu_custom_call.1} parent=11 // pred_region
          _
        $region48: #{tpu_custom_call.1} parent=11 // pred_fallthru
          _
        // Predicated region
        $region49: #{tpu_custom_call.1} parent=11 // pred_check
          %p407 = pneg %p274
        $region50: #{tpu_custom_call.1} parent=11 // pred_check_branch
          %409 = sbr.rel (%p407) target = $region52
        $region51: #{tpu_custom_call.1} parent=11 // pred_region
          _
        $region52: #{tpu_custom_call.1} parent=11 // pred_fallthru
          _
        // Predicated region
        $region53: #{tpu_custom_call.1} parent=11 // pred_check
          %p410 = pneg %p295
        $region54: #{tpu_custom_call.1} parent=11 // pred_check_branch
          %412 = sbr.rel (%p410) target = $region56
        $region55: #{tpu_custom_call.1} parent=11 // pred_region
          _
        $region56: #{tpu_custom_call.1} parent=11 // pred_fallthru
          _
        // Predicated region
        $region57: #{tpu_custom_call.1} parent=11 // pred_check
          %p413 = pneg %p316
        $region58: #{tpu_custom_call.1} parent=11 // pred_check_branch
          %415 = sbr.rel (%p413) target = $region60
        $region59: #{tpu_custom_call.1} parent=11 // pred_region
          _
        $region60: #{tpu_custom_call.1} parent=11 // pred_fallthru
          _
        // Predicated region
        $region61: #{tpu_custom_call.1} parent=11 // pred_check
          %p416 = pneg %p337
        $region62: #{tpu_custom_call.1} parent=11 // pred_check_branch
          %418 = sbr.rel (%p416) target = $region64
        $region63: #{tpu_custom_call.1} parent=11 // pred_region
          _
        $region64: #{tpu_custom_call.1} parent=11 // pred_fallthru
          _
      $region12: #{tpu_custom_call.1} parent=5 // pred_fallthru
        _
      %p419 = scmp.lt.s32.totalorder %s26, 2
      // Predicated region
      $region65: #{tpu_custom_call.1} parent=5 // pred_check
        %p420 = pneg %p419
      $region66: #{tpu_custom_call.1} parent=5 // pred_check_branch
        %422 = sbr.rel (%p420) target = $region68
      $region67: #{tpu_custom_call.1} parent=5 // pred_region
        // Predicated region
        $region69: #{tpu_custom_call.1} parent=67 // pred_check
          %p423 = pneg %p58
        $region70: #{tpu_custom_call.1} parent=67 // pred_check_branch
          %425 = sbr.rel (%p423) target = $region72
        $region71: #{tpu_custom_call.1} parent=67 // pred_region
          %s426 = sand.u32 %s48, 1
          %s427 = scalar_lea.sflag [#allocation6], %s426
          %s428 = sand.u32 %s48, 1
          %s429 = smul.addr %s428, 8
          %s430 = scalar_lea.vmem [#allocation5], %s429
          %s432 = ssub.s32 128, 128
          %433 = vsyncadd %s427, %s432
          %s434 = smul.addr %s33, 128
          %s435 = scalar_lea.hbm %s0, %s434
          %s437 = sshll.u32 %s430, 4
          %s438 = int_to_ptr.vmem [resolvable:$true] %s437
          %440 = dma.hbm_to_vmem [thread:$0]  %s435, 128, %s438, %s427
        $region72: #{tpu_custom_call.1} parent=67 // pred_fallthru
          _
      $region68: #{tpu_custom_call.1} parent=5 // pred_fallthru
        _
      %p441 = scmp.le.s32.totalorder 1, %s26
      %p442 = scmp.lt.s32.totalorder %s26, 3
      %p443 = pnand %p441, %p442
      %p444 = pneg %p443
      // Predicated region
      $region73: #{tpu_custom_call.1} parent=5 // pred_check
        _
      $region74: #{tpu_custom_call.1} parent=5 // pred_check_branch
        %446 = sbr.rel (%p443) target = $region76
      $region75: #{tpu_custom_call.1} parent=5 // pred_region
        %s447 = ssub.s32 %s26, 1
        %s448 = sand.u32 %s51, 1
        %s449 = scalar_lea.sflag [#allocation6], %s448
        %s450 = sand.u32 %s51, 1
        %s451 = smul.addr %s450, 8
        %s452 = scalar_lea.vmem [#allocation5], %s451
        // Predicated region
        $region77: #{tpu_custom_call.1} parent=75 // pred_check
          %p453 = pneg %p64
        $region78: #{tpu_custom_call.1} parent=75 // pred_check_branch
          %455 = sbr.rel (%p453) target = $region80
        $region79: #{tpu_custom_call.1} parent=75 // pred_region
          %456 = dma.done %s449, 128
        $region80: #{tpu_custom_call.1} parent=75 // pred_fallthru
          _
        %s457 = sand.u32 %s51, 1
        %s458 = scalar_lea.sflag [#allocation6], %s457
        %s459 = sand.u32 %s51, 1
        %s460 = smul.addr %s459, 8
        %s461 = scalar_lea.vmem [#allocation5], %s460
        %p462 = pneg %p64
        %p463 = pneg %p61
        %p464 = pneg %p85
        %p465 = pneg %p82
        %p466 = pneg %p106
        %p467 = pneg %p103
        %p468 = pneg %p127
        %p469 = pneg %p124
        %p470 = pneg %p148
        %p471 = pneg %p145
        %p472 = pneg %p169
        %p473 = pneg %p166
        %p474 = pneg %p190
        %p475 = pneg %p187
        %p476 = pneg %p211
        %p477 = pneg %p208
        %p478 = pneg %p232
        %p479 = pneg %p229
        %p480 = pneg %p253
        %p481 = pneg %p250
        %p482 = pneg %p274
        %p483 = pneg %p271
        %p484 = pneg %p295
        %p485 = pneg %p292
        %p486 = pneg %p316
        %p487 = pneg %p313
        %p488 = pneg %p337
        %p489 = pneg %p334
        %p490 = pneg %p365
        %p491 = pneg %p362
        %s492 = sand.u32 %s352, 1
        %s493 = scalar_lea.sflag [#allocation7], %s492
        %s494 = sand.u32 %s352, 1
        %s495 = smul.addr %s494, 8
        %s496 = scalar_lea.vmem [#allocation8], %s495
        %p497 = scmp.eq.s32.totalorder %s36, 0
        // Predicated region
        $region81: #{tpu_custom_call.1} parent=75 // pred_check
          %p498 = pneg %p497
        $region82: #{tpu_custom_call.1} parent=75 // pred_check_branch
          %500 = sbr.rel (%p498) target = $region84
        $region83: #{tpu_custom_call.1} parent=75 // pred_region
          %v501 = vld [vmem:[%s452] sm:$0xff]
          %v502 = vld [vmem:[%s6] sm:$0x1]
          %v503 = vld [vmem:[%s7] sm:$0x1]
          %vm504 = vcmask 261120
          %v505 = vsel %vm504, %v501, 0.0
          %506 = vadd.xlane.f32.xlu0 %v505
          %v507 = vpop.xlane.xlu0 %506
          %v508 = vrcp.pop 32.0
          %v509 = vmul.f32 %v507, %v508
          %v510 = vmul.f32 %v501, %v501
          %v511 = vsel %vm504, %v510, 0.0
          %512 = vadd.xlane.f32.xlu0 %v511
          %v513 = vpop.xlane.xlu0 %512
          %v514 = vmul.f32 %v513, %v508
          %v515 = vmul.f32 %v509, %v509
          %v516 = vsub.f32 %v514, %v515
          %v517 = vadd.f32 %v516, 1e-05
          %v518 = vrsqrt.pop %v517
          %v519 = vsub.f32 %v501, %v509
          %v520 = vmul.f32 %v519, %v518
          %v522 = vlaneseq
          %v523 = vshrl.u32 %v522, 7
          %v524 = vsub.s32 0, %v523
          %v525 = vrot.slane %v502, %v524
          %v527 = vmul.f32 %v520, %v525
          %v529 = vlaneseq
          %v530 = vshrl.u32 %v529, 7
          %v531 = vsub.s32 0, %v530
          %v532 = vrot.slane %v503, %v531
          %v534 = vadd.f32 %v527, %v532
          %v535 = vld [vmem:[%s1] sm:$0xff]
          %v536 = vld [vmem:[%s1 + $0x8] sm:$0xff]
          %v537 = vld [vmem:[%s1 + $0x10] sm:$0xff]
          %v538 = vld [vmem:[%s1 + $0x18] sm:$0xff]
          %v540 = vsel %vm504, %v534, 0
          %542 = vmatprep.subr.mxu0 0.0
          %543 = vmatpush1.msra.mxu0 %v535
          %544 = vmatprep.subr.mxu0 0.0
          %545 = vmatpush1.msra.mxu0 %v536
          %546 = vmatprep.subr.mxu0 0.0
          %547 = vmatpush1.msra.mxu0 %v537
          %548 = vmatprep.subr.mxu0 0.0
          %549 = vmatpush1.msra.mxu0 %v538
          %550 = vmatprep.subr.mxu0 0.0
          %551 = vmatpush1.msra.mxu0 0.0
          %552 = vmatprep.subr.mxu0 0.0
          %553 = vmatpush1.msra.mxu0 0.0
          %554 = vmatprep.subr.mxu0 0.0
          %555 = vmatpush1.msra.mxu0 0.0
          %556 = vmatprep.subr.mxu0 0.0
          %557 = vmatpush1.msra.mxu0 0.0
          %558 = vmatprep.subr.mxu0 0.0
          %559 = vmatpush1.msra.mxu0 0.0
          %560 = vmatprep.subr.mxu0 0.0
          %561 = vmatpush1.msra.mxu0 0.0
          %562 = vmatprep.subr.mxu0 0.0
          %563 = vmatpush1.msra.mxu0 0.0
          %564 = vmatprep.subr.mxu0 0.0
          %565 = vmatpush1.msra.mxu0 0.0
          %566 = vmatprep.subr.mxu0 0.0
          %567 = vmatpush1.msra.mxu0 0.0
          %568 = vmatprep.subr.mxu0 0.0
          %569 = vmatpush1.msra.mxu0 0.0
          %570 = vmatprep.subr.mxu0 0.0
          %571 = vmatpush1.msra.mxu0 0.0
          %572 = vmatprep.subr.mxu0 0.0
          %573 = vmatpush1.msra.mxu0 0.0
          %574 = vmatprep.subr.mxu0 0.0
          %575 = vmatpush1.msra.mxu0 0.0
          %576 = vmatprep.subr.mxu0 0.0
          %577 = vmatpush1.msra.mxu0 0.0
          %578 = vmatprep.subr.mxu0 0.0
          %579 = vmatpush1.msra.mxu0 0.0
          %580 = vmatprep.subr.mxu0 0.0
          %581 = vmatpush1.msra.mxu0 0.0
          %582 = vmatprep.subr.mxu0 0.0
          %583 = vmatpush1.msra.mxu0 0.0
          %584 = vmatprep.subr.mxu0 0.0
          %585 = vmatpush1.msra.mxu0 0.0
          %586 = vmatprep.subr.mxu0 0.0
          %587 = vmatpush1.msra.mxu0 0.0
          %588 = vmatprep.subr.mxu0 0.0
          %589 = vmatpush1.msra.mxu0 0.0
          %590 = vmatprep.subr.mxu0 0.0
          %591 = vmatpush1.msra.mxu0 0.0
          %592 = vmatprep.subr.mxu0 0.0
          %593 = vmatpush1.msra.mxu0 0.0
          %594 = vmatprep.subr.mxu0 0.0
          %595 = vmatpush1.msra.mxu0 0.0
          %596 = vmatprep.subr.mxu0 0.0
          %597 = vmatpush1.msra.mxu0 0.0
          %598 = vmatprep.subr.mxu0 0.0
          %599 = vmatpush1.msra.mxu0 0.0
          %600 = vmatprep.subr.mxu0 0.0
          %601 = vmatpush1.msra.mxu0 0.0
          %602 = vmatprep.subr.mxu0 0.0
          %603 = vmatpush1.msra.mxu0 0.0
          %604 = vmatprep.subr.mxu0 0.0
          %605 = vmatpush1.msra.mxu0 0.0
          %606 = vmatprep.mubr.f32.mxu0 0.0
          %607 = vmatmul.mubr.f32.gmra.mrb[0].mxu0 %v540
          %v608 = vpop.f32.mrb[0].mxu0
          %v609 = vadd.f32 0.0, %v608
          %v610 = vpop.f32.mrb[0].mxu0
          %611 = vdwg.mxu0
          %v612 = vld [vmem:[%s2] sm:$0xff]
          %v613 = vld [vmem:[%s2 + $0x8] sm:$0xff]
          %v614 = vld [vmem:[%s2 + $0x10] sm:$0xff]
          %v615 = vld [vmem:[%s2 + $0x18] sm:$0xff]
          %616 = vmatprep.subr.mxu0 0.0
          %617 = vmatpush1.msra.mxu0 %v612
          %618 = vmatprep.subr.mxu0 0.0
          %619 = vmatpush1.msra.mxu0 %v613
          %620 = vmatprep.subr.mxu0 0.0
          %621 = vmatpush1.msra.mxu0 %v614
          %622 = vmatprep.subr.mxu0 0.0
          %623 = vmatpush1.msra.mxu0 %v615
          %624 = vmatprep.subr.mxu0 0.0
          %625 = vmatpush1.msra.mxu0 0.0
          %626 = vmatprep.subr.mxu0 0.0
          %627 = vmatpush1.msra.mxu0 0.0
          %628 = vmatprep.subr.mxu0 0.0
          %629 = vmatpush1.msra.mxu0 0.0
          %630 = vmatprep.subr.mxu0 0.0
          %631 = vmatpush1.msra.mxu0 0.0
          %632 = vmatprep.subr.mxu0 0.0
          %633 = vmatpush1.msra.mxu0 0.0
          %634 = vmatprep.subr.mxu0 0.0
          %635 = vmatpush1.msra.mxu0 0.0
          %636 = vmatprep.subr.mxu0 0.0
          %637 = vmatpush1.msra.mxu0 0.0
          %638 = vmatprep.subr.mxu0 0.0
          %639 = vmatpush1.msra.mxu0 0.0
          %640 = vmatprep.subr.mxu0 0.0
          %641 = vmatpush1.msra.mxu0 0.0
          %642 = vmatprep.subr.mxu0 0.0
          %643 = vmatpush1.msra.mxu0 0.0
          %644 = vmatprep.subr.mxu0 0.0
          %645 = vmatpush1.msra.mxu0 0.0
          %646 = vmatprep.subr.mxu0 0.0
          %647 = vmatpush1.msra.mxu0 0.0
          %648 = vmatprep.subr.mxu0 0.0
          %649 = vmatpush1.msra.mxu0 0.0
          %650 = vmatprep.subr.mxu0 0.0
          %651 = vmatpush1.msra.mxu0 0.0
          %652 = vmatprep.subr.mxu0 0.0
          %653 = vmatpush1.msra.mxu0 0.0
          %654 = vmatprep.subr.mxu0 0.0
          %655 = vmatpush1.msra.mxu0 0.0
          %656 = vmatprep.subr.mxu0 0.0
          %657 = vmatpush1.msra.mxu0 0.0
          %658 = vmatprep.subr.mxu0 0.0
          %659 = vmatpush1.msra.mxu0 0.0
          %660 = vmatprep.subr.mxu0 0.0
          %661 = vmatpush1.msra.mxu0 0.0
          %662 = vmatprep.subr.mxu0 0.0
          %663 = vmatpush1.msra.mxu0 0.0
          %664 = vmatprep.subr.mxu0 0.0
          %665 = vmatpush1.msra.mxu0 0.0
          %666 = vmatprep.subr.mxu0 0.0
          %667 = vmatpush1.msra.mxu0 0.0
          %668 = vmatprep.subr.mxu0 0.0
          %669 = vmatpush1.msra.mxu0 0.0
          %670 = vmatprep.subr.mxu0 0.0
          %671 = vmatpush1.msra.mxu0 0.0
          %672 = vmatprep.subr.mxu0 0.0
          %673 = vmatpush1.msra.mxu0 0.0
          %674 = vmatprep.subr.mxu0 0.0
          %675 = vmatpush1.msra.mxu0 0.0
          %676 = vmatprep.subr.mxu0 0.0
          %677 = vmatpush1.msra.mxu0 0.0
          %678 = vmatprep.subr.mxu0 0.0
          %679 = vmatpush1.msra.mxu0 0.0
          %680 = vmatprep.mubr.f32.mxu0 0.0
          %681 = vmatmul.mubr.f32.gmra.mrb[0].mxu0 %v540
          %v682 = vpop.f32.mrb[0].mxu0
          %v683 = vadd.f32 0.0, %v682
          %v684 = vpop.f32.mrb[0].mxu0
          %685 = vdwg.mxu0
          %v686 = vld [vmem:[%s3] sm:$0xff]
          %v687 = vld [vmem:[%s3 + $0x8] sm:$0xff]
          %v688 = vld [vmem:[%s3 + $0x10] sm:$0xff]
          %v689 = vld [vmem:[%s3 + $0x18] sm:$0xff]
          %690 = vmatprep.subr.mxu0 0.0
          %691 = vmatpush1.msra.mxu0 %v686
          %692 = vmatprep.subr.mxu0 0.0
          %693 = vmatpush1.msra.mxu0 %v687
          %694 = vmatprep.subr.mxu0 0.0
          %695 = vmatpush1.msra.mxu0 %v688
          %696 = vmatprep.subr.mxu0 0.0
          %697 = vmatpush1.msra.mxu0 %v689
          %698 = vmatprep.subr.mxu0 0.0
          %699 = vmatpush1.msra.mxu0 0.0
          %700 = vmatprep.subr.mxu0 0.0
          %701 = vmatpush1.msra.mxu0 0.0
          %702 = vmatprep.subr.mxu0 0.0
          %703 = vmatpush1.msra.mxu0 0.0
          %704 = vmatprep.subr.mxu0 0.0
          %705 = vmatpush1.msra.mxu0 0.0
          %706 = vmatprep.subr.mxu0 0.0
          %707 = vmatpush1.msra.mxu0 0.0
          %708 = vmatprep.subr.mxu0 0.0
          %709 = vmatpush1.msra.mxu0 0.0
          %710 = vmatprep.subr.mxu0 0.0
          %711 = vmatpush1.msra.mxu0 0.0
          %712 = vmatprep.subr.mxu0 0.0
          %713 = vmatpush1.msra.mxu0 0.0
          %714 = vmatprep.subr.mxu0 0.0
          %715 = vmatpush1.msra.mxu0 0.0
          %716 = vmatprep.subr.mxu0 0.0
          %717 = vmatpush1.msra.mxu0 0.0
          %718 = vmatprep.subr.mxu0 0.0
          %719 = vmatpush1.msra.mxu0 0.0
          %720 = vmatprep.subr.mxu0 0.0
          %721 = vmatpush1.msra.mxu0 0.0
          %722 = vmatprep.subr.mxu0 0.0
          %723 = vmatpush1.msra.mxu0 0.0
          %724 = vmatprep.subr.mxu0 0.0
          %725 = vmatpush1.msra.mxu0 0.0
          %726 = vmatprep.subr.mxu0 0.0
          %727 = vmatpush1.msra.mxu0 0.0
          %728 = vmatprep.subr.mxu0 0.0
          %729 = vmatpush1.msra.mxu0 0.0
          %730 = vmatprep.subr.mxu0 0.0
          %731 = vmatpush1.msra.mxu0 0.0
          %732 = vmatprep.subr.mxu0 0.0
          %733 = vmatpush1.msra.mxu0 0.0
          %734 = vmatprep.subr.mxu0 0.0
          %735 = vmatpush1.msra.mxu0 0.0
          %736 = vmatprep.subr.mxu0 0.0
          %737 = vmatpush1.msra.mxu0 0.0
          %738 = vmatprep.subr.mxu0 0.0
          %739 = vmatpush1.msra.mxu0 0.0
          %740 = vmatprep.subr.mxu0 0.0
          %741 = vmatpush1.msra.mxu0 0.0
          %742 = vmatprep.subr.mxu0 0.0
          %743 = vmatpush1.msra.mxu0 0.0
          %744 = vmatprep.subr.mxu0 0.0
          %745 = vmatpush1.msra.mxu0 0.0
          %746 = vmatprep.subr.mxu0 0.0
          %747 = vmatpush1.msra.mxu0 0.0
          %748 = vmatprep.subr.mxu0 0.0
          %749 = vmatpush1.msra.mxu0 0.0
          %750 = vmatprep.subr.mxu0 0.0
          %751 = vmatpush1.msra.mxu0 0.0
          %752 = vmatprep.subr.mxu0 0.0
          %753 = vmatpush1.msra.mxu0 0.0
          %754 = vmatprep.mubr.f32.mxu0 0.0
          %755 = vmatmul.mubr.f32.gmra.mrb[0].mxu0 %v540
          %v756 = vpop.f32.mrb[0].mxu0
          %v757 = vadd.f32 0.0, %v756
          %v758 = vpop.f32.mrb[0].mxu0
          %759 = vdwg.mxu0
          %761 = vrot.lane.b32.xlu0 %v609, 120
          %v762 = vpop.permute.xlu0 %761
          %764 = vrot.lane.b32.xlu0 %v609, 112
          %v765 = vpop.permute.xlu0 %764
          %767 = vrot.lane.b32.xlu0 %v609, 104
          %v768 = vpop.permute.xlu0 %767
          %v770 = vcombine.low %v609, %v765
          %v771 = vcombine.high %v609, %v765
          %v773 = vunpack.c.l.s4 1983009808
          %v774 = vunpack.c.0.s8 %v773
          %v775 = vlaneseq
          %v776 = vshrl.u32 %v775, 7
          %v777 = vsub.s32 %v774, %v776
          %v778 = vrot.slane %v770, %v777
          %v780 = vunpack.c.l.s4 1983009808
          %v781 = vunpack.c.0.s8 %v780
          %v782 = vlaneseq
          %v783 = vshrl.u32 %v782, 7
          %v784 = vsub.s32 %v781, %v783
          %v785 = vrot.slane %v771, %v784
          %v786 = vcombine.low %v762, %v768
          %v787 = vcombine.high %v762, %v768
          %v789 = vunpack.c.l.s4 1983009808
          %v790 = vunpack.c.0.s8 %v789
          %v791 = vlaneseq
          %v792 = vshrl.u32 %v791, 7
          %v793 = vsub.s32 %v790, %v792
          %v794 = vrot.slane %v786, %v793
          %v796 = vunpack.c.l.s4 1983009808
          %v797 = vunpack.c.0.s8 %v796
          %v798 = vlaneseq
          %v799 = vshrl.u32 %v798, 7
          %v800 = vsub.s32 %v797, %v799
          %v801 = vrot.slane %v787, %v800
          %v802 = vcombine.low %v778, %v794
          %v803 = vcombine.high %v778, %v794
          %v805 = vunpack.c.l.s4 1934713408
          %v806 = vunpack.c.0.s8 %v805
          %v807 = vlaneseq
          %v808 = vshrl.u32 %v807, 7
          %v809 = vsub.s32 %v806, %v808
          %v810 = vrot.slane %v802, %v809
          %v812 = vunpack.c.l.s4 1934713408
          %v813 = vunpack.c.0.s8 %v812
          %v814 = vlaneseq
          %v815 = vshrl.u32 %v814, 7
          %v816 = vsub.s32 %v813, %v815
          %v817 = vrot.slane %v803, %v816
          %v818 = vcombine.low %v785, %v801
          %v819 = vcombine.high %v785, %v801
          %v821 = vunpack.c.l.s4 1934713408
          %v822 = vunpack.c.0.s8 %v821
          %v823 = vlaneseq
          %v824 = vshrl.u32 %v823, 7
          %v825 = vsub.s32 %v822, %v824
          %v826 = vrot.slane %v818, %v825
          %v828 = vunpack.c.l.s4 1934713408
          %v829 = vunpack.c.0.s8 %v828
          %v830 = vlaneseq
          %v831 = vshrl.u32 %v830, 7
          %v832 = vsub.s32 %v829, %v831
          %v833 = vrot.slane %v819, %v832
          %v834 = vcombine.high %v810, 0.0
          %v835 = vcombine.high %v817, 0.0
          %v836 = vcombine.high %v826, 0.0
          %v837 = vcombine.high %v833, 0.0
          %v838 = vcombine.low %v810, %v817
          %v840 = vunpack.c.l.s4 1983009808
          %v841 = vunpack.c.0.s8 %v840
          %v842 = vlaneseq
          %v843 = vshrl.u32 %v842, 7
          %v844 = vsub.s32 %v841, %v843
          %v845 = vrot.slane %v838, %v844
          %v846 = vcombine.low %v834, %v835
          %v848 = vunpack.c.l.s4 1983009808
          %v849 = vunpack.c.0.s8 %v848
          %v850 = vlaneseq
          %v851 = vshrl.u32 %v850, 7
          %v852 = vsub.s32 %v849, %v851
          %v853 = vrot.slane %v846, %v852
          %v854 = vcombine.low %v826, %v833
          %v856 = vunpack.c.l.s4 1983009808
          %v857 = vunpack.c.0.s8 %v856
          %v858 = vlaneseq
          %v859 = vshrl.u32 %v858, 7
          %v860 = vsub.s32 %v857, %v859
          %v861 = vrot.slane %v854, %v860
          %v862 = vcombine.low %v836, %v837
          %v864 = vunpack.c.l.s4 1983009808
          %v865 = vunpack.c.0.s8 %v864
          %v866 = vlaneseq
          %v867 = vshrl.u32 %v866, 7
          %v868 = vsub.s32 %v865, %v867
          %v869 = vrot.slane %v862, %v868
          %v870 = vcombine.low %v845, %v853
          %v871 = vcombine.high %v845, %v853
          %v873 = vunpack.c.l.s4 1934713408
          %v874 = vunpack.c.0.s8 %v873
          %v875 = vlaneseq
          %v876 = vshrl.u32 %v875, 7
          %v877 = vsub.s32 %v874, %v876
          %v878 = vrot.slane %v870, %v877
          %v880 = vunpack.c.l.s4 1934713408
          %v881 = vunpack.c.0.s8 %v880
          %v882 = vlaneseq
          %v883 = vshrl.u32 %v882, 7
          %v884 = vsub.s32 %v881, %v883
          %v885 = vrot.slane %v871, %v884
          %v886 = vcombine.low %v861, %v869
          %v887 = vcombine.high %v861, %v869
          %v889 = vunpack.c.l.s4 1934713408
          %v890 = vunpack.c.0.s8 %v889
          %v891 = vlaneseq
          %v892 = vshrl.u32 %v891, 7
          %v893 = vsub.s32 %v890, %v892
          %v894 = vrot.slane %v886, %v893
          %v896 = vunpack.c.l.s4 1934713408
          %v897 = vunpack.c.0.s8 %v896
          %v898 = vlaneseq
          %v899 = vshrl.u32 %v898, 7
          %v900 = vsub.s32 %v897, %v899
          %v901 = vrot.slane %v887, %v900
          %v902 = vcombine.low %v878, %v894
          %v903 = vcombine.high %v878, %v894
          %v904 = vcombine.low %v885, %v901
          %v905 = vcombine.high %v885, %v901
          %vm906 = vcmask 64512
          %907 = vst.msk [vmem:[#allocation2] sm:$0xff] %vm906, %v902
          %908 = vst.msk [vmem:[#allocation2 + $0x8] sm:$0xff] %vm906, %v903
          %909 = vst.msk [vmem:[#allocation2 + $0x10] sm:$0xff] %vm906, %v904
          %910 = vst.msk [vmem:[#allocation2 + $0x18] sm:$0xff] %vm906, %v905
          %912 = vrot.lane.b32.xlu0 %v683, 120
          %v913 = vpop.permute.xlu0 %912
          %915 = vrot.lane.b32.xlu0 %v683, 112
          %v916 = vpop.permute.xlu0 %915
          %918 = vrot.lane.b32.xlu0 %v683, 104
          %v919 = vpop.permute.xlu0 %918
          %v921 = vcombine.low %v683, %v916
          %v922 = vcombine.high %v683, %v916
          %v924 = vunpack.c.l.s4 1983009808
          %v925 = vunpack.c.0.s8 %v924
          %v926 = vlaneseq
          %v927 = vshrl.u32 %v926, 7
          %v928 = vsub.s32 %v925, %v927
          %v929 = vrot.slane %v921, %v928
          %v931 = vunpack.c.l.s4 1983009808
          %v932 = vunpack.c.0.s8 %v931
          %v933 = vlaneseq
          %v934 = vshrl.u32 %v933, 7
          %v935 = vsub.s32 %v932, %v934
          %v936 = vrot.slane %v922, %v935
          %v937 = vcombine.low %v913, %v919
          %v938 = vcombine.high %v913, %v919
          %v940 = vunpack.c.l.s4 1983009808
          %v941 = vunpack.c.0.s8 %v940
          %v942 = vlaneseq
          %v943 = vshrl.u32 %v942, 7
          %v944 = vsub.s32 %v941, %v943
          %v945 = vrot.slane %v937, %v944
          %v947 = vunpack.c.l.s4 1983009808
          %v948 = vunpack.c.0.s8 %v947
          %v949 = vlaneseq
          %v950 = vshrl.u32 %v949, 7
          %v951 = vsub.s32 %v948, %v950
          %v952 = vrot.slane %v938, %v951
          %v953 = vcombine.low %v929, %v945
          %v954 = vcombine.high %v929, %v945
          %v956 = vunpack.c.l.s4 1934713408
          %v957 = vunpack.c.0.s8 %v956
          %v958 = vlaneseq
          %v959 = vshrl.u32 %v958, 7
          %v960 = vsub.s32 %v957, %v959
          %v961 = vrot.slane %v953, %v960
          %v963 = vunpack.c.l.s4 1934713408
          %v964 = vunpack.c.0.s8 %v963
          %v965 = vlaneseq
          %v966 = vshrl.u32 %v965, 7
          %v967 = vsub.s32 %v964, %v966
          %v968 = vrot.slane %v954, %v967
          %v969 = vcombine.low %v936, %v952
          %v970 = vcombine.high %v936, %v952
          %v972 = vunpack.c.l.s4 1934713408
          %v973 = vunpack.c.0.s8 %v972
          %v974 = vlaneseq
          %v975 = vshrl.u32 %v974, 7
          %v976 = vsub.s32 %v973, %v975
          %v977 = vrot.slane %v969, %v976
          %v979 = vunpack.c.l.s4 1934713408
          %v980 = vunpack.c.0.s8 %v979
          %v981 = vlaneseq
          %v982 = vshrl.u32 %v981, 7
          %v983 = vsub.s32 %v980, %v982
          %v984 = vrot.slane %v970, %v983
          %v985 = vcombine.high %v961, 0.0
          %v986 = vcombine.high %v968, 0.0
          %v987 = vcombine.high %v977, 0.0
          %v988 = vcombine.high %v984, 0.0
          %v989 = vcombine.low %v961, %v968
          %v991 = vunpack.c.l.s4 1983009808
          %v992 = vunpack.c.0.s8 %v991
          %v993 = vlaneseq
          %v994 = vshrl.u32 %v993, 7
          %v995 = vsub.s32 %v992, %v994
          %v996 = vrot.slane %v989, %v995
          %v997 = vcombine.low %v985, %v986
          %v999 = vunpack.c.l.s4 1983009808
          %v1000 = vunpack.c.0.s8 %v999
          %v1001 = vlaneseq
          %v1002 = vshrl.u32 %v1001, 7
          %v1003 = vsub.s32 %v1000, %v1002
          %v1004 = vrot.slane %v997, %v1003
          %v1005 = vcombine.low %v977, %v984
          %v1007 = vunpack.c.l.s4 1983009808
          %v1008 = vunpack.c.0.s8 %v1007
          %v1009 = vlaneseq
          %v1010 = vshrl.u32 %v1009, 7
          %v1011 = vsub.s32 %v1008, %v1010
          %v1012 = vrot.slane %v1005, %v1011
          %v1013 = vcombine.low %v987, %v988
          %v1015 = vunpack.c.l.s4 1983009808
          %v1016 = vunpack.c.0.s8 %v1015
          %v1017 = vlaneseq
          %v1018 = vshrl.u32 %v1017, 7
          %v1019 = vsub.s32 %v1016, %v1018
          %v1020 = vrot.slane %v1013, %v1019
          %v1021 = vcombine.low %v996, %v1004
          %v1022 = vcombine.high %v996, %v1004
          %v1024 = vunpack.c.l.s4 1934713408
          %v1025 = vunpack.c.0.s8 %v1024
          %v1026 = vlaneseq
          %v1027 = vshrl.u32 %v1026, 7
          %v1028 = vsub.s32 %v1025, %v1027
          %v1029 = vrot.slane %v1021, %v1028
          %v1031 = vunpack.c.l.s4 1934713408
          %v1032 = vunpack.c.0.s8 %v1031
          %v1033 = vlaneseq
          %v1034 = vshrl.u32 %v1033, 7
          %v1035 = vsub.s32 %v1032, %v1034
          %v1036 = vrot.slane %v1022, %v1035
          %v1037 = vcombine.low %v1012, %v1020
          %v1038 = vcombine.high %v1012, %v1020
          %v1040 = vunpack.c.l.s4 1934713408
          %v1041 = vunpack.c.0.s8 %v1040
          %v1042 = vlaneseq
          %v1043 = vshrl.u32 %v1042, 7
          %v1044 = vsub.s32 %v1041, %v1043
          %v1045 = vrot.slane %v1037, %v1044
          %v1047 = vunpack.c.l.s4 1934713408
          %v1048 = vunpack.c.0.s8 %v1047
          %v1049 = vlaneseq
          %v1050 = vshrl.u32 %v1049, 7
          %v1051 = vsub.s32 %v1048, %v1050
          %v1052 = vrot.slane %v1038, %v1051
          %v1053 = vcombine.low %v1029, %v1045
          %v1054 = vcombine.high %v1029, %v1045
          %v1055 = vcombine.low %v1036, %v1052
          %v1056 = vcombine.high %v1036, %v1052
          %1057 = vst.msk [vmem:[#allocation3] sm:$0xff] %vm906, %v1053
          %1058 = vst.msk [vmem:[#allocation3 + $0x8] sm:$0xff] %vm906, %v1054
          %1059 = vst.msk [vmem:[#allocation3 + $0x10] sm:$0xff] %vm906, %v1055
          %1060 = vst.msk [vmem:[#allocation3 + $0x18] sm:$0xff] %vm906, %v1056
          %1062 = vrot.lane.b32.xlu0 %v757, 120
          %v1063 = vpop.permute.xlu0 %1062
          %1065 = vrot.lane.b32.xlu0 %v757, 112
          %v1066 = vpop.permute.xlu0 %1065
          %1068 = vrot.lane.b32.xlu0 %v757, 104
          %v1069 = vpop.permute.xlu0 %1068
          %v1071 = vcombine.low %v757, %v1066
          %v1072 = vcombine.high %v757, %v1066
          %v1074 = vunpack.c.l.s4 1983009808
          %v1075 = vunpack.c.0.s8 %v1074
          %v1076 = vlaneseq
          %v1077 = vshrl.u32 %v1076, 7
          %v1078 = vsub.s32 %v1075, %v1077
          %v1079 = vrot.slane %v1071, %v1078
          %v1081 = vunpack.c.l.s4 1983009808
          %v1082 = vunpack.c.0.s8 %v1081
          %v1083 = vlaneseq
          %v1084 = vshrl.u32 %v1083, 7
          %v1085 = vsub.s32 %v1082, %v1084
          %v1086 = vrot.slane %v1072, %v1085
          %v1087 = vcombine.low %v1063, %v1069
          %v1088 = vcombine.high %v1063, %v1069
          %v1090 = vunpack.c.l.s4 1983009808
          %v1091 = vunpack.c.0.s8 %v1090
          %v1092 = vlaneseq
          %v1093 = vshrl.u32 %v1092, 7
          %v1094 = vsub.s32 %v1091, %v1093
          %v1095 = vrot.slane %v1087, %v1094
          %v1097 = vunpack.c.l.s4 1983009808
          %v1098 = vunpack.c.0.s8 %v1097
          %v1099 = vlaneseq
          %v1100 = vshrl.u32 %v1099, 7
          %v1101 = vsub.s32 %v1098, %v1100
          %v1102 = vrot.slane %v1088, %v1101
          %v1103 = vcombine.low %v1079, %v1095
          %v1104 = vcombine.high %v1079, %v1095
          %v1106 = vunpack.c.l.s4 1934713408
          %v1107 = vunpack.c.0.s8 %v1106
          %v1108 = vlaneseq
          %v1109 = vshrl.u32 %v1108, 7
          %v1110 = vsub.s32 %v1107, %v1109
          %v1111 = vrot.slane %v1103, %v1110
          %v1113 = vunpack.c.l.s4 1934713408
          %v1114 = vunpack.c.0.s8 %v1113
          %v1115 = vlaneseq
          %v1116 = vshrl.u32 %v1115, 7
          %v1117 = vsub.s32 %v1114, %v1116
          %v1118 = vrot.slane %v1104, %v1117
          %v1119 = vcombine.low %v1086, %v1102
          %v1120 = vcombine.high %v1086, %v1102
          %v1122 = vunpack.c.l.s4 1934713408
          %v1123 = vunpack.c.0.s8 %v1122
          %v1124 = vlaneseq
          %v1125 = vshrl.u32 %v1124, 7
          %v1126 = vsub.s32 %v1123, %v1125
          %v1127 = vrot.slane %v1119, %v1126
          %v1129 = vunpack.c.l.s4 1934713408
          %v1130 = vunpack.c.0.s8 %v1129
          %v1131 = vlaneseq
          %v1132 = vshrl.u32 %v1131, 7
          %v1133 = vsub.s32 %v1130, %v1132
          %v1134 = vrot.slane %v1120, %v1133
          %v1135 = vcombine.high %v1111, 0.0
          %v1136 = vcombine.high %v1118, 0.0
          %v1137 = vcombine.high %v1127, 0.0
          %v1138 = vcombine.high %v1134, 0.0
          %v1139 = vcombine.low %v1111, %v1118
          %v1141 = vunpack.c.l.s4 1983009808
          %v1142 = vunpack.c.0.s8 %v1141
          %v1143 = vlaneseq
          %v1144 = vshrl.u32 %v1143, 7
          %v1145 = vsub.s32 %v1142, %v1144
          %v1146 = vrot.slane %v1139, %v1145
          %v1147 = vcombine.low %v1135, %v1136
          %v1149 = vunpack.c.l.s4 1983009808
          %v1150 = vunpack.c.0.s8 %v1149
          %v1151 = vlaneseq
          %v1152 = vshrl.u32 %v1151, 7
          %v1153 = vsub.s32 %v1150, %v1152
          %v1154 = vrot.slane %v1147, %v1153
          %v1155 = vcombine.low %v1127, %v1134
          %v1157 = vunpack.c.l.s4 1983009808
          %v1158 = vunpack.c.0.s8 %v1157
          %v1159 = vlaneseq
          %v1160 = vshrl.u32 %v1159, 7
          %v1161 = vsub.s32 %v1158, %v1160
          %v1162 = vrot.slane %v1155, %v1161
          %v1163 = vcombine.low %v1137, %v1138
          %v1165 = vunpack.c.l.s4 1983009808
          %v1166 = vunpack.c.0.s8 %v1165
          %v1167 = vlaneseq
          %v1168 = vshrl.u32 %v1167, 7
          %v1169 = vsub.s32 %v1166, %v1168
          %v1170 = vrot.slane %v1163, %v1169
          %v1171 = vcombine.low %v1146, %v1154
          %v1172 = vcombine.high %v1146, %v1154
          %v1174 = vunpack.c.l.s4 1934713408
          %v1175 = vunpack.c.0.s8 %v1174
          %v1176 = vlaneseq
          %v1177 = vshrl.u32 %v1176, 7
          %v1178 = vsub.s32 %v1175, %v1177
          %v1179 = vrot.slane %v1171, %v1178
          %v1181 = vunpack.c.l.s4 1934713408
          %v1182 = vunpack.c.0.s8 %v1181
          %v1183 = vlaneseq
          %v1184 = vshrl.u32 %v1183, 7
          %v1185 = vsub.s32 %v1182, %v1184
          %v1186 = vrot.slane %v1172, %v1185
          %v1187 = vcombine.low %v1162, %v1170
          %v1188 = vcombine.high %v1162, %v1170
          %v1190 = vunpack.c.l.s4 1934713408
          %v1191 = vunpack.c.0.s8 %v1190
          %v1192 = vlaneseq
          %v1193 = vshrl.u32 %v1192, 7
          %v1194 = vsub.s32 %v1191, %v1193
          %v1195 = vrot.slane %v1187, %v1194
          %v1197 = vunpack.c.l.s4 1934713408
          %v1198 = vunpack.c.0.s8 %v1197
          %v1199 = vlaneseq
          %v1200 = vshrl.u32 %v1199, 7
          %v1201 = vsub.s32 %v1198, %v1200
          %v1202 = vrot.slane %v1188, %v1201
          %v1203 = vcombine.low %v1179, %v1195
          %v1204 = vcombine.high %v1179, %v1195
          %v1205 = vcombine.low %v1186, %v1202
          %v1206 = vcombine.high %v1186, %v1202
          %1207 = vst.msk [vmem:[#allocation4] sm:$0xff] %vm906, %v1203
          %1208 = vst.msk [vmem:[#allocation4 + $0x8] sm:$0xff] %vm906, %v1204
          %1209 = vst.msk [vmem:[#allocation4 + $0x10] sm:$0xff] %vm906, %v1205
          %1210 = vst.msk [vmem:[#allocation4 + $0x18] sm:$0xff] %vm906, %v1206
        $region84: #{tpu_custom_call.1} parent=75 // pred_fallthru
          _
        %s1211 = smul.u32 %s36, 8
        %s1212 = scalar_lea.vmem %s452, %s1211 [#allocation5]
        %v1213 = vld [vmem:[%s1212] sm:$0xff]
        %s1214 = scalar_lea.vmem [#allocation2], %s1211
        %v1215 = vld [vmem:[%s1214] sm:$0xff]
        %v1216 = vld [vmem:[%s1214 + $0x8] sm:$0xff]
        %v1217 = vld [vmem:[%s1214 + $0x10] sm:$0xff]
        %v1218 = vld [vmem:[%s1214 + $0x18] sm:$0xff]
        %v1219 = vld [vmem:[#allocation3] sm:$0xff]
        %v1220 = vld [vmem:[#allocation3 + $0x8] sm:$0xff]
        %v1221 = vld [vmem:[#allocation3 + $0x10] sm:$0xff]
        %v1222 = vld [vmem:[#allocation3 + $0x18] sm:$0xff]
        %v1223 = vld [vmem:[#allocation4] sm:$0xff]
        %v1224 = vld [vmem:[#allocation4 + $0x8] sm:$0xff]
        %v1225 = vld [vmem:[#allocation4 + $0x10] sm:$0xff]
        %v1226 = vld [vmem:[#allocation4 + $0x18] sm:$0xff]
        %vm1227 = vcmask 64512
        %v1229 = vsel %vm1227, %v1215, 0
        %v1232 = vsel %vm1227, %v1219, 0
        %1234 = vmatprep.subr.mxu0 0.0
        %1235 = vmatpush1.xpose.msra.mxu0 %v1232
        %1236 = vmatprep.subr.mxu0 0.0
        %1237 = vmatpush1.xpose.msra.mxu0 0.0
        %1238 = vmatprep.subr.mxu0 0.0
        %1239 = vmatpush1.xpose.msra.mxu0 0.0
        %1240 = vmatprep.subr.mxu0 0.0
        %1241 = vmatpush1.xpose.msra.mxu0 0.0
        %1242 = vmatprep.subr.mxu0 0.0
        %1243 = vmatpush1.xpose.msra.mxu0 0.0
        %1244 = vmatprep.subr.mxu0 0.0
        %1245 = vmatpush1.xpose.msra.mxu0 0.0
        %1246 = vmatprep.subr.mxu0 0.0
        %1247 = vmatpush1.xpose.msra.mxu0 0.0
        %1248 = vmatprep.subr.mxu0 0.0
        %1249 = vmatpush1.xpose.msra.mxu0 0.0
        %1250 = vmatprep.subr.mxu0 0.0
        %1251 = vmatpush1.xpose.msra.mxu0 0.0
        %1252 = vmatprep.subr.mxu0 0.0
        %1253 = vmatpush1.xpose.msra.mxu0 0.0
        %1254 = vmatprep.subr.mxu0 0.0
        %1255 = vmatpush1.xpose.msra.mxu0 0.0
        %1256 = vmatprep.subr.mxu0 0.0
        %1257 = vmatpush1.xpose.msra.mxu0 0.0
        %1258 = vmatprep.subr.mxu0 0.0
        %1259 = vmatpush1.xpose.msra.mxu0 0.0
        %1260 = vmatprep.subr.mxu0 0.0
        %1261 = vmatpush1.xpose.msra.mxu0 0.0
        %1262 = vmatprep.subr.mxu0 0.0
        %1263 = vmatpush1.xpose.msra.mxu0 0.0
        %1264 = vmatprep.subr.mxu0 0.0
        %1265 = vmatpush1.xpose.msra.mxu0 0.0
        %1266 = vmatprep.subr.mxu0 0.0
        %1267 = vmatpush1.xpose.msra.mxu0 0.0
        %1268 = vmatprep.subr.mxu0 0.0
        %1269 = vmatpush1.xpose.msra.mxu0 0.0
        %1270 = vmatprep.subr.mxu0 0.0
        %1271 = vmatpush1.xpose.msra.mxu0 0.0
        %1272 = vmatprep.subr.mxu0 0.0
        %1273 = vmatpush1.xpose.msra.mxu0 0.0
        %1274 = vmatprep.subr.mxu0 0.0
        %1275 = vmatpush1.xpose.msra.mxu0 0.0
        %1276 = vmatprep.subr.mxu0 0.0
        %1277 = vmatpush1.xpose.msra.mxu0 0.0
        %1278 = vmatprep.subr.mxu0 0.0
        %1279 = vmatpush1.xpose.msra.mxu0 0.0
        %1280 = vmatprep.subr.mxu0 0.0
        %1281 = vmatpush1.xpose.msra.mxu0 0.0
        %1282 = vmatprep.subr.mxu0 0.0
        %1283 = vmatpush1.xpose.msra.mxu0 0.0
        %1284 = vmatprep.subr.mxu0 0.0
        %1285 = vmatpush1.xpose.msra.mxu0 0.0
        %1286 = vmatprep.subr.mxu0 0.0
        %1287 = vmatpush1.xpose.msra.mxu0 0.0
        %1288 = vmatprep.subr.mxu0 0.0
        %1289 = vmatpush1.xpose.msra.mxu0 0.0
        %1290 = vmatprep.subr.mxu0 0.0
        %1291 = vmatpush1.xpose.msra.mxu0 0.0
        %1292 = vmatprep.subr.mxu0 0.0
        %1293 = vmatpush1.xpose.msra.mxu0 0.0
        %1294 = vmatprep.subr.mxu0 0.0
        %1295 = vmatpush1.xpose.msra.mxu0 0.0
        %1296 = vmatprep.subr.mxu0 0.0
        %1297 = vmatpush1.xpose.msra.mxu0 0.0
        %1298 = vmatprep.mubr.f32.mxu0 0.0
        %1299 = vmatmul.mubr.f32.gmra.mrb[0].mxu0 %v1229
        %v1300 = vpop.f32.mrb[0].mxu0
        %v1301 = vadd.f32 0.0, %v1300
        %v1302 = vpop.f32.mrb[0].mxu0
        %1303 = vdwg.mxu0
        %v1305 = vsel %vm1227, %v1216, 0
        %v1308 = vsel %vm1227, %v1220, 0
        %1310 = vmatprep.subr.mxu0 0.0
        %1311 = vmatpush1.xpose.msra.mxu0 %v1308
        %1312 = vmatprep.subr.mxu0 0.0
        %1313 = vmatpush1.xpose.msra.mxu0 0.0
        %1314 = vmatprep.subr.mxu0 0.0
        %1315 = vmatpush1.xpose.msra.mxu0 0.0
        %1316 = vmatprep.subr.mxu0 0.0
        %1317 = vmatpush1.xpose.msra.mxu0 0.0
        %1318 = vmatprep.subr.mxu0 0.0
        %1319 = vmatpush1.xpose.msra.mxu0 0.0
        %1320 = vmatprep.subr.mxu0 0.0
        %1321 = vmatpush1.xpose.msra.mxu0 0.0
        %1322 = vmatprep.subr.mxu0 0.0
        %1323 = vmatpush1.xpose.msra.mxu0 0.0
        %1324 = vmatprep.subr.mxu0 0.0
        %1325 = vmatpush1.xpose.msra.mxu0 0.0
        %1326 = vmatprep.subr.mxu0 0.0
        %1327 = vmatpush1.xpose.msra.mxu0 0.0
        %1328 = vmatprep.subr.mxu0 0.0
        %1329 = vmatpush1.xpose.msra.mxu0 0.0
        %1330 = vmatprep.subr.mxu0 0.0
        %1331 = vmatpush1.xpose.msra.mxu0 0.0
        %1332 = vmatprep.subr.mxu0 0.0
        %1333 = vmatpush1.xpose.msra.mxu0 0.0
        %1334 = vmatprep.subr.mxu0 0.0
        %1335 = vmatpush1.xpose.msra.mxu0 0.0
        %1336 = vmatprep.subr.mxu0 0.0
        %1337 = vmatpush1.xpose.msra.mxu0 0.0
        %1338 = vmatprep.subr.mxu0 0.0
        %1339 = vmatpush1.xpose.msra.mxu0 0.0
        %1340 = vmatprep.subr.mxu0 0.0
        %1341 = vmatpush1.xpose.msra.mxu0 0.0
        %1342 = vmatprep.subr.mxu0 0.0
        %1343 = vmatpush1.xpose.msra.mxu0 0.0
        %1344 = vmatprep.subr.mxu0 0.0
        %1345 = vmatpush1.xpose.msra.mxu0 0.0
        %1346 = vmatprep.subr.mxu0 0.0
        %1347 = vmatpush1.xpose.msra.mxu0 0.0
        %1348 = vmatprep.subr.mxu0 0.0
        %1349 = vmatpush1.xpose.msra.mxu0 0.0
        %1350 = vmatprep.subr.mxu0 0.0
        %1351 = vmatpush1.xpose.msra.mxu0 0.0
        %1352 = vmatprep.subr.mxu0 0.0
        %1353 = vmatpush1.xpose.msra.mxu0 0.0
        %1354 = vmatprep.subr.mxu0 0.0
        %1355 = vmatpush1.xpose.msra.mxu0 0.0
        %1356 = vmatprep.subr.mxu0 0.0
        %1357 = vmatpush1.xpose.msra.mxu0 0.0
        %1358 = vmatprep.subr.mxu0 0.0
        %1359 = vmatpush1.xpose.msra.mxu0 0.0
        %1360 = vmatprep.subr.mxu0 0.0
        %1361 = vmatpush1.xpose.msra.mxu0 0.0
        %1362 = vmatprep.subr.mxu0 0.0
        %1363 = vmatpush1.xpose.msra.mxu0 0.0
        %1364 = vmatprep.subr.mxu0 0.0
        %1365 = vmatpush1.xpose.msra.mxu0 0.0
        %1366 = vmatprep.subr.mxu0 0.0
        %1367 = vmatpush1.xpose.msra.mxu0 0.0
        %1368 = vmatprep.subr.mxu0 0.0
        %1369 = vmatpush1.xpose.msra.mxu0 0.0
        %1370 = vmatprep.subr.mxu0 0.0
        %1371 = vmatpush1.xpose.msra.mxu0 0.0
        %1372 = vmatprep.subr.mxu0 0.0
        %1373 = vmatpush1.xpose.msra.mxu0 0.0
        %1374 = vmatprep.mubr.f32.mxu0 0.0
        %1375 = vmatmul.mubr.f32.gmra.mrb[0].mxu0 %v1305
        %v1376 = vpop.f32.mrb[0].mxu0
        %v1377 = vadd.f32 0.0, %v1376
        %v1378 = vpop.f32.mrb[0].mxu0
        %1379 = vdwg.mxu0
        %v1381 = vsel %vm1227, %v1217, 0
        %v1384 = vsel %vm1227, %v1221, 0
        %1386 = vmatprep.subr.mxu0 0.0
        %1387 = vmatpush1.xpose.msra.mxu0 %v1384
        %1388 = vmatprep.subr.mxu0 0.0
        %1389 = vmatpush1.xpose.msra.mxu0 0.0
        %1390 = vmatprep.subr.mxu0 0.0
        %1391 = vmatpush1.xpose.msra.mxu0 0.0
        %1392 = vmatprep.subr.mxu0 0.0
        %1393 = vmatpush1.xpose.msra.mxu0 0.0
        %1394 = vmatprep.subr.mxu0 0.0
        %1395 = vmatpush1.xpose.msra.mxu0 0.0
        %1396 = vmatprep.subr.mxu0 0.0
        %1397 = vmatpush1.xpose.msra.mxu0 0.0
        %1398 = vmatprep.subr.mxu0 0.0
        %1399 = vmatpush1.xpose.msra.mxu0 0.0
        %1400 = vmatprep.subr.mxu0 0.0
        %1401 = vmatpush1.xpose.msra.mxu0 0.0
        %1402 = vmatprep.subr.mxu0 0.0
        %1403 = vmatpush1.xpose.msra.mxu0 0.0
        %1404 = vmatprep.subr.mxu0 0.0
        %1405 = vmatpush1.xpose.msra.mxu0 0.0
        %1406 = vmatprep.subr.mxu0 0.0
        %1407 = vmatpush1.xpose.msra.mxu0 0.0
        %1408 = vmatprep.subr.mxu0 0.0
        %1409 = vmatpush1.xpose.msra.mxu0 0.0
        %1410 = vmatprep.subr.mxu0 0.0
        %1411 = vmatpush1.xpose.msra.mxu0 0.0
        %1412 = vmatprep.subr.mxu0 0.0
        %1413 = vmatpush1.xpose.msra.mxu0 0.0
        %1414 = vmatprep.subr.mxu0 0.0
        %1415 = vmatpush1.xpose.msra.mxu0 0.0
        %1416 = vmatprep.subr.mxu0 0.0
        %1417 = vmatpush1.xpose.msra.mxu0 0.0
        %1418 = vmatprep.subr.mxu0 0.0
        %1419 = vmatpush1.xpose.msra.mxu0 0.0
        %1420 = vmatprep.subr.mxu0 0.0
        %1421 = vmatpush1.xpose.msra.mxu0 0.0
        %1422 = vmatprep.subr.mxu0 0.0
        %1423 = vmatpush1.xpose.msra.mxu0 0.0
        %1424 = vmatprep.subr.mxu0 0.0
        %1425 = vmatpush1.xpose.msra.mxu0 0.0
        %1426 = vmatprep.subr.mxu0 0.0
        %1427 = vmatpush1.xpose.msra.mxu0 0.0
        %1428 = vmatprep.subr.mxu0 0.0
        %1429 = vmatpush1.xpose.msra.mxu0 0.0
        %1430 = vmatprep.subr.mxu0 0.0
        %1431 = vmatpush1.xpose.msra.mxu0 0.0
        %1432 = vmatprep.subr.mxu0 0.0
        %1433 = vmatpush1.xpose.msra.mxu0 0.0
        %1434 = vmatprep.subr.mxu0 0.0
        %1435 = vmatpush1.xpose.msra.mxu0 0.0
        %1436 = vmatprep.subr.mxu0 0.0
        %1437 = vmatpush1.xpose.msra.mxu0 0.0
        %1438 = vmatprep.subr.mxu0 0.0
        %1439 = vmatpush1.xpose.msra.mxu0 0.0
        %1440 = vmatprep.subr.mxu0 0.0
        %1441 = vmatpush1.xpose.msra.mxu0 0.0
        %1442 = vmatprep.subr.mxu0 0.0
        %1443 = vmatpush1.xpose.msra.mxu0 0.0
        %1444 = vmatprep.subr.mxu0 0.0
        %1445 = vmatpush1.xpose.msra.mxu0 0.0
        %1446 = vmatprep.subr.mxu0 0.0
        %1447 = vmatpush1.xpose.msra.mxu0 0.0
        %1448 = vmatprep.subr.mxu0 0.0
        %1449 = vmatpush1.xpose.msra.mxu0 0.0
        %1450 = vmatprep.mubr.f32.mxu0 0.0
        %1451 = vmatmul.mubr.f32.gmra.mrb[0].mxu0 %v1381
        %v1452 = vpop.f32.mrb[0].mxu0
        %v1453 = vadd.f32 0.0, %v1452
        %v1454 = vpop.f32.mrb[0].mxu0
        %1455 = vdwg.mxu0
        %v1457 = vsel %vm1227, %v1218, 0
        %v1460 = vsel %vm1227, %v1222, 0
        %1462 = vmatprep.subr.mxu0 0.0
        %1463 = vmatpush1.xpose.msra.mxu0 %v1460
        %1464 = vmatprep.subr.mxu0 0.0
        %1465 = vmatpush1.xpose.msra.mxu0 0.0
        %1466 = vmatprep.subr.mxu0 0.0
        %1467 = vmatpush1.xpose.msra.mxu0 0.0
        %1468 = vmatprep.subr.mxu0 0.0
        %1469 = vmatpush1.xpose.msra.mxu0 0.0
        %1470 = vmatprep.subr.mxu0 0.0
        %1471 = vmatpush1.xpose.msra.mxu0 0.0
        %1472 = vmatprep.subr.mxu0 0.0
        %1473 = vmatpush1.xpose.msra.mxu0 0.0
        %1474 = vmatprep.subr.mxu0 0.0
        %1475 = vmatpush1.xpose.msra.mxu0 0.0
        %1476 = vmatprep.subr.mxu0 0.0
        %1477 = vmatpush1.xpose.msra.mxu0 0.0
        %1478 = vmatprep.subr.mxu0 0.0
        %1479 = vmatpush1.xpose.msra.mxu0 0.0
        %1480 = vmatprep.subr.mxu0 0.0
        %1481 = vmatpush1.xpose.msra.mxu0 0.0
        %1482 = vmatprep.subr.mxu0 0.0
        %1483 = vmatpush1.xpose.msra.mxu0 0.0
        %1484 = vmatprep.subr.mxu0 0.0
        %1485 = vmatpush1.xpose.msra.mxu0 0.0
        %1486 = vmatprep.subr.mxu0 0.0
        %1487 = vmatpush1.xpose.msra.mxu0 0.0
        %1488 = vmatprep.subr.mxu0 0.0
        %1489 = vmatpush1.xpose.msra.mxu0 0.0
        %1490 = vmatprep.subr.mxu0 0.0
        %1491 = vmatpush1.xpose.msra.mxu0 0.0
        %1492 = vmatprep.subr.mxu0 0.0
        %1493 = vmatpush1.xpose.msra.mxu0 0.0
        %1494 = vmatprep.subr.mxu0 0.0
        %1495 = vmatpush1.xpose.msra.mxu0 0.0
        %1496 = vmatprep.subr.mxu0 0.0
        %1497 = vmatpush1.xpose.msra.mxu0 0.0
        %1498 = vmatprep.subr.mxu0 0.0
        %1499 = vmatpush1.xpose.msra.mxu0 0.0
        %1500 = vmatprep.subr.mxu0 0.0
        %1501 = vmatpush1.xpose.msra.mxu0 0.0
        %1502 = vmatprep.subr.mxu0 0.0
        %1503 = vmatpush1.xpose.msra.mxu0 0.0
        %1504 = vmatprep.subr.mxu0 0.0
        %1505 = vmatpush1.xpose.msra.mxu0 0.0
        %1506 = vmatprep.subr.mxu0 0.0
        %1507 = vmatpush1.xpose.msra.mxu0 0.0
        %1508 = vmatprep.subr.mxu0 0.0
        %1509 = vmatpush1.xpose.msra.mxu0 0.0
        %1510 = vmatprep.subr.mxu0 0.0
        %1511 = vmatpush1.xpose.msra.mxu0 0.0
        %1512 = vmatprep.subr.mxu0 0.0
        %1513 = vmatpush1.xpose.msra.mxu0 0.0
        %1514 = vmatprep.subr.mxu0 0.0
        %1515 = vmatpush1.xpose.msra.mxu0 0.0
        %1516 = vmatprep.subr.mxu0 0.0
        %1517 = vmatpush1.xpose.msra.mxu0 0.0
        %1518 = vmatprep.subr.mxu0 0.0
        %1519 = vmatpush1.xpose.msra.mxu0 0.0
        %1520 = vmatprep.subr.mxu0 0.0
        %1521 = vmatpush1.xpose.msra.mxu0 0.0
        %1522 = vmatprep.subr.mxu0 0.0
        %1523 = vmatpush1.xpose.msra.mxu0 0.0
        %1524 = vmatprep.subr.mxu0 0.0
        %1525 = vmatpush1.xpose.msra.mxu0 0.0
        %1526 = vmatprep.mubr.f32.mxu0 0.0
        %1527 = vmatmul.mubr.f32.gmra.mrb[0].mxu0 %v1457
        %v1528 = vpop.f32.mrb[0].mxu0
        %v1529 = vadd.f32 0.0, %v1528
        %v1530 = vpop.f32.mrb[0].mxu0
        %1531 = vdwg.mxu0
        %v1532 = vsel %vm1227, %v1301, -inf
        %1533 = vmax.xlane.f32.xlu0 %v1532
        %v1534 = vpop.xlane.xlu0 %1533
        %v1535 = vsel %vm1227, %v1377, -inf
        %1536 = vmax.xlane.f32.xlu0 %v1535
        %v1537 = vpop.xlane.xlu0 %1536
        %v1538 = vsel %vm1227, %v1453, -inf
        %1539 = vmax.xlane.f32.xlu0 %v1538
        %v1540 = vpop.xlane.xlu0 %1539
        %v1541 = vsel %vm1227, %v1529, -inf
        %1542 = vmax.xlane.f32.xlu0 %v1541
        %v1543 = vpop.xlane.xlu0 %1542
        %v1544 = vsub.f32 -inf, %v1534
        %v1545 = vsub.f32 -inf, %v1537
        %v1546 = vsub.f32 -inf, %v1540
        %v1547 = vsub.f32 -inf, %v1543
        %v1548 = vmul.f32 %v1544, 1.442695
        %v1549 = vpow.pop %v1548
        %v1550 = vmul.f32 %v1545, 1.442695
        %v1551 = vpow.pop %v1550
        %v1552 = vmul.f32 %v1546, 1.442695
        %v1553 = vpow.pop %v1552
        %v1554 = vmul.f32 %v1547, 1.442695
        %v1555 = vpow.pop %v1554
        %v1556 = vsub.f32 %v1301, %v1534
        %v1557 = vsub.f32 %v1377, %v1537
        %v1558 = vsub.f32 %v1453, %v1540
        %v1559 = vsub.f32 %v1529, %v1543
        %v1560 = vmul.f32 %v1556, 1.442695
        %v1561 = vpow.pop %v1560
        %v1562 = vmul.f32 %v1557, 1.442695
        %v1563 = vpow.pop %v1562
        %v1564 = vmul.f32 %v1558, 1.442695
        %v1565 = vpow.pop %v1564
        %v1566 = vmul.f32 %v1559, 1.442695
        %v1567 = vpow.pop %v1566
        %v1568 = vmul.f32 %v1549, 0.0
        %v1569 = vmul.f32 %v1551, 0.0
        %v1570 = vmul.f32 %v1553, 0.0
        %v1571 = vmul.f32 %v1555, 0.0
        %v1572 = vsel %vm1227, %v1561, 0.0
        %1573 = vadd.xlane.f32.xlu0 %v1572
        %v1574 = vpop.xlane.xlu0 %1573
        %v1575 = vsel %vm1227, %v1563, 0.0
        %1576 = vadd.xlane.f32.xlu0 %v1575
        %v1577 = vpop.xlane.xlu0 %1576
        %v1578 = vsel %vm1227, %v1565, 0.0
        %1579 = vadd.xlane.f32.xlu0 %v1578
        %v1580 = vpop.xlane.xlu0 %1579
        %v1581 = vsel %vm1227, %v1567, 0.0
        %1582 = vadd.xlane.f32.xlu0 %v1581
        %v1583 = vpop.xlane.xlu0 %1582
        %v1584 = vadd.f32 %v1568, %v1574
        %v1585 = vadd.f32 %v1569, %v1577
        %v1586 = vadd.f32 %v1570, %v1580
        %v1587 = vadd.f32 %v1571, %v1583
        %v1589 = vsel %vm1227, %v1561, 0
        %1591 = vmatprep.subr.mxu0 0.0
        %1592 = vmatpush1.msra.mxu0 %v1223
        %1593 = vmatprep.subr.mxu0 0.0
        %1594 = vmatpush1.msra.mxu0 0.0
        %1595 = vmatprep.subr.mxu0 0.0
        %1596 = vmatpush1.msra.mxu0 0.0
        %1597 = vmatprep.subr.mxu0 0.0
        %1598 = vmatpush1.msra.mxu0 0.0
        %1599 = vmatprep.subr.mxu0 0.0
        %1600 = vmatpush1.msra.mxu0 0.0
        %1601 = vmatprep.subr.mxu0 0.0
        %1602 = vmatpush1.msra.mxu0 0.0
        %1603 = vmatprep.subr.mxu0 0.0
        %1604 = vmatpush1.msra.mxu0 0.0
        %1605 = vmatprep.subr.mxu0 0.0
        %1606 = vmatpush1.msra.mxu0 0.0
        %1607 = vmatprep.subr.mxu0 0.0
        %1608 = vmatpush1.msra.mxu0 0.0
        %1609 = vmatprep.subr.mxu0 0.0
        %1610 = vmatpush1.msra.mxu0 0.0
        %1611 = vmatprep.subr.mxu0 0.0
        %1612 = vmatpush1.msra.mxu0 0.0
        %1613 = vmatprep.subr.mxu0 0.0
        %1614 = vmatpush1.msra.mxu0 0.0
        %1615 = vmatprep.subr.mxu0 0.0
        %1616 = vmatpush1.msra.mxu0 0.0
        %1617 = vmatprep.subr.mxu0 0.0
        %1618 = vmatpush1.msra.mxu0 0.0
        %1619 = vmatprep.subr.mxu0 0.0
        %1620 = vmatpush1.msra.mxu0 0.0
        %1621 = vmatprep.subr.mxu0 0.0
        %1622 = vmatpush1.msra.mxu0 0.0
        %1623 = vmatprep.subr.mxu0 0.0
        %1624 = vmatpush1.msra.mxu0 0.0
        %1625 = vmatprep.subr.mxu0 0.0
        %1626 = vmatpush1.msra.mxu0 0.0
        %1627 = vmatprep.subr.mxu0 0.0
        %1628 = vmatpush1.msra.mxu0 0.0
        %1629 = vmatprep.subr.mxu0 0.0
        %1630 = vmatpush1.msra.mxu0 0.0
        %1631 = vmatprep.subr.mxu0 0.0
        %1632 = vmatpush1.msra.mxu0 0.0
        %1633 = vmatprep.subr.mxu0 0.0
        %1634 = vmatpush1.msra.mxu0 0.0
        %1635 = vmatprep.subr.mxu0 0.0
        %1636 = vmatpush1.msra.mxu0 0.0
        %1637 = vmatprep.subr.mxu0 0.0
        %1638 = vmatpush1.msra.mxu0 0.0
        %1639 = vmatprep.subr.mxu0 0.0
        %1640 = vmatpush1.msra.mxu0 0.0
        %1641 = vmatprep.subr.mxu0 0.0
        %1642 = vmatpush1.msra.mxu0 0.0
        %1643 = vmatprep.subr.mxu0 0.0
        %1644 = vmatpush1.msra.mxu0 0.0
        %1645 = vmatprep.subr.mxu0 0.0
        %1646 = vmatpush1.msra.mxu0 0.0
        %1647 = vmatprep.subr.mxu0 0.0
        %1648 = vmatpush1.msra.mxu0 0.0
        %1649 = vmatprep.subr.mxu0 0.0
        %1650 = vmatpush1.msra.mxu0 0.0
        %1651 = vmatprep.subr.mxu0 0.0
        %1652 = vmatpush1.msra.mxu0 0.0
        %1653 = vmatprep.subr.mxu0 0.0
        %1654 = vmatpush1.msra.mxu0 0.0
        %1655 = vmatprep.mubr.f32.mxu0 0.0
        %1656 = vmatmul.mubr.f32.gmra.mrb[0].mxu0 %v1589
        %v1657 = vpop.f32.mrb[0].mxu0
        %v1658 = vadd.f32 0.0, %v1657
        %v1659 = vpop.f32.mrb[0].mxu0
        %1660 = vdwg.mxu0
        %v1662 = vsel %vm1227, %v1563, 0
        %1664 = vmatprep.subr.mxu0 0.0
        %1665 = vmatpush1.msra.mxu0 %v1224
        %1666 = vmatprep.subr.mxu0 0.0
        %1667 = vmatpush1.msra.mxu0 0.0
        %1668 = vmatprep.subr.mxu0 0.0
        %1669 = vmatpush1.msra.mxu0 0.0
        %1670 = vmatprep.subr.mxu0 0.0
        %1671 = vmatpush1.msra.mxu0 0.0
        %1672 = vmatprep.subr.mxu0 0.0
        %1673 = vmatpush1.msra.mxu0 0.0
        %1674 = vmatprep.subr.mxu0 0.0
        %1675 = vmatpush1.msra.mxu0 0.0
        %1676 = vmatprep.subr.mxu0 0.0
        %1677 = vmatpush1.msra.mxu0 0.0
        %1678 = vmatprep.subr.mxu0 0.0
        %1679 = vmatpush1.msra.mxu0 0.0
        %1680 = vmatprep.subr.mxu0 0.0
        %1681 = vmatpush1.msra.mxu0 0.0
        %1682 = vmatprep.subr.mxu0 0.0
        %1683 = vmatpush1.msra.mxu0 0.0
        %1684 = vmatprep.subr.mxu0 0.0
        %1685 = vmatpush1.msra.mxu0 0.0
        %1686 = vmatprep.subr.mxu0 0.0
        %1687 = vmatpush1.msra.mxu0 0.0
        %1688 = vmatprep.subr.mxu0 0.0
        %1689 = vmatpush1.msra.mxu0 0.0
        %1690 = vmatprep.subr.mxu0 0.0
        %1691 = vmatpush1.msra.mxu0 0.0
        %1692 = vmatprep.subr.mxu0 0.0
        %1693 = vmatpush1.msra.mxu0 0.0
        %1694 = vmatprep.subr.mxu0 0.0
        %1695 = vmatpush1.msra.mxu0 0.0
        %1696 = vmatprep.subr.mxu0 0.0
        %1697 = vmatpush1.msra.mxu0 0.0
        %1698 = vmatprep.subr.mxu0 0.0
        %1699 = vmatpush1.msra.mxu0 0.0
        %1700 = vmatprep.subr.mxu0 0.0
        %1701 = vmatpush1.msra.mxu0 0.0
        %1702 = vmatprep.subr.mxu0 0.0
        %1703 = vmatpush1.msra.mxu0 0.0
        %1704 = vmatprep.subr.mxu0 0.0
        %1705 = vmatpush1.msra.mxu0 0.0
        %1706 = vmatprep.subr.mxu0 0.0
        %1707 = vmatpush1.msra.mxu0 0.0
        %1708 = vmatprep.subr.mxu0 0.0
        %1709 = vmatpush1.msra.mxu0 0.0
        %1710 = vmatprep.subr.mxu0 0.0
        %1711 = vmatpush1.msra.mxu0 0.0
        %1712 = vmatprep.subr.mxu0 0.0
        %1713 = vmatpush1.msra.mxu0 0.0
        %1714 = vmatprep.subr.mxu0 0.0
        %1715 = vmatpush1.msra.mxu0 0.0
        %1716 = vmatprep.subr.mxu0 0.0
        %1717 = vmatpush1.msra.mxu0 0.0
        %1718 = vmatprep.subr.mxu0 0.0
        %1719 = vmatpush1.msra.mxu0 0.0
        %1720 = vmatprep.subr.mxu0 0.0
        %1721 = vmatpush1.msra.mxu0 0.0
        %1722 = vmatprep.subr.mxu0 0.0
        %1723 = vmatpush1.msra.mxu0 0.0
        %1724 = vmatprep.subr.mxu0 0.0
        %1725 = vmatpush1.msra.mxu0 0.0
        %1726 = vmatprep.subr.mxu0 0.0
        %1727 = vmatpush1.msra.mxu0 0.0
        %1728 = vmatprep.mubr.f32.mxu0 0.0
        %1729 = vmatmul.mubr.f32.gmra.mrb[0].mxu0 %v1662
        %v1730 = vpop.f32.mrb[0].mxu0
        %v1731 = vadd.f32 0.0, %v1730
        %v1732 = vpop.f32.mrb[0].mxu0
        %1733 = vdwg.mxu0
        %v1735 = vsel %vm1227, %v1565, 0
        %1737 = vmatprep.subr.mxu0 0.0
        %1738 = vmatpush1.msra.mxu0 %v1225
        %1739 = vmatprep.subr.mxu0 0.0
        %1740 = vmatpush1.msra.mxu0 0.0
        %1741 = vmatprep.subr.mxu0 0.0
        %1742 = vmatpush1.msra.mxu0 0.0
        %1743 = vmatprep.subr.mxu0 0.0
        %1744 = vmatpush1.msra.mxu0 0.0
        %1745 = vmatprep.subr.mxu0 0.0
        %1746 = vmatpush1.msra.mxu0 0.0
        %1747 = vmatprep.subr.mxu0 0.0
        %1748 = vmatpush1.msra.mxu0 0.0
        %1749 = vmatprep.subr.mxu0 0.0
        %1750 = vmatpush1.msra.mxu0 0.0
        %1751 = vmatprep.subr.mxu0 0.0
        %1752 = vmatpush1.msra.mxu0 0.0
        %1753 = vmatprep.subr.mxu0 0.0
        %1754 = vmatpush1.msra.mxu0 0.0
        %1755 = vmatprep.subr.mxu0 0.0
        %1756 = vmatpush1.msra.mxu0 0.0
        %1757 = vmatprep.subr.mxu0 0.0
        %1758 = vmatpush1.msra.mxu0 0.0
        %1759 = vmatprep.subr.mxu0 0.0
        %1760 = vmatpush1.msra.mxu0 0.0
        %1761 = vmatprep.subr.mxu0 0.0
        %1762 = vmatpush1.msra.mxu0 0.0
        %1763 = vmatprep.subr.mxu0 0.0
        %1764 = vmatpush1.msra.mxu0 0.0
        %1765 = vmatprep.subr.mxu0 0.0
        %1766 = vmatpush1.msra.mxu0 0.0
        %1767 = vmatprep.subr.mxu0 0.0
        %1768 = vmatpush1.msra.mxu0 0.0
        %1769 = vmatprep.subr.mxu0 0.0
        %1770 = vmatpush1.msra.mxu0 0.0
        %1771 = vmatprep.subr.mxu0 0.0
        %1772 = vmatpush1.msra.mxu0 0.0
        %1773 = vmatprep.subr.mxu0 0.0
        %1774 = vmatpush1.msra.mxu0 0.0
        %1775 = vmatprep.subr.mxu0 0.0
        %1776 = vmatpush1.msra.mxu0 0.0
        %1777 = vmatprep.subr.mxu0 0.0
        %1778 = vmatpush1.msra.mxu0 0.0
        %1779 = vmatprep.subr.mxu0 0.0
        %1780 = vmatpush1.msra.mxu0 0.0
        %1781 = vmatprep.subr.mxu0 0.0
        %1782 = vmatpush1.msra.mxu0 0.0
        %1783 = vmatprep.subr.mxu0 0.0
        %1784 = vmatpush1.msra.mxu0 0.0
        %1785 = vmatprep.subr.mxu0 0.0
        %1786 = vmatpush1.msra.mxu0 0.0
        %1787 = vmatprep.subr.mxu0 0.0
        %1788 = vmatpush1.msra.mxu0 0.0
        %1789 = vmatprep.subr.mxu0 0.0
        %1790 = vmatpush1.msra.mxu0 0.0
        %1791 = vmatprep.subr.mxu0 0.0
        %1792 = vmatpush1.msra.mxu0 0.0
        %1793 = vmatprep.subr.mxu0 0.0
        %1794 = vmatpush1.msra.mxu0 0.0
        %1795 = vmatprep.subr.mxu0 0.0
        %1796 = vmatpush1.msra.mxu0 0.0
        %1797 = vmatprep.subr.mxu0 0.0
        %1798 = vmatpush1.msra.mxu0 0.0
        %1799 = vmatprep.subr.mxu0 0.0
        %1800 = vmatpush1.msra.mxu0 0.0
        %1801 = vmatprep.mubr.f32.mxu0 0.0
        %1802 = vmatmul.mubr.f32.gmra.mrb[0].mxu0 %v1735
        %v1803 = vpop.f32.mrb[0].mxu0
        %v1804 = vadd.f32 0.0, %v1803
        %v1805 = vpop.f32.mrb[0].mxu0
        %1806 = vdwg.mxu0
        %v1808 = vsel %vm1227, %v1567, 0
        %1810 = vmatprep.subr.mxu0 0.0
        %1811 = vmatpush1.msra.mxu0 %v1226
        %1812 = vmatprep.subr.mxu0 0.0
        %1813 = vmatpush1.msra.mxu0 0.0
        %1814 = vmatprep.subr.mxu0 0.0
        %1815 = vmatpush1.msra.mxu0 0.0
        %1816 = vmatprep.subr.mxu0 0.0
        %1817 = vmatpush1.msra.mxu0 0.0
        %1818 = vmatprep.subr.mxu0 0.0
        %1819 = vmatpush1.msra.mxu0 0.0
        %1820 = vmatprep.subr.mxu0 0.0
        %1821 = vmatpush1.msra.mxu0 0.0
        %1822 = vmatprep.subr.mxu0 0.0
        %1823 = vmatpush1.msra.mxu0 0.0
        %1824 = vmatprep.subr.mxu0 0.0
        %1825 = vmatpush1.msra.mxu0 0.0
        %1826 = vmatprep.subr.mxu0 0.0
        %1827 = vmatpush1.msra.mxu0 0.0
        %1828 = vmatprep.subr.mxu0 0.0
        %1829 = vmatpush1.msra.mxu0 0.0
        %1830 = vmatprep.subr.mxu0 0.0
        %1831 = vmatpush1.msra.mxu0 0.0
        %1832 = vmatprep.subr.mxu0 0.0
        %1833 = vmatpush1.msra.mxu0 0.0
        %1834 = vmatprep.subr.mxu0 0.0
        %1835 = vmatpush1.msra.mxu0 0.0
        %1836 = vmatprep.subr.mxu0 0.0
        %1837 = vmatpush1.msra.mxu0 0.0
        %1838 = vmatprep.subr.mxu0 0.0
        %1839 = vmatpush1.msra.mxu0 0.0
        %1840 = vmatprep.subr.mxu0 0.0
        %1841 = vmatpush1.msra.mxu0 0.0
        %1842 = vmatprep.subr.mxu0 0.0
        %1843 = vmatpush1.msra.mxu0 0.0
        %1844 = vmatprep.subr.mxu0 0.0
        %1845 = vmatpush1.msra.mxu0 0.0
        %1846 = vmatprep.subr.mxu0 0.0
        %1847 = vmatpush1.msra.mxu0 0.0
        %1848 = vmatprep.subr.mxu0 0.0
        %1849 = vmatpush1.msra.mxu0 0.0
        %1850 = vmatprep.subr.mxu0 0.0
        %1851 = vmatpush1.msra.mxu0 0.0
        %1852 = vmatprep.subr.mxu0 0.0
        %1853 = vmatpush1.msra.mxu0 0.0
        %1854 = vmatprep.subr.mxu0 0.0
        %1855 = vmatpush1.msra.mxu0 0.0
        %1856 = vmatprep.subr.mxu0 0.0
        %1857 = vmatpush1.msra.mxu0 0.0
        %1858 = vmatprep.subr.mxu0 0.0
        %1859 = vmatpush1.msra.mxu0 0.0
        %1860 = vmatprep.subr.mxu0 0.0
        %1861 = vmatpush1.msra.mxu0 0.0
        %1862 = vmatprep.subr.mxu0 0.0
        %1863 = vmatpush1.msra.mxu0 0.0
        %1864 = vmatprep.subr.mxu0 0.0
        %1865 = vmatpush1.msra.mxu0 0.0
        %1866 = vmatprep.subr.mxu0 0.0
        %1867 = vmatpush1.msra.mxu0 0.0
        %1868 = vmatprep.subr.mxu0 0.0
        %1869 = vmatpush1.msra.mxu0 0.0
        %1870 = vmatprep.subr.mxu0 0.0
        %1871 = vmatpush1.msra.mxu0 0.0
        %1872 = vmatprep.subr.mxu0 0.0
        %1873 = vmatpush1.msra.mxu0 0.0
        %1874 = vmatprep.mubr.f32.mxu0 0.0
        %1875 = vmatmul.mubr.f32.gmra.mrb[0].mxu0 %v1808
        %v1876 = vpop.f32.mrb[0].mxu0
        %v1877 = vadd.f32 0.0, %v1876
        %v1878 = vpop.f32.mrb[0].mxu0
        %1879 = vdwg.mxu0
        %v1880 = vadd.f32 %v1568, %v1658
        %v1881 = vadd.f32 %v1569, %v1731
        %v1882 = vadd.f32 %v1570, %v1804
        %v1883 = vadd.f32 %v1571, %v1877
        %v1884 = vrcp.pop %v1584
        %v1885 = vrcp.pop %v1585
        %v1886 = vrcp.pop %v1586
        %v1887 = vrcp.pop %v1587
        %v1888 = vmul.f32 %v1880, %v1884
        %v1889 = vmul.f32 %v1881, %v1885
        %v1890 = vmul.f32 %v1882, %v1886
        %v1891 = vmul.f32 %v1883, %v1887
        %v1892 = vld [vmem:[%s4] sm:$0xff]
        %v1893 = vld [vmem:[%s4 + $0x8] sm:$0xff]
        %v1894 = vld [vmem:[%s4 + $0x10] sm:$0xff]
        %v1895 = vld [vmem:[%s4 + $0x18] sm:$0xff]
        %v1897 = vsel %vm1227, %v1888, 0
        %1899 = vmatprep.subr.mxu0 0.0
        %1900 = vmatpush1.msra.mxu0 %v1892
        %1901 = vmatprep.subr.mxu0 0.0
        %1902 = vmatpush1.msra.mxu0 0.0
        %1903 = vmatprep.subr.mxu0 0.0
        %1904 = vmatpush1.msra.mxu0 0.0
        %1905 = vmatprep.subr.mxu0 0.0
        %1906 = vmatpush1.msra.mxu0 0.0
        %1907 = vmatprep.subr.mxu0 0.0
        %1908 = vmatpush1.msra.mxu0 0.0
        %1909 = vmatprep.subr.mxu0 0.0
        %1910 = vmatpush1.msra.mxu0 0.0
        %1911 = vmatprep.subr.mxu0 0.0
        %1912 = vmatpush1.msra.mxu0 0.0
        %1913 = vmatprep.subr.mxu0 0.0
        %1914 = vmatpush1.msra.mxu0 0.0
        %1915 = vmatprep.subr.mxu0 0.0
        %1916 = vmatpush1.msra.mxu0 0.0
        %1917 = vmatprep.subr.mxu0 0.0
        %1918 = vmatpush1.msra.mxu0 0.0
        %1919 = vmatprep.subr.mxu0 0.0
        %1920 = vmatpush1.msra.mxu0 0.0
        %1921 = vmatprep.subr.mxu0 0.0
        %1922 = vmatpush1.msra.mxu0 0.0
        %1923 = vmatprep.subr.mxu0 0.0
        %1924 = vmatpush1.msra.mxu0 0.0
        %1925 = vmatprep.subr.mxu0 0.0
        %1926 = vmatpush1.msra.mxu0 0.0
        %1927 = vmatprep.subr.mxu0 0.0
        %1928 = vmatpush1.msra.mxu0 0.0
        %1929 = vmatprep.subr.mxu0 0.0
        %1930 = vmatpush1.msra.mxu0 0.0
        %1931 = vmatprep.subr.mxu0 0.0
        %1932 = vmatpush1.msra.mxu0 0.0
        %1933 = vmatprep.subr.mxu0 0.0
        %1934 = vmatpush1.msra.mxu0 0.0
        %1935 = vmatprep.subr.mxu0 0.0
        %1936 = vmatpush1.msra.mxu0 0.0
        %1937 = vmatprep.subr.mxu0 0.0
        %1938 = vmatpush1.msra.mxu0 0.0
        %1939 = vmatprep.subr.mxu0 0.0
        %1940 = vmatpush1.msra.mxu0 0.0
        %1941 = vmatprep.subr.mxu0 0.0
        %1942 = vmatpush1.msra.mxu0 0.0
        %1943 = vmatprep.subr.mxu0 0.0
        %1944 = vmatpush1.msra.mxu0 0.0
        %1945 = vmatprep.subr.mxu0 0.0
        %1946 = vmatpush1.msra.mxu0 0.0
        %1947 = vmatprep.subr.mxu0 0.0
        %1948 = vmatpush1.msra.mxu0 0.0
        %1949 = vmatprep.subr.mxu0 0.0
        %1950 = vmatpush1.msra.mxu0 0.0
        %1951 = vmatprep.subr.mxu0 0.0
        %1952 = vmatpush1.msra.mxu0 0.0
        %1953 = vmatprep.subr.mxu0 0.0
        %1954 = vmatpush1.msra.mxu0 0.0
        %1955 = vmatprep.subr.mxu0 0.0
        %1956 = vmatpush1.msra.mxu0 0.0
        %1957 = vmatprep.subr.mxu0 0.0
        %1958 = vmatpush1.msra.mxu0 0.0
        %1959 = vmatprep.subr.mxu0 0.0
        %1960 = vmatpush1.msra.mxu0 0.0
        %1961 = vmatprep.subr.mxu0 0.0
        %1962 = vmatpush1.msra.mxu0 0.0
        %1963 = vmatprep.mubr.f32.mxu0 0.0
        %1964 = vmatmul.mubr.f32.gmra.mrb[0].mxu0 %v1897
        %v1965 = vpop.f32.mrb[0].mxu0
        %v1966 = vadd.f32 0.0, %v1965
        %v1967 = vpop.f32.mrb[0].mxu0
        %1968 = vdwg.mxu0
        %v1970 = vsel %vm1227, %v1889, 0
        %1972 = vmatprep.subr.mxu0 0.0
        %1973 = vmatpush1.msra.mxu0 %v1893
        %1974 = vmatprep.subr.mxu0 0.0
        %1975 = vmatpush1.msra.mxu0 0.0
        %1976 = vmatprep.subr.mxu0 0.0
        %1977 = vmatpush1.msra.mxu0 0.0
        %1978 = vmatprep.subr.mxu0 0.0
        %1979 = vmatpush1.msra.mxu0 0.0
        %1980 = vmatprep.subr.mxu0 0.0
        %1981 = vmatpush1.msra.mxu0 0.0
        %1982 = vmatprep.subr.mxu0 0.0
        %1983 = vmatpush1.msra.mxu0 0.0
        %1984 = vmatprep.subr.mxu0 0.0
        %1985 = vmatpush1.msra.mxu0 0.0
        %1986 = vmatprep.subr.mxu0 0.0
        %1987 = vmatpush1.msra.mxu0 0.0
        %1988 = vmatprep.subr.mxu0 0.0
        %1989 = vmatpush1.msra.mxu0 0.0
        %1990 = vmatprep.subr.mxu0 0.0
        %1991 = vmatpush1.msra.mxu0 0.0
        %1992 = vmatprep.subr.mxu0 0.0
        %1993 = vmatpush1.msra.mxu0 0.0
        %1994 = vmatprep.subr.mxu0 0.0
        %1995 = vmatpush1.msra.mxu0 0.0
        %1996 = vmatprep.subr.mxu0 0.0
        %1997 = vmatpush1.msra.mxu0 0.0
        %1998 = vmatprep.subr.mxu0 0.0
        %1999 = vmatpush1.msra.mxu0 0.0
        %2000 = vmatprep.subr.mxu0 0.0
        %2001 = vmatpush1.msra.mxu0 0.0
        %2002 = vmatprep.subr.mxu0 0.0
        %2003 = vmatpush1.msra.mxu0 0.0
        %2004 = vmatprep.subr.mxu0 0.0
        %2005 = vmatpush1.msra.mxu0 0.0
        %2006 = vmatprep.subr.mxu0 0.0
        %2007 = vmatpush1.msra.mxu0 0.0
        %2008 = vmatprep.subr.mxu0 0.0
        %2009 = vmatpush1.msra.mxu0 0.0
        %2010 = vmatprep.subr.mxu0 0.0
        %2011 = vmatpush1.msra.mxu0 0.0
        %2012 = vmatprep.subr.mxu0 0.0
        %2013 = vmatpush1.msra.mxu0 0.0
        %2014 = vmatprep.subr.mxu0 0.0
        %2015 = vmatpush1.msra.mxu0 0.0
        %2016 = vmatprep.subr.mxu0 0.0
        %2017 = vmatpush1.msra.mxu0 0.0
        %2018 = vmatprep.subr.mxu0 0.0
        %2019 = vmatpush1.msra.mxu0 0.0
        %2020 = vmatprep.subr.mxu0 0.0
        %2021 = vmatpush1.msra.mxu0 0.0
        %2022 = vmatprep.subr.mxu0 0.0
        %2023 = vmatpush1.msra.mxu0 0.0
        %2024 = vmatprep.subr.mxu0 0.0
        %2025 = vmatpush1.msra.mxu0 0.0
        %2026 = vmatprep.subr.mxu0 0.0
        %2027 = vmatpush1.msra.mxu0 0.0
        %2028 = vmatprep.subr.mxu0 0.0
        %2029 = vmatpush1.msra.mxu0 0.0
        %2030 = vmatprep.subr.mxu0 0.0
        %2031 = vmatpush1.msra.mxu0 0.0
        %2032 = vmatprep.subr.mxu0 0.0
        %2033 = vmatpush1.msra.mxu0 0.0
        %2034 = vmatprep.subr.mxu0 0.0
        %2035 = vmatpush1.msra.mxu0 0.0
        %2036 = vmatprep.mubr.f32.mxu0 0.0
        %2037 = vmatmul.mubr.f32.gmra.mrb[0].mxu0 %v1970
        %v2038 = vpop.f32.mrb[0].mxu0
        %v2039 = vadd.f32 0.0, %v2038
        %v2040 = vpop.f32.mrb[0].mxu0
        %2041 = vdwg.mxu0
        %v2043 = vsel %vm1227, %v1890, 0
        %2045 = vmatprep.subr.mxu0 0.0
        %2046 = vmatpush1.msra.mxu0 %v1894
        %2047 = vmatprep.subr.mxu0 0.0
        %2048 = vmatpush1.msra.mxu0 0.0
        %2049 = vmatprep.subr.mxu0 0.0
        %2050 = vmatpush1.msra.mxu0 0.0
        %2051 = vmatprep.subr.mxu0 0.0
        %2052 = vmatpush1.msra.mxu0 0.0
        %2053 = vmatprep.subr.mxu0 0.0
        %2054 = vmatpush1.msra.mxu0 0.0
        %2055 = vmatprep.subr.mxu0 0.0
        %2056 = vmatpush1.msra.mxu0 0.0
        %2057 = vmatprep.subr.mxu0 0.0
        %2058 = vmatpush1.msra.mxu0 0.0
        %2059 = vmatprep.subr.mxu0 0.0
        %2060 = vmatpush1.msra.mxu0 0.0
        %2061 = vmatprep.subr.mxu0 0.0
        %2062 = vmatpush1.msra.mxu0 0.0
        %2063 = vmatprep.subr.mxu0 0.0
        %2064 = vmatpush1.msra.mxu0 0.0
        %2065 = vmatprep.subr.mxu0 0.0
        %2066 = vmatpush1.msra.mxu0 0.0
        %2067 = vmatprep.subr.mxu0 0.0
        %2068 = vmatpush1.msra.mxu0 0.0
        %2069 = vmatprep.subr.mxu0 0.0
        %2070 = vmatpush1.msra.mxu0 0.0
        %2071 = vmatprep.subr.mxu0 0.0
        %2072 = vmatpush1.msra.mxu0 0.0
        %2073 = vmatprep.subr.mxu0 0.0
        %2074 = vmatpush1.msra.mxu0 0.0
        %2075 = vmatprep.subr.mxu0 0.0
        %2076 = vmatpush1.msra.mxu0 0.0
        %2077 = vmatprep.subr.mxu0 0.0
        %2078 = vmatpush1.msra.mxu0 0.0
        %2079 = vmatprep.subr.mxu0 0.0
        %2080 = vmatpush1.msra.mxu0 0.0
        %2081 = vmatprep.subr.mxu0 0.0
        %2082 = vmatpush1.msra.mxu0 0.0
        %2083 = vmatprep.subr.mxu0 0.0
        %2084 = vmatpush1.msra.mxu0 0.0
        %2085 = vmatprep.subr.mxu0 0.0
        %2086 = vmatpush1.msra.mxu0 0.0
        %2087 = vmatprep.subr.mxu0 0.0
        %2088 = vmatpush1.msra.mxu0 0.0
        %2089 = vmatprep.subr.mxu0 0.0
        %2090 = vmatpush1.msra.mxu0 0.0
        %2091 = vmatprep.subr.mxu0 0.0
        %2092 = vmatpush1.msra.mxu0 0.0
        %2093 = vmatprep.subr.mxu0 0.0
        %2094 = vmatpush1.msra.mxu0 0.0
        %2095 = vmatprep.subr.mxu0 0.0
        %2096 = vmatpush1.msra.mxu0 0.0
        %2097 = vmatprep.subr.mxu0 0.0
        %2098 = vmatpush1.msra.mxu0 0.0
        %2099 = vmatprep.subr.mxu0 0.0
        %2100 = vmatpush1.msra.mxu0 0.0
        %2101 = vmatprep.subr.mxu0 0.0
        %2102 = vmatpush1.msra.mxu0 0.0
        %2103 = vmatprep.subr.mxu0 0.0
        %2104 = vmatpush1.msra.mxu0 0.0
        %2105 = vmatprep.subr.mxu0 0.0
        %2106 = vmatpush1.msra.mxu0 0.0
        %2107 = vmatprep.subr.mxu0 0.0
        %2108 = vmatpush1.msra.mxu0 0.0
        %2109 = vmatprep.mubr.f32.mxu0 0.0
        %2110 = vmatmul.mubr.f32.gmra.mrb[0].mxu0 %v2043
        %v2111 = vpop.f32.mrb[0].mxu0
        %v2112 = vadd.f32 0.0, %v2111
        %v2113 = vpop.f32.mrb[0].mxu0
        %2114 = vdwg.mxu0
        %v2116 = vsel %vm1227, %v1891, 0
        %2118 = vmatprep.subr.mxu0 0.0
        %2119 = vmatpush1.msra.mxu0 %v1895
        %2120 = vmatprep.subr.mxu0 0.0
        %2121 = vmatpush1.msra.mxu0 0.0
        %2122 = vmatprep.subr.mxu0 0.0
        %2123 = vmatpush1.msra.mxu0 0.0
        %2124 = vmatprep.subr.mxu0 0.0
        %2125 = vmatpush1.msra.mxu0 0.0
        %2126 = vmatprep.subr.mxu0 0.0
        %2127 = vmatpush1.msra.mxu0 0.0
        %2128 = vmatprep.subr.mxu0 0.0
        %2129 = vmatpush1.msra.mxu0 0.0
        %2130 = vmatprep.subr.mxu0 0.0
        %2131 = vmatpush1.msra.mxu0 0.0
        %2132 = vmatprep.subr.mxu0 0.0
        %2133 = vmatpush1.msra.mxu0 0.0
        %2134 = vmatprep.subr.mxu0 0.0
        %2135 = vmatpush1.msra.mxu0 0.0
        %2136 = vmatprep.subr.mxu0 0.0
        %2137 = vmatpush1.msra.mxu0 0.0
        %2138 = vmatprep.subr.mxu0 0.0
        %2139 = vmatpush1.msra.mxu0 0.0
        %2140 = vmatprep.subr.mxu0 0.0
        %2141 = vmatpush1.msra.mxu0 0.0
        %2142 = vmatprep.subr.mxu0 0.0
        %2143 = vmatpush1.msra.mxu0 0.0
        %2144 = vmatprep.subr.mxu0 0.0
        %2145 = vmatpush1.msra.mxu0 0.0
        %2146 = vmatprep.subr.mxu0 0.0
        %2147 = vmatpush1.msra.mxu0 0.0
        %2148 = vmatprep.subr.mxu0 0.0
        %2149 = vmatpush1.msra.mxu0 0.0
        %2150 = vmatprep.subr.mxu0 0.0
        %2151 = vmatpush1.msra.mxu0 0.0
        %2152 = vmatprep.subr.mxu0 0.0
        %2153 = vmatpush1.msra.mxu0 0.0
        %2154 = vmatprep.subr.mxu0 0.0
        %2155 = vmatpush1.msra.mxu0 0.0
        %2156 = vmatprep.subr.mxu0 0.0
        %2157 = vmatpush1.msra.mxu0 0.0
        %2158 = vmatprep.subr.mxu0 0.0
        %2159 = vmatpush1.msra.mxu0 0.0
        %2160 = vmatprep.subr.mxu0 0.0
        %2161 = vmatpush1.msra.mxu0 0.0
        %2162 = vmatprep.subr.mxu0 0.0
        %2163 = vmatpush1.msra.mxu0 0.0
        %2164 = vmatprep.subr.mxu0 0.0
        %2165 = vmatpush1.msra.mxu0 0.0
        %2166 = vmatprep.subr.mxu0 0.0
        %2167 = vmatpush1.msra.mxu0 0.0
        %2168 = vmatprep.subr.mxu0 0.0
        %2169 = vmatpush1.msra.mxu0 0.0
        %2170 = vmatprep.subr.mxu0 0.0
        %2171 = vmatpush1.msra.mxu0 0.0
        %2172 = vmatprep.subr.mxu0 0.0
        %2173 = vmatpush1.msra.mxu0 0.0
        %2174 = vmatprep.subr.mxu0 0.0
        %2175 = vmatpush1.msra.mxu0 0.0
        %2176 = vmatprep.subr.mxu0 0.0
        %2177 = vmatpush1.msra.mxu0 0.0
        %2178 = vmatprep.subr.mxu0 0.0
        %2179 = vmatpush1.msra.mxu0 0.0
        %2180 = vmatprep.subr.mxu0 0.0
        %2181 = vmatpush1.msra.mxu0 0.0
        %2182 = vmatprep.mubr.f32.mxu0 0.0
        %2183 = vmatmul.mubr.f32.gmra.mrb[0].mxu0 %v2116
        %v2184 = vpop.f32.mrb[0].mxu0
        %v2185 = vadd.f32 0.0, %v2184
        %v2186 = vpop.f32.mrb[0].mxu0
        %2187 = vdwg.mxu0
        %vm2188 = vcmask 261120
        %v2189 = vsel %vm2188, %v1966, 0.0
        %v2190 = vsel %vm2188, %v2039, 0.0
        %v2191 = vadd.f32 %v2189, %v2190
        %v2192 = vsel %vm2188, %v2112, 0.0
        %v2193 = vadd.f32 %v2191, %v2192
        %v2194 = vsel %vm2188, %v2185, 0.0
        %v2195 = vadd.f32 %v2193, %v2194
        %v2196 = vld [vmem:[%s5] sm:$0x1]
        %v2198 = vlaneseq
        %v2199 = vshrl.u32 %v2198, 7
        %v2200 = vsub.s32 0, %v2199
        %v2201 = vrot.slane %v2196, %v2200
        %v2203 = vadd.f32 %v2195, %v2201
        %v2204 = vadd.f32 %v1213, %v2203
        %v2205 = vld [vmem:[%s8] sm:$0x1]
        %v2206 = vld [vmem:[%s9] sm:$0x1]
        %v2207 = vsel %vm2188, %v2204, 0.0
        %2208 = vadd.xlane.f32.xlu0 %v2207
        %v2209 = vpop.xlane.xlu0 %2208
        %v2210 = vrcp.pop 32.0
        %v2211 = vmul.f32 %v2209, %v2210
        %v2212 = vmul.f32 %v2204, %v2204
        %v2213 = vsel %vm2188, %v2212, 0.0
        %2214 = vadd.xlane.f32.xlu0 %v2213
        %v2215 = vpop.xlane.xlu0 %2214
        %v2216 = vmul.f32 %v2215, %v2210
        %v2217 = vmul.f32 %v2211, %v2211
        %v2218 = vsub.f32 %v2216, %v2217
        %v2219 = vadd.f32 %v2218, 1e-05
        %v2220 = vrsqrt.pop %v2219
        %v2221 = vsub.f32 %v2204, %v2211
        %v2222 = vmul.f32 %v2221, %v2220
        %v2224 = vlaneseq
        %v2225 = vshrl.u32 %v2224, 7
        %v2226 = vsub.s32 0, %v2225
        %v2227 = vrot.slane %v2205, %v2226
        %v2229 = vmul.f32 %v2222, %v2227
        %v2231 = vlaneseq
        %v2232 = vshrl.u32 %v2231, 7
        %v2233 = vsub.s32 0, %v2232
        %v2234 = vrot.slane %v2206, %v2233
        %v2236 = vadd.f32 %v2229, %v2234
        %v2237 = vld [vmem:[%s10] sm:$0xff]
        %v2238 = vld [vmem:[%s10 + $0x8] sm:$0xff]
        %v2239 = vld [vmem:[%s10 + $0x10] sm:$0xff]
        %v2240 = vld [vmem:[%s10 + $0x18] sm:$0xff]
        %v2241 = vld [vmem:[%s11] sm:$0x1]
        %v2243 = vlaneseq
        %v2244 = vshrl.u32 %v2243, 7
        %v2245 = vsub.s32 0, %v2244
        %v2246 = vrot.slane %v2241, %v2245
        %v2249 = vsel %vm2188, %v2236, 0
        %2251 = vmatprep.subr.mxu0 0.0
        %2252 = vmatpush1.msra.mxu0 %v2237
        %2253 = vmatprep.subr.mxu0 0.0
        %2254 = vmatpush1.msra.mxu0 %v2238
        %2255 = vmatprep.subr.mxu0 0.0
        %2256 = vmatpush1.msra.mxu0 %v2239
        %2257 = vmatprep.subr.mxu0 0.0
        %2258 = vmatpush1.msra.mxu0 %v2240
        %2259 = vmatprep.subr.mxu0 0.0
        %2260 = vmatpush1.msra.mxu0 0.0
        %2261 = vmatprep.subr.mxu0 0.0
        %2262 = vmatpush1.msra.mxu0 0.0
        %2263 = vmatprep.subr.mxu0 0.0
        %2264 = vmatpush1.msra.mxu0 0.0
        %2265 = vmatprep.subr.mxu0 0.0
        %2266 = vmatpush1.msra.mxu0 0.0
        %2267 = vmatprep.subr.mxu0 0.0
        %2268 = vmatpush1.msra.mxu0 0.0
        %2269 = vmatprep.subr.mxu0 0.0
        %2270 = vmatpush1.msra.mxu0 0.0
        %2271 = vmatprep.subr.mxu0 0.0
        %2272 = vmatpush1.msra.mxu0 0.0
        %2273 = vmatprep.subr.mxu0 0.0
        %2274 = vmatpush1.msra.mxu0 0.0
        %2275 = vmatprep.subr.mxu0 0.0
        %2276 = vmatpush1.msra.mxu0 0.0
        %2277 = vmatprep.subr.mxu0 0.0
        %2278 = vmatpush1.msra.mxu0 0.0
        %2279 = vmatprep.subr.mxu0 0.0
        %2280 = vmatpush1.msra.mxu0 0.0
        %2281 = vmatprep.subr.mxu0 0.0
        %2282 = vmatpush1.msra.mxu0 0.0
        %2283 = vmatprep.subr.mxu0 0.0
        %2284 = vmatpush1.msra.mxu0 0.0
        %2285 = vmatprep.subr.mxu0 0.0
        %2286 = vmatpush1.msra.mxu0 0.0
        %2287 = vmatprep.subr.mxu0 0.0
        %2288 = vmatpush1.msra.mxu0 0.0
        %2289 = vmatprep.subr.mxu0 0.0
        %2290 = vmatpush1.msra.mxu0 0.0
        %2291 = vmatprep.subr.mxu0 0.0
        %2292 = vmatpush1.msra.mxu0 0.0
        %2293 = vmatprep.subr.mxu0 0.0
        %2294 = vmatpush1.msra.mxu0 0.0
        %2295 = vmatprep.subr.mxu0 0.0
        %2296 = vmatpush1.msra.mxu0 0.0
        %2297 = vmatprep.subr.mxu0 0.0
        %2298 = vmatpush1.msra.mxu0 0.0
        %2299 = vmatprep.subr.mxu0 0.0
        %2300 = vmatpush1.msra.mxu0 0.0
        %2301 = vmatprep.subr.mxu0 0.0
        %2302 = vmatpush1.msra.mxu0 0.0
        %2303 = vmatprep.subr.mxu0 0.0
        %2304 = vmatpush1.msra.mxu0 0.0
        %2305 = vmatprep.subr.mxu0 0.0
        %2306 = vmatpush1.msra.mxu0 0.0
        %2307 = vmatprep.subr.mxu0 0.0
        %2308 = vmatpush1.msra.mxu0 0.0
        %2309 = vmatprep.subr.mxu0 0.0
        %2310 = vmatpush1.msra.mxu0 0.0
        %2311 = vmatprep.subr.mxu0 0.0
        %2312 = vmatpush1.msra.mxu0 0.0
        %2313 = vmatprep.subr.mxu0 0.0
        %2314 = vmatpush1.msra.mxu0 0.0
        %2315 = vmatprep.mubr.f32.mxu0 0.0
        %2316 = vmatmul.mubr.f32.gmra.mrb[0].mxu0 %v2249
        %v2317 = vpop.f32.mrb[0].mxu0
        %v2318 = vadd.f32 %v2246, %v2317
        %v2319 = vpop.f32.mrb[0].mxu0
        %2320 = vdwg.mxu0
        %v2321 = vmul.f32 %v2318, 0.5
        %v2322 = vmul.f32 %v2318, 0.70710677
        %v2323 = vand.u32 2147483647, %v2322
        %v2324 = vmul.f32 %v2323, 0.3275911
        %v2325 = vadd.f32 %v2324, 1.0
        %v2326 = vrcp.pop %v2325
        %v2327 = vmul.f32 %v2326, 1.0614054
        %v2328 = vadd.f32 %v2327, -1.4531521
        %v2329 = vmul.f32 %v2328, %v2326
        %v2330 = vadd.f32 %v2329, 1.4214138
        %v2331 = vmul.f32 %v2330, %v2326
        %v2332 = vadd.f32 %v2331, -0.28449672
        %v2333 = vmul.f32 %v2332, %v2326
        %v2334 = vadd.f32 %v2333, 0.2548296
        %v2335 = vmul.f32 %v2334, %v2326
        %v2336 = vsub.f32 0.0, %v2323
        %v2337 = vmul.f32 %v2336, %v2323
        %v2338 = vmul.f32 %v2337, 1.442695
        %v2339 = vpow.pop %v2338
        %v2340 = vmul.f32 %v2335, %v2339
        %v2341 = vsub.f32 1.0, %v2340
        %vm2342 = vcmp.ge.f32.partialorder %v2322, 0.0
        %v2343 = vsub.f32 0.0, %v2341
        %v2344 = vsel %vm2342, %v2341, %v2343
        %v2345 = vadd.f32 %v2344, 1.0
        %v2346 = vmul.f32 %v2321, %v2345
        %v2347 = vld [vmem:[%s12] sm:$0xff]
        %v2348 = vld [vmem:[%s12 + $0x8] sm:$0xff]
        %v2349 = vld [vmem:[%s12 + $0x10] sm:$0xff]
        %v2350 = vld [vmem:[%s12 + $0x18] sm:$0xff]
        %v2351 = vld [vmem:[%s12 + $0x20] sm:$0xff]
        %v2352 = vld [vmem:[%s12 + $0x28] sm:$0xff]
        %v2353 = vld [vmem:[%s12 + $0x30] sm:$0xff]
        %v2354 = vld [vmem:[%s12 + $0x38] sm:$0xff]
        %v2355 = vld [vmem:[%s12 + $0x40] sm:$0xff]
        %v2356 = vld [vmem:[%s12 + $0x48] sm:$0xff]
        %v2357 = vld [vmem:[%s12 + $0x50] sm:$0xff]
        %v2358 = vld [vmem:[%s12 + $0x58] sm:$0xff]
        %v2359 = vld [vmem:[%s12 + $0x60] sm:$0xff]
        %v2360 = vld [vmem:[%s12 + $0x68] sm:$0xff]
        %v2361 = vld [vmem:[%s12 + $0x70] sm:$0xff]
        %v2362 = vld [vmem:[%s12 + $0x78] sm:$0xff]
        %v2363 = vld [vmem:[%s13] sm:$0x1]
        %v2365 = vlaneseq
        %v2366 = vshrl.u32 %v2365, 7
        %v2367 = vsub.s32 0, %v2366
        %v2368 = vrot.slane %v2363, %v2367
        %2370 = vmatprep.subr.mxu0 0.0
        %2371 = vmatpush1.msra.mxu0 %v2347
        %2372 = vmatprep.subr.mxu0 0.0
        %2373 = vmatpush1.msra.mxu0 %v2348
        %2374 = vmatprep.subr.mxu0 0.0
        %2375 = vmatpush1.msra.mxu0 %v2349
        %2376 = vmatprep.subr.mxu0 0.0
        %2377 = vmatpush1.msra.mxu0 %v2350
        %2378 = vmatprep.subr.mxu0 0.0
        %2379 = vmatpush1.msra.mxu0 %v2351
        %2380 = vmatprep.subr.mxu0 0.0
        %2381 = vmatpush1.msra.mxu0 %v2352
        %2382 = vmatprep.subr.mxu0 0.0
        %2383 = vmatpush1.msra.mxu0 %v2353
        %2384 = vmatprep.subr.mxu0 0.0
        %2385 = vmatpush1.msra.mxu0 %v2354
        %2386 = vmatprep.subr.mxu0 0.0
        %2387 = vmatpush1.msra.mxu0 %v2355
        %2388 = vmatprep.subr.mxu0 0.0
        %2389 = vmatpush1.msra.mxu0 %v2356
        %2390 = vmatprep.subr.mxu0 0.0
        %2391 = vmatpush1.msra.mxu0 %v2357
        %2392 = vmatprep.subr.mxu0 0.0
        %2393 = vmatpush1.msra.mxu0 %v2358
        %2394 = vmatprep.subr.mxu0 0.0
        %2395 = vmatpush1.msra.mxu0 %v2359
        %2396 = vmatprep.subr.mxu0 0.0
        %2397 = vmatpush1.msra.mxu0 %v2360
        %2398 = vmatprep.subr.mxu0 0.0
        %2399 = vmatpush1.msra.mxu0 %v2361
        %2400 = vmatprep.subr.mxu0 0.0
        %2401 = vmatpush1.msra.mxu0 %v2362
        %2402 = vmatprep.subr.mxu0 0.0
        %2403 = vmatpush1.msra.mxu0 0.0
        %2404 = vmatprep.subr.mxu0 0.0
        %2405 = vmatpush1.msra.mxu0 0.0
        %2406 = vmatprep.subr.mxu0 0.0
        %2407 = vmatpush1.msra.mxu0 0.0
        %2408 = vmatprep.subr.mxu0 0.0
        %2409 = vmatpush1.msra.mxu0 0.0
        %2410 = vmatprep.subr.mxu0 0.0
        %2411 = vmatpush1.msra.mxu0 0.0
        %2412 = vmatprep.subr.mxu0 0.0
        %2413 = vmatpush1.msra.mxu0 0.0
        %2414 = vmatprep.subr.mxu0 0.0
        %2415 = vmatpush1.msra.mxu0 0.0
        %2416 = vmatprep.subr.mxu0 0.0
        %2417 = vmatpush1.msra.mxu0 0.0
        %2418 = vmatprep.subr.mxu0 0.0
        %2419 = vmatpush1.msra.mxu0 0.0
        %2420 = vmatprep.subr.mxu0 0.0
        %2421 = vmatpush1.msra.mxu0 0.0
        %2422 = vmatprep.subr.mxu0 0.0
        %2423 = vmatpush1.msra.mxu0 0.0
        %2424 = vmatprep.subr.mxu0 0.0
        %2425 = vmatpush1.msra.mxu0 0.0
        %2426 = vmatprep.subr.mxu0 0.0
        %2427 = vmatpush1.msra.mxu0 0.0
        %2428 = vmatprep.subr.mxu0 0.0
        %2429 = vmatpush1.msra.mxu0 0.0
        %2430 = vmatprep.subr.mxu0 0.0
        %2431 = vmatpush1.msra.mxu0 0.0
        %2432 = vmatprep.subr.mxu0 0.0
        %2433 = vmatpush1.msra.mxu0 0.0
        %2434 = vmatprep.mubr.f32.mxu0 0.0
        %2435 = vmatmul.mubr.f32.gmra.mrb[0].mxu0 %v2346
        %v2436 = vpop.f32.mrb[0].mxu0
        %v2437 = vadd.f32 %v2368, %v2436
        %v2438 = vpop.f32.mrb[0].mxu0
        %2439 = vdwg.mxu0
        %v2440 = vadd.f32 %v2204, %v2437
        %2441 = vst.msk [vmem:[%s496] sm:$0xff] %vm2188, %v2440
        %s2442 = sand.u32 %s352, 1
        %s2443 = scalar_lea.sflag [#allocation7], %s2442
        %s2444 = sand.u32 %s352, 1
        %s2445 = smul.addr %s2444, 8
        %s2446 = scalar_lea.vmem [#allocation8], %s2445
        // Predicated region
        $region85: #{tpu_custom_call.1} parent=75 // pred_check
          %p2447 = pneg %p362
        $region86: #{tpu_custom_call.1} parent=75 // pred_check_branch
          %2449 = sbr.rel (%p2447) target = $region88
        $region87: #{tpu_custom_call.1} parent=75 // pred_region
          %s2451 = ssub.s32 128, 128
          %2452 = vsyncadd %s2443, %s2451
          %s2453 = sadd.s32 %s36, %s35
          %s2454 = smul.addr %s2453, 128
          %s2455 = scalar_lea.hbm %s14, %s2454
          %s2457 = sshll.u32 %s2446, 4
          %s2458 = int_to_ptr.vmem [resolvable:$true] %s2457
          %2460 = dma.vmem_to_hbm [thread:$0]  %s2458, 128, %s2455, %s2443
        $region88: #{tpu_custom_call.1} parent=75 // pred_fallthru
          _
      $region76: #{tpu_custom_call.1} parent=5 // pred_fallthru
        _
      %p2461 = scmp.le.s32.totalorder 2, %s26
      // Predicated region
      $region89: #{tpu_custom_call.1} parent=5 // pred_check
        %p2462 = pneg %p2461
      $region90: #{tpu_custom_call.1} parent=5 // pred_check_branch
        %2464 = sbr.rel (%p2462) target = $region92
      $region91: #{tpu_custom_call.1} parent=5 // pred_region
        %s2465 = ssub.s32 %s26, 2
        // Predicated region
        $region93: #{tpu_custom_call.1} parent=91 // pred_check
          %p2466 = pneg %p368
        $region94: #{tpu_custom_call.1} parent=91 // pred_check_branch
          %2468 = sbr.rel (%p2466) target = $region96
        $region95: #{tpu_custom_call.1} parent=91 // pred_region
          %s2469 = sand.u32 %s353, 1
          %s2470 = scalar_lea.sflag [#allocation7], %s2469
          %s2471 = sand.u32 %s353, 1
          %s2472 = smul.addr %s2471, 8
          %s2473 = scalar_lea.vmem [#allocation8], %s2472
          %2474 = dma.done %s2470, 128
        $region96: #{tpu_custom_call.1} parent=91 // pred_fallthru
          _
      $region92: #{tpu_custom_call.1} parent=5 // pred_fallthru
        _
    $region6: #{tpu_custom_call.1} parent=1 // loop_footer
      %s30 = sadd.s32 1, %s26
    $region7: #{tpu_custom_call.1} parent=1 // loop_footer_branch
      %25 = sbr.rel target = $region3
    $region8: #{tpu_custom_call.1} parent=1 // loop_exit
      _
    %2475 = vsyncpa [#allocation6], 1
    %s2476 = scalar_lea.sflag [#allocation6], 1
    %2477 = vsyncpa %s2476, 1
    %2478 = vsyncpa [#allocation7], 1
    %s2479 = scalar_lea.sflag [#allocation7], 1
    %2480 = vsyncpa %s2479, 1

</llo_original>
